<compile_context>
chip_gen: v7x
topology: tpu7x:2x2x1
jax: 0.10.0
libtpu: 0.0.40
codegen_flags: <defaults>
</compile_context>

<pallas_src>
import functools

import jax
import jax.numpy as jnp
import numpy as np
from jax import lax
from jax.experimental import pallas as pl
from jax.experimental.pallas import tpu as pltpu


def _decoder_kernel(enc_ref, yh_ref, w_h_ref, w_c_ref, ud_ref, slab_ref, scal_ref,
                    out_ref, *, compute_dtype):
    f32 = jnp.float32
    cdt = compute_dtype
    Tm1, BT, E = enc_ref.shape            # time-major encoder tile
    D = w_c_ref.shape[0]                  # decoder hidden
    D4 = 4 * D

    enc = enc_ref[...]                    # (Tm1, BT, E)
    yh = yh_ref[...]                      # (BT, Tm1)
    w_h = w_h_ref[...]                    # (D, 4D+E)  [W_hh | W_dhs_hidden]
    w_c = w_c_ref[...]                    # (D, E)      W_dhs_cell
    ud_wt = ud_ref[...]                   # (E, E)
    slab = slab_ref[...]                  # (8, W) packed row vectors

    vd_w = slab[0:1, :E]                  # v_d weight                    (1, E)
    attn_bias = slab[1:2, :E]             # W_dhs_b + U_d_b               (1, E)
    w_wc = slab[2:3, :E]                  # w weight on context           (1, E)
    fc_wc = slab[3:4, :E]                 # fc_final weight on context    (1, E)
    fc_wh = slab[4:5, :D]                 # fc_final weight on hidden     (1, D)
    wih = slab[5:6, :D4]                  # LSTM input weights (input=1)  (1, 4D)
    b_g = slab[6:7, :D4]                  # lstm b_ih + b_hh              (1, 4D)

    vd_b = scal_ref[0]
    w_wy = scal_ref[1]
    w_b = scal_ref[2]
    fc_b = scal_ref[3]

    # U_d(h_i) is loop-invariant: one flat, well-shaped MXU push per grid step.
    # (Tm1, BT, E) -> (Tm1*BT, E) keeps the physical layout since BT % 8 == 0.
    u_h = jnp.dot(enc.reshape(Tm1 * BT, E), ud_wt,
                  preferred_element_type=f32).reshape(Tm1, BT, E)

    vd_w_c = vd_w.astype(cdt)
    t_iota = lax.broadcasted_iota(jnp.int32, (1, Tm1), 1)          # column indices

    def step(t, carry):
        hidden, cell, context = carry                              # f32 carries

        # Gate pre-activations (hidden part) + W_dhs([hidden; cell]) as two small
        # dots accumulating into one result (no concatenate, no zero block).
        big = jnp.dot(hidden, w_h, preferred_element_type=f32)     # (BT, 4D+E)
        gates_h = big[:, :D4]                                      # (BT, 4D)
        w_x = (big[:, D4:]
               + jnp.dot(cell, w_c, preferred_element_type=f32)
               + attn_bias)                                        # (BT, E)

        # Attention over the Tm1 encoder timesteps.  tanh path in bf16 on
        # chips with bf16 VPU/EUP; f32 on v5e.
        tanh_v = jnp.tanh((w_x[None, :, :] + u_h).astype(cdt))     # (Tm1, BT, E)
        logits = (jnp.sum((tanh_v * vd_w_c).astype(f32), axis=-1, keepdims=True)
                  + vd_b)                                          # (Tm1, BT, 1)
        # No max-subtraction: |logit| <= ||v_d_w||_1 + |v_d_b| (tanh-bounded).
        p = jnp.exp(logits)
        denom = jnp.sum(p, axis=0, keepdims=True)                  # (1, BT, 1)
        attn = p * pl.reciprocal(denom, approx=True)               # (Tm1, BT, 1)
        context = jnp.sum(attn * enc, axis=0)                      # (BT, E)

        # y_history[:, t] via a one-hot lane select (t may be a loop value).
        y_t = jnp.sum(jnp.where(t_iota == t, yh, 0.0),
                      axis=1, keepdims=True)                       # (BT, 1)
        y_tilde = (jnp.sum(context * w_wc, axis=1, keepdims=True)
                   + y_t * w_wy + w_b)                             # (BT, 1)

        # LSTM cell (PyTorch gate order i, f, g, o); carries stay f32.
        gates = y_tilde * wih + gates_h + b_g                      # (BT, 4D)
        i_g = jax.nn.sigmoid(gates[:, 0 * D:1 * D].astype(cdt))
        f_g = jax.nn.sigmoid(gates[:, 1 * D:2 * D].astype(cdt))
        g_g = jnp.tanh(gates[:, 2 * D:3 * D].astype(cdt))
        o_g = jax.nn.sigmoid(gates[:, 3 * D:4 * D].astype(cdt))
        cell = f_g.astype(f32) * cell + (i_g * g_g).astype(f32)
        hidden = (o_g * jnp.tanh(cell.astype(cdt))).astype(f32)
        return hidden, cell, context

    init = (jnp.zeros((BT, D), f32), jnp.zeros((BT, D), f32),
            jnp.zeros((BT, E), f32))
    hidden, cell, context = lax.fori_loop(0, Tm1, step, init, unroll=True)

    y_pred = (jnp.sum(hidden * fc_wh, axis=1, keepdims=True)
              + jnp.sum(context * fc_wc, axis=1, keepdims=True) + fc_b)   # (BT, 1)
    out_ref[...] = jnp.transpose(y_pred, (1, 0))                   # lane-dense (1, BT)


def _use_bf16_elementwise():
    """bf16 tanh/sigmoid only on chips with bf16 VPU/EUP (v6e / v7x)."""
    try:
        kind = jax.devices()[0].device_kind.lower()
    except Exception:
        return False
    return ("v6" in kind) or ("v7" in kind) or ("tpu7" in kind)


def _pick_batch_tile(B, max_tile=128):
    b8 = -(-B // 8) * 8                      # round batch up to a sublane multiple
    bt = min(max_tile, b8)
    # Keep >= 2 grid steps when the batch allows it (v7x: 2 TensorCores).
    if b8 > 8 and -(-b8 // bt) < 2:
        bt = -(-(b8 // 2) // 8) * 8
    return bt


def decoder_pallas(input_encoded, y_history, p, *, batch_tile=None, use_bf16=None):
    """input_encoded: (B, T-1, E), y_history: (B, T-1) -> (B, 1)"""
    f32 = jnp.float32
    B, Tm1, E = input_encoded.shape
    D = p["lstm_w_hh"].shape[1]
    D4 = 4 * D
    W = max(D4, E, D)

    if use_bf16 is None:
        use_bf16 = _use_bf16_elementwise()
    cdt = jnp.bfloat16 if use_bf16 else jnp.float32

    # ---- glue: repack torch-convention (out, in) weights ----
    wdhs_wt = p["W_dhs_w"].T.astype(f32)                          # (2D, E)
    w_h = jnp.concatenate([p["lstm_w_hh"].T.astype(f32),          # (D, 4D)
                           wdhs_wt[:D]], axis=1)                  # -> (D, 4D+E)
    w_c = wdhs_wt[D:]                                             # (D, E)
    ud_wt = p["U_d_w"].T.astype(f32)                              # (E, E)

    def row(v, width=W):
        v = jnp.asarray(v, f32).reshape(1, -1)
        return jnp.pad(v, ((0, 0), (0, width - v.shape[1])))

    slab = jnp.concatenate([
        row(p["v_d_w"]),                       # 0 v_d weight
        row(p["W_dhs_b"] + p["U_d_b"]),        # 1 fused attention bias
        row(p["w_w"][:, :E]),                  # 2 w weight on context
        row(p["fc_w"][:, D:]),                 # 3 fc weight on context
        row(p["fc_w"][:, :D]),                 # 4 fc weight on hidden
        row(p["lstm_w_ih"].T),                 # 5 LSTM input weights (1, 4D)
        row(p["lstm_b_ih"] + p["lstm_b_hh"]),  # 6 fused LSTM bias
        jnp.zeros((1, W), f32),                # 7 pad to 8 sublanes
    ], axis=0)                                                    # (8, W)

    scalars = jnp.stack([
        p["v_d_b"][0], p["w_w"][0, E], p["w_b"][0], p["fc_b"][0],
    ]).astype(f32)                                                # (4,) in SMEM

    # ---- batch tiling (padded rows are discarded in the wrapper) ----
    BT = batch_tile if batch_tile is not None else _pick_batch_tile(B)
    B_pad = -(-B // BT) * BT
    G = B_pad // BT
    # Encoder states time-major so the U_d matmul is a flat, layout-preserving 2-D dot.
    enc_tm = jnp.transpose(input_encoded.astype(f32), (1, 0, 2))  # (Tm1, B, E)
    enc_p = jnp.pad(enc_tm, ((0, 0), (0, B_pad - B), (0, 0)))     # (Tm1, B_pad, E)
    yh_p = jnp.pad(y_history.astype(f32), ((0, B_pad - B), (0, 0)))

    kernel = functools.partial(_decoder_kernel, compute_dtype=cdt)

    out = pl.pallas_call(
        kernel,
        out_shape=jax.ShapeDtypeStruct((G, BT), f32),             # lane-dense output
        grid=(G,),
        in_specs=[
            pl.BlockSpec((Tm1, BT, E), lambda g: (0, g, 0)),      # encoder tile (time-major)
            pl.BlockSpec((BT, Tm1), lambda g: (g, 0)),            # y history tile
            pl.BlockSpec(w_h.shape, lambda g: (0, 0)),            # [W_hh | W_dhs_h]
            pl.BlockSpec(w_c.shape, lambda g: (0, 0)),            # W_dhs_c
            pl.BlockSpec(ud_wt.shape, lambda g: (0, 0)),          # U_d weights
            pl.BlockSpec(slab.shape, lambda g: (0, 0)),           # packed row vectors
            pl.BlockSpec(memory_space=pltpu.MemorySpace.SMEM),    # 4 scalar biases
        ],
        out_specs=pl.BlockSpec((1, BT), lambda g: (g, 0)),
        compiler_params=pltpu.CompilerParams(dimension_semantics=("parallel",)),
    )(enc_p, yh_p, w_h, w_c, ud_wt, slab, scalars)
    return out.reshape(B_pad, 1)[:B]


def decoder_reference(input_encoded, y_history, p):
    """Pure-JAX reference matching the PyTorch forward pass."""
    B, Tm1, E = input_encoded.shape
    D = p["lstm_w_hh"].shape[1]
    hidden = jnp.zeros((B, D), jnp.float32)
    cell = jnp.zeros((B, D), jnp.float32)
    context = jnp.zeros((B, E), jnp.float32)
    for t in range(Tm1):
        x = jnp.concatenate([hidden, cell], axis=1)                      # (B, 2D)
        w_x = x @ p["W_dhs_w"].T + p["W_dhs_b"]                          # (B, E)
        u_h = input_encoded @ p["U_d_w"].T + p["U_d_b"]                  # (B, T-1, E)
        tanh_v = jnp.tanh(w_x[:, None, :] + u_h)
        logits = (tanh_v @ p["v_d_w"].T)[..., 0] + p["v_d_b"]            # (B, T-1)
        attn = jax.nn.softmax(logits, axis=1)
        context = jnp.einsum("bt,bte->be", attn, input_encoded)          # (B, E)
        y_tilde = (jnp.concatenate([context, y_history[:, t:t + 1]], axis=1)
                   @ p["w_w"].T + p["w_b"])                              # (B, 1)
        gates = (y_tilde @ p["lstm_w_ih"].T + p["lstm_b_ih"]
                 + hidden @ p["lstm_w_hh"].T + p["lstm_b_hh"])           # (B, 4D)
        i_g, f_g, g_g, o_g = jnp.split(gates, 4, axis=1)
        i_g, f_g, o_g = jax.nn.sigmoid(i_g), jax.nn.sigmoid(f_g), jax.nn.sigmoid(o_g)
        g_g = jnp.tanh(g_g)
        cell = f_g * cell + i_g * g_g
        hidden = o_g * jnp.tanh(cell)
    return jnp.concatenate([hidden, context], axis=1) @ p["fc_w"].T + p["fc_b"]


if __name__ == "__main__":
    B, T, E, D = 2, 8, 32, 32     # batch, T, encoder_hidden, decoder_hidden
    Tm1 = T - 1

    key = jax.random.PRNGKey(0)
    ks = jax.random.split(key, 16)

    def nrm(k, shape, scale=0.1):
        return scale * jax.random.normal(k, shape, dtype=jnp.float32)

    params = {
        "v_d_w": nrm(ks[0], (1, E)),            "v_d_b": nrm(ks[1], (1,)),
        "W_dhs_w": nrm(ks[2], (E, 2 * D)),      "W_dhs_b": nrm(ks[3], (E,)),
        "U_d_w": nrm(ks[4], (E, E)),            "U_d_b": nrm(ks[5], (E,)),
        "w_w": nrm(ks[6], (1, 1 + E), 1.0),     "w_b": nrm(ks[7], (1,)),   # w.weight ~ normal_()
        "lstm_w_ih": nrm(ks[8], (4 * D, 1)),    "lstm_w_hh": nrm(ks[9], (4 * D, D)),
        "lstm_b_ih": nrm(ks[10], (4 * D,)),     "lstm_b_hh": nrm(ks[11], (4 * D,)),
        "fc_w": nrm(ks[12], (1, D + E)),        "fc_b": nrm(ks[13], (1,)),
    }
    input_encoded = nrm(ks[14], (B, Tm1, E), 1.0)
    y_history = nrm(ks[15], (B, Tm1), 1.0)

    use_bf16 = _use_bf16_elementwise()
    out = jax.block_until_ready(
        decoder_pallas(input_encoded, y_history, params, use_bf16=use_bf16))
    ref = decoder_reference(input_encoded, y_history, params)
    assert out.shape == (B, 1)
    # bf16 elementwise path (v6e/v7x) needs a slightly looser tolerance.
    tol = 2e-2 if use_bf16 else 5e-3
    np.testing.assert_allclose(np.asarray(out), np.asarray(ref), rtol=tol, atol=tol)
    print("KERNEL_OK")
</pallas_src>

<mosaic_0001>
module attributes {stable_mosaic.version = 11 : i64} {
  func.func @_decoder_kernel(%arg0: i32, %arg1: memref<7x8x32xf32, #tpu.memory_space<vmem>>, %arg2: memref<8x7xf32, #tpu.memory_space<vmem>>, %arg3: memref<32x160xf32, #tpu.memory_space<vmem>>, %arg4: memref<32x32xf32, #tpu.memory_space<vmem>>, %arg5: memref<32x32xf32, #tpu.memory_space<vmem>>, %arg6: memref<8x128xf32, #tpu.memory_space<vmem>>, %arg7: memref<4xf32, #tpu.memory_space<smem>>, %arg8: memref<1x8xf32, #tpu.memory_space<vmem>>) attributes {dimension_semantics = [#tpu.dimension_semantics<parallel>], iteration_bounds = array<i64: 1>, scalar_prefetch = 0 : i64, scratch_operands = 0 : i64, tpu.core_type = #tpu.core_type<tc>, window_params = [{transform_indices = @transform_0, window_bounds = array<i64: 7, 8, 32>}, {transform_indices = @transform_1, window_bounds = array<i64: 8, 7>}, {pipeline_mode = #tpu.pipeline_mode<synchronous>, transform_indices = @transform_2, window_bounds = array<i64: 32, 160>}, {pipeline_mode = #tpu.pipeline_mode<synchronous>, transform_indices = @transform_3, window_bounds = array<i64: 32, 32>}, {pipeline_mode = #tpu.pipeline_mode<synchronous>, transform_indices = @transform_4, window_bounds = array<i64: 32, 32>}, {pipeline_mode = #tpu.pipeline_mode<synchronous>, transform_indices = @transform_5, window_bounds = array<i64: 8, 128>}, {transform_indices = @transform_6, window_bounds = array<i64: 4>}, {transform_indices = @transform_7, window_bounds = array<i64: 1, 8>}]} {
    %c0 = arith.constant 0 : index
    %c0_0 = arith.constant 0 : index
    %c0_1 = arith.constant 0 : index
    %0 = vector.load %arg1[%c0, %c0_0, %c0_1] : memref<7x8x32xf32, #tpu.memory_space<vmem>>, vector<7x8x32xf32>
    %c0_2 = arith.constant 0 : index
    %c0_3 = arith.constant 0 : index
    %1 = vector.load %arg2[%c0_2, %c0_3] : memref<8x7xf32, #tpu.memory_space<vmem>>, vector<8x7xf32>
    %c0_4 = arith.constant 0 : index
    %c0_5 = arith.constant 0 : index
    %2 = vector.load %arg3[%c0_4, %c0_5] : memref<32x160xf32, #tpu.memory_space<vmem>>, vector<32x160xf32>
    %c0_6 = arith.constant 0 : index
    %c0_7 = arith.constant 0 : index
    %3 = vector.load %arg4[%c0_6, %c0_7] : memref<32x32xf32, #tpu.memory_space<vmem>>, vector<32x32xf32>
    %c0_8 = arith.constant 0 : index
    %c0_9 = arith.constant 0 : index
    %4 = vector.load %arg5[%c0_8, %c0_9] : memref<32x32xf32, #tpu.memory_space<vmem>>, vector<32x32xf32>
    %c0_10 = arith.constant 0 : index
    %c0_11 = arith.constant 0 : index
    %5 = vector.load %arg6[%c0_10, %c0_11] : memref<8x128xf32, #tpu.memory_space<vmem>>, vector<8x128xf32>
    %6 = vector.extract_strided_slice %5 {offsets = [0, 0], sizes = [1, 32], strides = [1, 1]} : vector<8x128xf32> to vector<1x32xf32>
    %7 = vector.extract_strided_slice %5 {offsets = [1, 0], sizes = [1, 32], strides = [1, 1]} : vector<8x128xf32> to vector<1x32xf32>
    %8 = vector.extract_strided_slice %5 {offsets = [2, 0], sizes = [1, 32], strides = [1, 1]} : vector<8x128xf32> to vector<1x32xf32>
    %9 = vector.extract_strided_slice %5 {offsets = [3, 0], sizes = [1, 32], strides = [1, 1]} : vector<8x128xf32> to vector<1x32xf32>
    %10 = vector.extract_strided_slice %5 {offsets = [4, 0], sizes = [1, 32], strides = [1, 1]} : vector<8x128xf32> to vector<1x32xf32>
    %11 = vector.extract_strided_slice %5 {offsets = [5, 0], sizes = [1, 128], strides = [1, 1]} : vector<8x128xf32> to vector<1x128xf32>
    %12 = vector.extract_strided_slice %5 {offsets = [6, 0], sizes = [1, 128], strides = [1, 1]} : vector<8x128xf32> to vector<1x128xf32>
    %c0_12 = arith.constant 0 : index
    %13 = memref.load %arg7[%c0_12] : memref<4xf32, #tpu.memory_space<smem>>
    %c1 = arith.constant 1 : index
    %14 = memref.load %arg7[%c1] : memref<4xf32, #tpu.memory_space<smem>>
    %c2 = arith.constant 2 : index
    %15 = memref.load %arg7[%c2] : memref<4xf32, #tpu.memory_space<smem>>
    %c3 = arith.constant 3 : index
    %16 = memref.load %arg7[%c3] : memref<4xf32, #tpu.memory_space<smem>>
    %17 = vector.shape_cast %0 : vector<7x8x32xf32> to vector<56x32xf32>
    %cst = arith.constant dense<0.000000e+00> : vector<56x32xf32>
    %18 = tpu.matmul %17, %4, %cst {dimension_numbers = #tpu.dot_dimension_numbers<[1], [0], [0], [1], [0, 0, 1, 1], [], []>} : vector<56x32xf32>, vector<32x32xf32>, vector<56x32xf32> -> vector<56x32xf32>
    %19 = vector.shape_cast %18 : vector<56x32xf32> to vector<7x8x32xf32>
    %20 = tpu.iota {dimensions = array<i32: 1>} : vector<1x7xi32>
    %cst_13 = arith.constant 0.000000e+00 : f32
    %21 = vector.broadcast %cst_13 : f32 to vector<8x32xf32>
    %cst_14 = arith.constant 0.000000e+00 : f32
    %22 = vector.broadcast %cst_14 : f32 to vector<8x32xf32>
    %cst_15 = arith.constant 0.000000e+00 : f32
    %23 = vector.broadcast %cst_15 : f32 to vector<8x32xf32>
    %c0_i32 = arith.constant 0 : i32
    %cst_16 = arith.constant dense<0.000000e+00> : vector<8x160xf32>
    %24 = tpu.matmul %21, %2, %cst_16 {dimension_numbers = #tpu.dot_dimension_numbers<[1], [0], [0], [1], [0, 0, 1, 1], [], []>} : vector<8x32xf32>, vector<32x160xf32>, vector<8x160xf32> -> vector<8x160xf32>
    %25 = vector.extract_strided_slice %24 {offsets = [0, 0], sizes = [8, 128], strides = [1, 1]} : vector<8x160xf32> to vector<8x128xf32>
    %26 = vector.extract_strided_slice %24 {offsets = [0, 128], sizes = [8, 32], strides = [1, 1]} : vector<8x160xf32> to vector<8x32xf32>
    %cst_17 = arith.constant dense<0.000000e+00> : vector<8x32xf32>
    %27 = tpu.matmul %22, %3, %cst_17 {dimension_numbers = #tpu.dot_dimension_numbers<[1], [0], [0], [1], [0, 0, 1, 1], [], []>} : vector<8x32xf32>, vector<32x32xf32>, vector<8x32xf32> -> vector<8x32xf32>
    %28 = arith.addf %26, %27 : vector<8x32xf32>
    %29 = vector.broadcast %7 : vector<1x32xf32> to vector<8x32xf32>
    %30 = arith.addf %28, %29 : vector<8x32xf32>
    %31 = vector.shape_cast %30 : vector<8x32xf32> to vector<1x8x32xf32>
    %32 = vector.broadcast %31 : vector<1x8x32xf32> to vector<7x8x32xf32>
    %33 = arith.addf %32, %19 : vector<7x8x32xf32>
    %34 = math.tanh %33 : vector<7x8x32xf32>
    %35 = vector.shape_cast %6 : vector<1x32xf32> to vector<1x1x32xf32>
    %36 = vector.broadcast %35 : vector<1x1x32xf32> to vector<7x8x32xf32>
    %37 = arith.mulf %34, %36 : vector<7x8x32xf32>
    %cst_18 = arith.constant dense<0.000000e+00> : vector<7x8xf32>
    %38 = vector.multi_reduction <add>, %37, %cst_18 [2] : vector<7x8x32xf32> to vector<7x8xf32>
    %39 = vector.shape_cast %38 : vector<7x8xf32> to vector<7x8x1xf32>
    %40 = vector.broadcast %13 : f32 to vector<7x8x1xf32>
    %41 = arith.addf %39, %40 : vector<7x8x1xf32>
    %42 = math.exp %41 : vector<7x8x1xf32>
    %cst_19 = arith.constant dense<0.000000e+00> : vector<8x1xf32>
    %43 = vector.multi_reduction <add>, %42, %cst_19 [0] : vector<7x8x1xf32> to vector<8x1xf32>
    %44 = vector.shape_cast %43 : vector<8x1xf32> to vector<1x8x1xf32>
    %45 = tpu.reciprocal %44 {approx = true} : vector<1x8x1xf32> -> vector<1x8x1xf32>
    %46 = vector.broadcast %45 : vector<1x8x1xf32> to vector<7x8x1xf32>
    %47 = arith.mulf %42, %46 : vector<7x8x1xf32>
    %48 = vector.broadcast %47 : vector<7x8x1xf32> to vector<7x8x32xf32>
    %49 = arith.mulf %48, %0 : vector<7x8x32xf32>
    %cst_20 = arith.constant dense<0.000000e+00> : vector<8x32xf32>
    %50 = vector.multi_reduction <add>, %49, %cst_20 [0] : vector<7x8x32xf32> to vector<8x32xf32>
    %51 = vector.broadcast %c0_i32 : i32 to vector<1x7xi32>
    %52 = arith.cmpi eq, %20, %51 : vector<1x7xi32>
    %cst_21 = arith.constant 0.000000e+00 : f32
    %53 = vector.shape_cast %52 : vector<1x7xi1> to vector<1x7xi1>
    %54 = vector.broadcast %53 : vector<1x7xi1> to vector<8x7xi1>
    %55 = vector.broadcast %cst_21 : f32 to vector<8x7xf32>
    %56 = arith.select %54, %1, %55 : vector<8x7xi1>, vector<8x7xf32>
    %cst_22 = arith.constant dense<0.000000e+00> : vector<8xf32>
    %57 = vector.multi_reduction <add>, %56, %cst_22 [1] : vector<8x7xf32> to vector<8xf32>
    %58 = vector.shape_cast %57 : vector<8xf32> to vector<8x1xf32>
    %59 = vector.broadcast %8 : vector<1x32xf32> to vector<8x32xf32>
    %60 = arith.mulf %50, %59 : vector<8x32xf32>
    %cst_23 = arith.constant dense<0.000000e+00> : vector<8xf32>
    %61 = vector.multi_reduction <add>, %60, %cst_23 [1] : vector<8x32xf32> to vector<8xf32>
    %62 = vector.shape_cast %61 : vector<8xf32> to vector<8x1xf32>
    %63 = vector.broadcast %14 : f32 to vector<8x1xf32>
    %64 = arith.mulf %58, %63 : vector<8x1xf32>
    %65 = arith.addf %62, %64 : vector<8x1xf32>
    %66 = vector.broadcast %15 : f32 to vector<8x1xf32>
    %67 = arith.addf %65, %66 : vector<8x1xf32>
    %68 = vector.broadcast %67 : vector<8x1xf32> to vector<8x128xf32>
    %69 = vector.broadcast %11 : vector<1x128xf32> to vector<8x128xf32>
    %70 = arith.mulf %68, %69 : vector<8x128xf32>
    %71 = arith.addf %70, %25 : vector<8x128xf32>
    %72 = vector.broadcast %12 : vector<1x128xf32> to vector<8x128xf32>
    %73 = arith.addf %71, %72 : vector<8x128xf32>
    %74 = vector.extract_strided_slice %73 {offsets = [0, 0], sizes = [8, 32], strides = [1, 1]} : vector<8x128xf32> to vector<8x32xf32>
    %75 = arith.negf %74 : vector<8x32xf32>
    %76 = math.exp %75 : vector<8x32xf32>
    %cst_24 = arith.constant 1.000000e+00 : f32
    %77 = vector.broadcast %cst_24 : f32 to vector<8x32xf32>
    %78 = arith.addf %77, %76 : vector<8x32xf32>
    %79 = arith.divf %77, %78 : vector<8x32xf32>
    %80 = vector.extract_strided_slice %73 {offsets = [0, 32], sizes = [8, 32], strides = [1, 1]} : vector<8x128xf32> to vector<8x32xf32>
    %81 = arith.negf %80 : vector<8x32xf32>
    %82 = math.exp %81 : vector<8x32xf32>
    %cst_25 = arith.constant 1.000000e+00 : f32
    %83 = vector.broadcast %cst_25 : f32 to vector<8x32xf32>
    %84 = arith.addf %83, %82 : vector<8x32xf32>
    %85 = arith.divf %83, %84 : vector<8x32xf32>
    %86 = vector.extract_strided_slice %73 {offsets = [0, 64], sizes = [8, 32], strides = [1, 1]} : vector<8x128xf32> to vector<8x32xf32>
    %87 = math.tanh %86 : vector<8x32xf32>
    %88 = vector.extract_strided_slice %73 {offsets = [0, 96], sizes = [8, 32], strides = [1, 1]} : vector<8x128xf32> to vector<8x32xf32>
    %89 = arith.negf %88 : vector<8x32xf32>
    %90 = math.exp %89 : vector<8x32xf32>
    %cst_26 = arith.constant 1.000000e+00 : f32
    %91 = vector.broadcast %cst_26 : f32 to vector<8x32xf32>
    %92 = arith.addf %91, %90 : vector<8x32xf32>
    %93 = arith.divf %91, %92 : vector<8x32xf32>
    %94 = arith.mulf %85, %22 : vector<8x32xf32>
    %95 = arith.mulf %79, %87 : vector<8x32xf32>
    %96 = arith.addf %94, %95 : vector<8x32xf32>
    %97 = math.tanh %96 : vector<8x32xf32>
    %98 = arith.mulf %93, %97 : vector<8x32xf32>
    %c1_i32 = arith.constant 1 : i32
    %cst_27 = arith.constant dense<0.000000e+00> : vector<8x160xf32>
    %99 = tpu.matmul %98, %2, %cst_27 {dimension_numbers = #tpu.dot_dimension_numbers<[1], [0], [0], [1], [0, 0, 1, 1], [], []>} : vector<8x32xf32>, vector<32x160xf32>, vector<8x160xf32> -> vector<8x160xf32>
    %100 = vector.extract_strided_slice %99 {offsets = [0, 0], sizes = [8, 128], strides = [1, 1]} : vector<8x160xf32> to vector<8x128xf32>
    %101 = vector.extract_strided_slice %99 {offsets = [0, 128], sizes = [8, 32], strides = [1, 1]} : vector<8x160xf32> to vector<8x32xf32>
    %cst_28 = arith.constant dense<0.000000e+00> : vector<8x32xf32>
    %102 = tpu.matmul %96, %3, %cst_28 {dimension_numbers = #tpu.dot_dimension_numbers<[1], [0], [0], [1], [0, 0, 1, 1], [], []>} : vector<8x32xf32>, vector<32x32xf32>, vector<8x32xf32> -> vector<8x32xf32>
    %103 = arith.addf %101, %102 : vector<8x32xf32>
    %104 = vector.broadcast %7 : vector<1x32xf32> to vector<8x32xf32>
    %105 = arith.addf %103, %104 : vector<8x32xf32>
    %106 = vector.shape_cast %105 : vector<8x32xf32> to vector<1x8x32xf32>
    %107 = vector.broadcast %106 : vector<1x8x32xf32> to vector<7x8x32xf32>
    %108 = arith.addf %107, %19 : vector<7x8x32xf32>
    %109 = math.tanh %108 : vector<7x8x32xf32>
    %110 = vector.shape_cast %6 : vector<1x32xf32> to vector<1x1x32xf32>
    %111 = vector.broadcast %110 : vector<1x1x32xf32> to vector<7x8x32xf32>
    %112 = arith.mulf %109, %111 : vector<7x8x32xf32>
    %cst_29 = arith.constant dense<0.000000e+00> : vector<7x8xf32>
    %113 = vector.multi_reduction <add>, %112, %cst_29 [2] : vector<7x8x32xf32> to vector<7x8xf32>
    %114 = vector.shape_cast %113 : vector<7x8xf32> to vector<7x8x1xf32>
    %115 = vector.broadcast %13 : f32 to vector<7x8x1xf32>
    %116 = arith.addf %114, %115 : vector<7x8x1xf32>
    %117 = math.exp %116 : vector<7x8x1xf32>
    %cst_30 = arith.constant dense<0.000000e+00> : vector<8x1xf32>
    %118 = vector.multi_reduction <add>, %117, %cst_30 [0] : vector<7x8x1xf32> to vector<8x1xf32>
    %119 = vector.shape_cast %118 : vector<8x1xf32> to vector<1x8x1xf32>
    %120 = tpu.reciprocal %119 {approx = true} : vector<1x8x1xf32> -> vector<1x8x1xf32>
    %121 = vector.broadcast %120 : vector<1x8x1xf32> to vector<7x8x1xf32>
    %122 = arith.mulf %117, %121 : vector<7x8x1xf32>
    %123 = vector.broadcast %122 : vector<7x8x1xf32> to vector<7x8x32xf32>
    %124 = arith.mulf %123, %0 : vector<7x8x32xf32>
    %cst_31 = arith.constant dense<0.000000e+00> : vector<8x32xf32>
    %125 = vector.multi_reduction <add>, %124, %cst_31 [0] : vector<7x8x32xf32> to vector<8x32xf32>
    %126 = vector.broadcast %c1_i32 : i32 to vector<1x7xi32>
    %127 = arith.cmpi eq, %20, %126 : vector<1x7xi32>
    %cst_32 = arith.constant 0.000000e+00 : f32
    %128 = vector.shape_cast %127 : vector<1x7xi1> to vector<1x7xi1>
    %129 = vector.broadcast %128 : vector<1x7xi1> to vector<8x7xi1>
    %130 = vector.broadcast %cst_32 : f32 to vector<8x7xf32>
    %131 = arith.select %129, %1, %130 : vector<8x7xi1>, vector<8x7xf32>
    %cst_33 = arith.constant dense<0.000000e+00> : vector<8xf32>
    %132 = vector.multi_reduction <add>, %131, %cst_33 [1] : vector<8x7xf32> to vector<8xf32>
    %133 = vector.shape_cast %132 : vector<8xf32> to vector<8x1xf32>
    %134 = vector.broadcast %8 : vector<1x32xf32> to vector<8x32xf32>
    %135 = arith.mulf %125, %134 : vector<8x32xf32>
    %cst_34 = arith.constant dense<0.000000e+00> : vector<8xf32>
    %136 = vector.multi_reduction <add>, %135, %cst_34 [1] : vector<8x32xf32> to vector<8xf32>
    %137 = vector.shape_cast %136 : vector<8xf32> to vector<8x1xf32>
    %138 = vector.broadcast %14 : f32 to vector<8x1xf32>
    %139 = arith.mulf %133, %138 : vector<8x1xf32>
    %140 = arith.addf %137, %139 : vector<8x1xf32>
    %141 = vector.broadcast %15 : f32 to vector<8x1xf32>
    %142 = arith.addf %140, %141 : vector<8x1xf32>
    %143 = vector.broadcast %142 : vector<8x1xf32> to vector<8x128xf32>
    %144 = vector.broadcast %11 : vector<1x128xf32> to vector<8x128xf32>
    %145 = arith.mulf %143, %144 : vector<8x128xf32>
    %146 = arith.addf %145, %100 : vector<8x128xf32>
    %147 = vector.broadcast %12 : vector<1x128xf32> to vector<8x128xf32>
    %148 = arith.addf %146, %147 : vector<8x128xf32>
    %149 = vector.extract_strided_slice %148 {offsets = [0, 0], sizes = [8, 32], strides = [1, 1]} : vector<8x128xf32> to vector<8x32xf32>
    %150 = arith.negf %149 : vector<8x32xf32>
    %151 = math.exp %150 : vector<8x32xf32>
    %cst_35 = arith.constant 1.000000e+00 : f32
    %152 = vector.broadcast %cst_35 : f32 to vector<8x32xf32>
    %153 = arith.addf %152, %151 : vector<8x32xf32>
    %154 = arith.divf %152, %153 : vector<8x32xf32>
    %155 = vector.extract_strided_slice %148 {offsets = [0, 32], sizes = [8, 32], strides = [1, 1]} : vector<8x128xf32> to vector<8x32xf32>
    %156 = arith.negf %155 : vector<8x32xf32>
    %157 = math.exp %156 : vector<8x32xf32>
    %cst_36 = arith.constant 1.000000e+00 : f32
    %158 = vector.broadcast %cst_36 : f32 to vector<8x32xf32>
    %159 = arith.addf %158, %157 : vector<8x32xf32>
    %160 = arith.divf %158, %159 : vector<8x32xf32>
    %161 = vector.extract_strided_slice %148 {offsets = [0, 64], sizes = [8, 32], strides = [1, 1]} : vector<8x128xf32> to vector<8x32xf32>
    %162 = math.tanh %161 : vector<8x32xf32>
    %163 = vector.extract_strided_slice %148 {offsets = [0, 96], sizes = [8, 32], strides = [1, 1]} : vector<8x128xf32> to vector<8x32xf32>
    %164 = arith.negf %163 : vector<8x32xf32>
    %165 = math.exp %164 : vector<8x32xf32>
    %cst_37 = arith.constant 1.000000e+00 : f32
    %166 = vector.broadcast %cst_37 : f32 to vector<8x32xf32>
    %167 = arith.addf %166, %165 : vector<8x32xf32>
    %168 = arith.divf %166, %167 : vector<8x32xf32>
    %169 = arith.mulf %160, %96 : vector<8x32xf32>
    %170 = arith.mulf %154, %162 : vector<8x32xf32>
    %171 = arith.addf %169, %170 : vector<8x32xf32>
    %172 = math.tanh %171 : vector<8x32xf32>
    %173 = arith.mulf %168, %172 : vector<8x32xf32>
    %c2_i32 = arith.constant 2 : i32
    %cst_38 = arith.constant dense<0.000000e+00> : vector<8x160xf32>
    %174 = tpu.matmul %173, %2, %cst_38 {dimension_numbers = #tpu.dot_dimension_numbers<[1], [0], [0], [1], [0, 0, 1, 1], [], []>} : vector<8x32xf32>, vector<32x160xf32>, vector<8x160xf32> -> vector<8x160xf32>
    %175 = vector.extract_strided_slice %174 {offsets = [0, 0], sizes = [8, 128], strides = [1, 1]} : vector<8x160xf32> to vector<8x128xf32>
    %176 = vector.extract_strided_slice %174 {offsets = [0, 128], sizes = [8, 32], strides = [1, 1]} : vector<8x160xf32> to vector<8x32xf32>
    %cst_39 = arith.constant dense<0.000000e+00> : vector<8x32xf32>
    %177 = tpu.matmul %171, %3, %cst_39 {dimension_numbers = #tpu.dot_dimension_numbers<[1], [0], [0], [1], [0, 0, 1, 1], [], []>} : vector<8x32xf32>, vector<32x32xf32>, vector<8x32xf32> -> vector<8x32xf32>
    %178 = arith.addf %176, %177 : vector<8x32xf32>
    %179 = vector.broadcast %7 : vector<1x32xf32> to vector<8x32xf32>
    %180 = arith.addf %178, %179 : vector<8x32xf32>
    %181 = vector.shape_cast %180 : vector<8x32xf32> to vector<1x8x32xf32>
    %182 = vector.broadcast %181 : vector<1x8x32xf32> to vector<7x8x32xf32>
    %183 = arith.addf %182, %19 : vector<7x8x32xf32>
    %184 = math.tanh %183 : vector<7x8x32xf32>
    %185 = vector.shape_cast %6 : vector<1x32xf32> to vector<1x1x32xf32>
    %186 = vector.broadcast %185 : vector<1x1x32xf32> to vector<7x8x32xf32>
    %187 = arith.mulf %184, %186 : vector<7x8x32xf32>
    %cst_40 = arith.constant dense<0.000000e+00> : vector<7x8xf32>
    %188 = vector.multi_reduction <add>, %187, %cst_40 [2] : vector<7x8x32xf32> to vector<7x8xf32>
    %189 = vector.shape_cast %188 : vector<7x8xf32> to vector<7x8x1xf32>
    %190 = vector.broadcast %13 : f32 to vector<7x8x1xf32>
    %191 = arith.addf %189, %190 : vector<7x8x1xf32>
    %192 = math.exp %191 : vector<7x8x1xf32>
    %cst_41 = arith.constant dense<0.000000e+00> : vector<8x1xf32>
    %193 = vector.multi_reduction <add>, %192, %cst_41 [0] : vector<7x8x1xf32> to vector<8x1xf32>
    %194 = vector.shape_cast %193 : vector<8x1xf32> to vector<1x8x1xf32>
    %195 = tpu.reciprocal %194 {approx = true} : vector<1x8x1xf32> -> vector<1x8x1xf32>
    %196 = vector.broadcast %195 : vector<1x8x1xf32> to vector<7x8x1xf32>
    %197 = arith.mulf %192, %196 : vector<7x8x1xf32>
    %198 = vector.broadcast %197 : vector<7x8x1xf32> to vector<7x8x32xf32>
    %199 = arith.mulf %198, %0 : vector<7x8x32xf32>
    %cst_42 = arith.constant dense<0.000000e+00> : vector<8x32xf32>
    %200 = vector.multi_reduction <add>, %199, %cst_42 [0] : vector<7x8x32xf32> to vector<8x32xf32>
    %201 = vector.broadcast %c2_i32 : i32 to vector<1x7xi32>
    %202 = arith.cmpi eq, %20, %201 : vector<1x7xi32>
    %cst_43 = arith.constant 0.000000e+00 : f32
    %203 = vector.shape_cast %202 : vector<1x7xi1> to vector<1x7xi1>
    %204 = vector.broadcast %203 : vector<1x7xi1> to vector<8x7xi1>
    %205 = vector.broadcast %cst_43 : f32 to vector<8x7xf32>
    %206 = arith.select %204, %1, %205 : vector<8x7xi1>, vector<8x7xf32>
    %cst_44 = arith.constant dense<0.000000e+00> : vector<8xf32>
    %207 = vector.multi_reduction <add>, %206, %cst_44 [1] : vector<8x7xf32> to vector<8xf32>
    %208 = vector.shape_cast %207 : vector<8xf32> to vector<8x1xf32>
    %209 = vector.broadcast %8 : vector<1x32xf32> to vector<8x32xf32>
    %210 = arith.mulf %200, %209 : vector<8x32xf32>
    %cst_45 = arith.constant dense<0.000000e+00> : vector<8xf32>
    %211 = vector.multi_reduction <add>, %210, %cst_45 [1] : vector<8x32xf32> to vector<8xf32>
    %212 = vector.shape_cast %211 : vector<8xf32> to vector<8x1xf32>
    %213 = vector.broadcast %14 : f32 to vector<8x1xf32>
    %214 = arith.mulf %208, %213 : vector<8x1xf32>
    %215 = arith.addf %212, %214 : vector<8x1xf32>
    %216 = vector.broadcast %15 : f32 to vector<8x1xf32>
    %217 = arith.addf %215, %216 : vector<8x1xf32>
    %218 = vector.broadcast %217 : vector<8x1xf32> to vector<8x128xf32>
    %219 = vector.broadcast %11 : vector<1x128xf32> to vector<8x128xf32>
    %220 = arith.mulf %218, %219 : vector<8x128xf32>
    %221 = arith.addf %220, %175 : vector<8x128xf32>
    %222 = vector.broadcast %12 : vector<1x128xf32> to vector<8x128xf32>
    %223 = arith.addf %221, %222 : vector<8x128xf32>
    %224 = vector.extract_strided_slice %223 {offsets = [0, 0], sizes = [8, 32], strides = [1, 1]} : vector<8x128xf32> to vector<8x32xf32>
    %225 = arith.negf %224 : vector<8x32xf32>
    %226 = math.exp %225 : vector<8x32xf32>
    %cst_46 = arith.constant 1.000000e+00 : f32
    %227 = vector.broadcast %cst_46 : f32 to vector<8x32xf32>
    %228 = arith.addf %227, %226 : vector<8x32xf32>
    %229 = arith.divf %227, %228 : vector<8x32xf32>
    %230 = vector.extract_strided_slice %223 {offsets = [0, 32], sizes = [8, 32], strides = [1, 1]} : vector<8x128xf32> to vector<8x32xf32>
    %231 = arith.negf %230 : vector<8x32xf32>
    %232 = math.exp %231 : vector<8x32xf32>
    %cst_47 = arith.constant 1.000000e+00 : f32
    %233 = vector.broadcast %cst_47 : f32 to vector<8x32xf32>
    %234 = arith.addf %233, %232 : vector<8x32xf32>
    %235 = arith.divf %233, %234 : vector<8x32xf32>
    %236 = vector.extract_strided_slice %223 {offsets = [0, 64], sizes = [8, 32], strides = [1, 1]} : vector<8x128xf32> to vector<8x32xf32>
    %237 = math.tanh %236 : vector<8x32xf32>
    %238 = vector.extract_strided_slice %223 {offsets = [0, 96], sizes = [8, 32], strides = [1, 1]} : vector<8x128xf32> to vector<8x32xf32>
    %239 = arith.negf %238 : vector<8x32xf32>
    %240 = math.exp %239 : vector<8x32xf32>
    %cst_48 = arith.constant 1.000000e+00 : f32
    %241 = vector.broadcast %cst_48 : f32 to vector<8x32xf32>
    %242 = arith.addf %241, %240 : vector<8x32xf32>
    %243 = arith.divf %241, %242 : vector<8x32xf32>
    %244 = arith.mulf %235, %171 : vector<8x32xf32>
    %245 = arith.mulf %229, %237 : vector<8x32xf32>
    %246 = arith.addf %244, %245 : vector<8x32xf32>
    %247 = math.tanh %246 : vector<8x32xf32>
    %248 = arith.mulf %243, %247 : vector<8x32xf32>
    %c3_i32 = arith.constant 3 : i32
    %cst_49 = arith.constant dense<0.000000e+00> : vector<8x160xf32>
    %249 = tpu.matmul %248, %2, %cst_49 {dimension_numbers = #tpu.dot_dimension_numbers<[1], [0], [0], [1], [0, 0, 1, 1], [], []>} : vector<8x32xf32>, vector<32x160xf32>, vector<8x160xf32> -> vector<8x160xf32>
    %250 = vector.extract_strided_slice %249 {offsets = [0, 0], sizes = [8, 128], strides = [1, 1]} : vector<8x160xf32> to vector<8x128xf32>
    %251 = vector.extract_strided_slice %249 {offsets = [0, 128], sizes = [8, 32], strides = [1, 1]} : vector<8x160xf32> to vector<8x32xf32>
    %cst_50 = arith.constant dense<0.000000e+00> : vector<8x32xf32>
    %252 = tpu.matmul %246, %3, %cst_50 {dimension_numbers = #tpu.dot_dimension_numbers<[1], [0], [0], [1], [0, 0, 1, 1], [], []>} : vector<8x32xf32>, vector<32x32xf32>, vector<8x32xf32> -> vector<8x32xf32>
    %253 = arith.addf %251, %252 : vector<8x32xf32>
    %254 = vector.broadcast %7 : vector<1x32xf32> to vector<8x32xf32>
    %255 = arith.addf %253, %254 : vector<8x32xf32>
    %256 = vector.shape_cast %255 : vector<8x32xf32> to vector<1x8x32xf32>
    %257 = vector.broadcast %256 : vector<1x8x32xf32> to vector<7x8x32xf32>
    %258 = arith.addf %257, %19 : vector<7x8x32xf32>
    %259 = math.tanh %258 : vector<7x8x32xf32>
    %260 = vector.shape_cast %6 : vector<1x32xf32> to vector<1x1x32xf32>
    %261 = vector.broadcast %260 : vector<1x1x32xf32> to vector<7x8x32xf32>
    %262 = arith.mulf %259, %261 : vector<7x8x32xf32>
    %cst_51 = arith.constant dense<0.000000e+00> : vector<7x8xf32>
    %263 = vector.multi_reduction <add>, %262, %cst_51 [2] : vector<7x8x32xf32> to vector<7x8xf32>
    %264 = vector.shape_cast %263 : vector<7x8xf32> to vector<7x8x1xf32>
    %265 = vector.broadcast %13 : f32 to vector<7x8x1xf32>
    %266 = arith.addf %264, %265 : vector<7x8x1xf32>
    %267 = math.exp %266 : vector<7x8x1xf32>
    %cst_52 = arith.constant dense<0.000000e+00> : vector<8x1xf32>
    %268 = vector.multi_reduction <add>, %267, %cst_52 [0] : vector<7x8x1xf32> to vector<8x1xf32>
    %269 = vector.shape_cast %268 : vector<8x1xf32> to vector<1x8x1xf32>
    %270 = tpu.reciprocal %269 {approx = true} : vector<1x8x1xf32> -> vector<1x8x1xf32>
    %271 = vector.broadcast %270 : vector<1x8x1xf32> to vector<7x8x1xf32>
    %272 = arith.mulf %267, %271 : vector<7x8x1xf32>
    %273 = vector.broadcast %272 : vector<7x8x1xf32> to vector<7x8x32xf32>
    %274 = arith.mulf %273, %0 : vector<7x8x32xf32>
    %cst_53 = arith.constant dense<0.000000e+00> : vector<8x32xf32>
    %275 = vector.multi_reduction <add>, %274, %cst_53 [0] : vector<7x8x32xf32> to vector<8x32xf32>
    %276 = vector.broadcast %c3_i32 : i32 to vector<1x7xi32>
    %277 = arith.cmpi eq, %20, %276 : vector<1x7xi32>
    %cst_54 = arith.constant 0.000000e+00 : f32
    %278 = vector.shape_cast %277 : vector<1x7xi1> to vector<1x7xi1>
    %279 = vector.broadcast %278 : vector<1x7xi1> to vector<8x7xi1>
    %280 = vector.broadcast %cst_54 : f32 to vector<8x7xf32>
    %281 = arith.select %279, %1, %280 : vector<8x7xi1>, vector<8x7xf32>
    %cst_55 = arith.constant dense<0.000000e+00> : vector<8xf32>
    %282 = vector.multi_reduction <add>, %281, %cst_55 [1] : vector<8x7xf32> to vector<8xf32>
    %283 = vector.shape_cast %282 : vector<8xf32> to vector<8x1xf32>
    %284 = vector.broadcast %8 : vector<1x32xf32> to vector<8x32xf32>
    %285 = arith.mulf %275, %284 : vector<8x32xf32>
    %cst_56 = arith.constant dense<0.000000e+00> : vector<8xf32>
    %286 = vector.multi_reduction <add>, %285, %cst_56 [1] : vector<8x32xf32> to vector<8xf32>
    %287 = vector.shape_cast %286 : vector<8xf32> to vector<8x1xf32>
    %288 = vector.broadcast %14 : f32 to vector<8x1xf32>
    %289 = arith.mulf %283, %288 : vector<8x1xf32>
    %290 = arith.addf %287, %289 : vector<8x1xf32>
    %291 = vector.broadcast %15 : f32 to vector<8x1xf32>
    %292 = arith.addf %290, %291 : vector<8x1xf32>
    %293 = vector.broadcast %292 : vector<8x1xf32> to vector<8x128xf32>
    %294 = vector.broadcast %11 : vector<1x128xf32> to vector<8x128xf32>
    %295 = arith.mulf %293, %294 : vector<8x128xf32>
    %296 = arith.addf %295, %250 : vector<8x128xf32>
    %297 = vector.broadcast %12 : vector<1x128xf32> to vector<8x128xf32>
    %298 = arith.addf %296, %297 : vector<8x128xf32>
    %299 = vector.extract_strided_slice %298 {offsets = [0, 0], sizes = [8, 32], strides = [1, 1]} : vector<8x128xf32> to vector<8x32xf32>
    %300 = arith.negf %299 : vector<8x32xf32>
    %301 = math.exp %300 : vector<8x32xf32>
    %cst_57 = arith.constant 1.000000e+00 : f32
    %302 = vector.broadcast %cst_57 : f32 to vector<8x32xf32>
    %303 = arith.addf %302, %301 : vector<8x32xf32>
    %304 = arith.divf %302, %303 : vector<8x32xf32>
    %305 = vector.extract_strided_slice %298 {offsets = [0, 32], sizes = [8, 32], strides = [1, 1]} : vector<8x128xf32> to vector<8x32xf32>
    %306 = arith.negf %305 : vector<8x32xf32>
    %307 = math.exp %306 : vector<8x32xf32>
    %cst_58 = arith.constant 1.000000e+00 : f32
    %308 = vector.broadcast %cst_58 : f32 to vector<8x32xf32>
    %309 = arith.addf %308, %307 : vector<8x32xf32>
    %310 = arith.divf %308, %309 : vector<8x32xf32>
    %311 = vector.extract_strided_slice %298 {offsets = [0, 64], sizes = [8, 32], strides = [1, 1]} : vector<8x128xf32> to vector<8x32xf32>
    %312 = math.tanh %311 : vector<8x32xf32>
    %313 = vector.extract_strided_slice %298 {offsets = [0, 96], sizes = [8, 32], strides = [1, 1]} : vector<8x128xf32> to vector<8x32xf32>
    %314 = arith.negf %313 : vector<8x32xf32>
    %315 = math.exp %314 : vector<8x32xf32>
    %cst_59 = arith.constant 1.000000e+00 : f32
    %316 = vector.broadcast %cst_59 : f32 to vector<8x32xf32>
    %317 = arith.addf %316, %315 : vector<8x32xf32>
    %318 = arith.divf %316, %317 : vector<8x32xf32>
    %319 = arith.mulf %310, %246 : vector<8x32xf32>
    %320 = arith.mulf %304, %312 : vector<8x32xf32>
    %321 = arith.addf %319, %320 : vector<8x32xf32>
    %322 = math.tanh %321 : vector<8x32xf32>
    %323 = arith.mulf %318, %322 : vector<8x32xf32>
    %c4_i32 = arith.constant 4 : i32
    %cst_60 = arith.constant dense<0.000000e+00> : vector<8x160xf32>
    %324 = tpu.matmul %323, %2, %cst_60 {dimension_numbers = #tpu.dot_dimension_numbers<[1], [0], [0], [1], [0, 0, 1, 1], [], []>} : vector<8x32xf32>, vector<32x160xf32>, vector<8x160xf32> -> vector<8x160xf32>
    %325 = vector.extract_strided_slice %324 {offsets = [0, 0], sizes = [8, 128], strides = [1, 1]} : vector<8x160xf32> to vector<8x128xf32>
    %326 = vector.extract_strided_slice %324 {offsets = [0, 128], sizes = [8, 32], strides = [1, 1]} : vector<8x160xf32> to vector<8x32xf32>
    %cst_61 = arith.constant dense<0.000000e+00> : vector<8x32xf32>
    %327 = tpu.matmul %321, %3, %cst_61 {dimension_numbers = #tpu.dot_dimension_numbers<[1], [0], [0], [1], [0, 0, 1, 1], [], []>} : vector<8x32xf32>, vector<32x32xf32>, vector<8x32xf32> -> vector<8x32xf32>
    %328 = arith.addf %326, %327 : vector<8x32xf32>
    %329 = vector.broadcast %7 : vector<1x32xf32> to vector<8x32xf32>
    %330 = arith.addf %328, %329 : vector<8x32xf32>
    %331 = vector.shape_cast %330 : vector<8x32xf32> to vector<1x8x32xf32>
    %332 = vector.broadcast %331 : vector<1x8x32xf32> to vector<7x8x32xf32>
    %333 = arith.addf %332, %19 : vector<7x8x32xf32>
    %334 = math.tanh %333 : vector<7x8x32xf32>
    %335 = vector.shape_cast %6 : vector<1x32xf32> to vector<1x1x32xf32>
    %336 = vector.broadcast %335 : vector<1x1x32xf32> to vector<7x8x32xf32>
    %337 = arith.mulf %334, %336 : vector<7x8x32xf32>
    %cst_62 = arith.constant dense<0.000000e+00> : vector<7x8xf32>
    %338 = vector.multi_reduction <add>, %337, %cst_62 [2] : vector<7x8x32xf32> to vector<7x8xf32>
    %339 = vector.shape_cast %338 : vector<7x8xf32> to vector<7x8x1xf32>
    %340 = vector.broadcast %13 : f32 to vector<7x8x1xf32>
    %341 = arith.addf %339, %340 : vector<7x8x1xf32>
    %342 = math.exp %341 : vector<7x8x1xf32>
    %cst_63 = arith.constant dense<0.000000e+00> : vector<8x1xf32>
    %343 = vector.multi_reduction <add>, %342, %cst_63 [0] : vector<7x8x1xf32> to vector<8x1xf32>
    %344 = vector.shape_cast %343 : vector<8x1xf32> to vector<1x8x1xf32>
    %345 = tpu.reciprocal %344 {approx = true} : vector<1x8x1xf32> -> vector<1x8x1xf32>
    %346 = vector.broadcast %345 : vector<1x8x1xf32> to vector<7x8x1xf32>
    %347 = arith.mulf %342, %346 : vector<7x8x1xf32>
    %348 = vector.broadcast %347 : vector<7x8x1xf32> to vector<7x8x32xf32>
    %349 = arith.mulf %348, %0 : vector<7x8x32xf32>
    %cst_64 = arith.constant dense<0.000000e+00> : vector<8x32xf32>
    %350 = vector.multi_reduction <add>, %349, %cst_64 [0] : vector<7x8x32xf32> to vector<8x32xf32>
    %351 = vector.broadcast %c4_i32 : i32 to vector<1x7xi32>
    %352 = arith.cmpi eq, %20, %351 : vector<1x7xi32>
    %cst_65 = arith.constant 0.000000e+00 : f32
    %353 = vector.shape_cast %352 : vector<1x7xi1> to vector<1x7xi1>
    %354 = vector.broadcast %353 : vector<1x7xi1> to vector<8x7xi1>
    %355 = vector.broadcast %cst_65 : f32 to vector<8x7xf32>
    %356 = arith.select %354, %1, %355 : vector<8x7xi1>, vector<8x7xf32>
    %cst_66 = arith.constant dense<0.000000e+00> : vector<8xf32>
    %357 = vector.multi_reduction <add>, %356, %cst_66 [1] : vector<8x7xf32> to vector<8xf32>
    %358 = vector.shape_cast %357 : vector<8xf32> to vector<8x1xf32>
    %359 = vector.broadcast %8 : vector<1x32xf32> to vector<8x32xf32>
    %360 = arith.mulf %350, %359 : vector<8x32xf32>
    %cst_67 = arith.constant dense<0.000000e+00> : vector<8xf32>
    %361 = vector.multi_reduction <add>, %360, %cst_67 [1] : vector<8x32xf32> to vector<8xf32>
    %362 = vector.shape_cast %361 : vector<8xf32> to vector<8x1xf32>
    %363 = vector.broadcast %14 : f32 to vector<8x1xf32>
    %364 = arith.mulf %358, %363 : vector<8x1xf32>
    %365 = arith.addf %362, %364 : vector<8x1xf32>
    %366 = vector.broadcast %15 : f32 to vector<8x1xf32>
    %367 = arith.addf %365, %366 : vector<8x1xf32>
    %368 = vector.broadcast %367 : vector<8x1xf32> to vector<8x128xf32>
    %369 = vector.broadcast %11 : vector<1x128xf32> to vector<8x128xf32>
    %370 = arith.mulf %368, %369 : vector<8x128xf32>
    %371 = arith.addf %370, %325 : vector<8x128xf32>
    %372 = vector.broadcast %12 : vector<1x128xf32> to vector<8x128xf32>
    %373 = arith.addf %371, %372 : vector<8x128xf32>
    %374 = vector.extract_strided_slice %373 {offsets = [0, 0], sizes = [8, 32], strides = [1, 1]} : vector<8x128xf32> to vector<8x32xf32>
    %375 = arith.negf %374 : vector<8x32xf32>
    %376 = math.exp %375 : vector<8x32xf32>
    %cst_68 = arith.constant 1.000000e+00 : f32
    %377 = vector.broadcast %cst_68 : f32 to vector<8x32xf32>
    %378 = arith.addf %377, %376 : vector<8x32xf32>
    %379 = arith.divf %377, %378 : vector<8x32xf32>
    %380 = vector.extract_strided_slice %373 {offsets = [0, 32], sizes = [8, 32], strides = [1, 1]} : vector<8x128xf32> to vector<8x32xf32>
    %381 = arith.negf %380 : vector<8x32xf32>
    %382 = math.exp %381 : vector<8x32xf32>
    %cst_69 = arith.constant 1.000000e+00 : f32
    %383 = vector.broadcast %cst_69 : f32 to vector<8x32xf32>
    %384 = arith.addf %383, %382 : vector<8x32xf32>
    %385 = arith.divf %383, %384 : vector<8x32xf32>
    %386 = vector.extract_strided_slice %373 {offsets = [0, 64], sizes = [8, 32], strides = [1, 1]} : vector<8x128xf32> to vector<8x32xf32>
    %387 = math.tanh %386 : vector<8x32xf32>
    %388 = vector.extract_strided_slice %373 {offsets = [0, 96], sizes = [8, 32], strides = [1, 1]} : vector<8x128xf32> to vector<8x32xf32>
    %389 = arith.negf %388 : vector<8x32xf32>
    %390 = math.exp %389 : vector<8x32xf32>
    %cst_70 = arith.constant 1.000000e+00 : f32
    %391 = vector.broadcast %cst_70 : f32 to vector<8x32xf32>
    %392 = arith.addf %391, %390 : vector<8x32xf32>
    %393 = arith.divf %391, %392 : vector<8x32xf32>
    %394 = arith.mulf %385, %321 : vector<8x32xf32>
    %395 = arith.mulf %379, %387 : vector<8x32xf32>
    %396 = arith.addf %394, %395 : vector<8x32xf32>
    %397 = math.tanh %396 : vector<8x32xf32>
    %398 = arith.mulf %393, %397 : vector<8x32xf32>
    %c5_i32 = arith.constant 5 : i32
    %cst_71 = arith.constant dense<0.000000e+00> : vector<8x160xf32>
    %399 = tpu.matmul %398, %2, %cst_71 {dimension_numbers = #tpu.dot_dimension_numbers<[1], [0], [0], [1], [0, 0, 1, 1], [], []>} : vector<8x32xf32>, vector<32x160xf32>, vector<8x160xf32> -> vector<8x160xf32>
    %400 = vector.extract_strided_slice %399 {offsets = [0, 0], sizes = [8, 128], strides = [1, 1]} : vector<8x160xf32> to vector<8x128xf32>
    %401 = vector.extract_strided_slice %399 {offsets = [0, 128], sizes = [8, 32], strides = [1, 1]} : vector<8x160xf32> to vector<8x32xf32>
    %cst_72 = arith.constant dense<0.000000e+00> : vector<8x32xf32>
    %402 = tpu.matmul %396, %3, %cst_72 {dimension_numbers = #tpu.dot_dimension_numbers<[1], [0], [0], [1], [0, 0, 1, 1], [], []>} : vector<8x32xf32>, vector<32x32xf32>, vector<8x32xf32> -> vector<8x32xf32>
    %403 = arith.addf %401, %402 : vector<8x32xf32>
    %404 = vector.broadcast %7 : vector<1x32xf32> to vector<8x32xf32>
    %405 = arith.addf %403, %404 : vector<8x32xf32>
    %406 = vector.shape_cast %405 : vector<8x32xf32> to vector<1x8x32xf32>
    %407 = vector.broadcast %406 : vector<1x8x32xf32> to vector<7x8x32xf32>
    %408 = arith.addf %407, %19 : vector<7x8x32xf32>
    %409 = math.tanh %408 : vector<7x8x32xf32>
    %410 = vector.shape_cast %6 : vector<1x32xf32> to vector<1x1x32xf32>
    %411 = vector.broadcast %410 : vector<1x1x32xf32> to vector<7x8x32xf32>
    %412 = arith.mulf %409, %411 : vector<7x8x32xf32>
    %cst_73 = arith.constant dense<0.000000e+00> : vector<7x8xf32>
    %413 = vector.multi_reduction <add>, %412, %cst_73 [2] : vector<7x8x32xf32> to vector<7x8xf32>
    %414 = vector.shape_cast %413 : vector<7x8xf32> to vector<7x8x1xf32>
    %415 = vector.broadcast %13 : f32 to vector<7x8x1xf32>
    %416 = arith.addf %414, %415 : vector<7x8x1xf32>
    %417 = math.exp %416 : vector<7x8x1xf32>
    %cst_74 = arith.constant dense<0.000000e+00> : vector<8x1xf32>
    %418 = vector.multi_reduction <add>, %417, %cst_74 [0] : vector<7x8x1xf32> to vector<8x1xf32>
    %419 = vector.shape_cast %418 : vector<8x1xf32> to vector<1x8x1xf32>
    %420 = tpu.reciprocal %419 {approx = true} : vector<1x8x1xf32> -> vector<1x8x1xf32>
    %421 = vector.broadcast %420 : vector<1x8x1xf32> to vector<7x8x1xf32>
    %422 = arith.mulf %417, %421 : vector<7x8x1xf32>
    %423 = vector.broadcast %422 : vector<7x8x1xf32> to vector<7x8x32xf32>
    %424 = arith.mulf %423, %0 : vector<7x8x32xf32>
    %cst_75 = arith.constant dense<0.000000e+00> : vector<8x32xf32>
    %425 = vector.multi_reduction <add>, %424, %cst_75 [0] : vector<7x8x32xf32> to vector<8x32xf32>
    %426 = vector.broadcast %c5_i32 : i32 to vector<1x7xi32>
    %427 = arith.cmpi eq, %20, %426 : vector<1x7xi32>
    %cst_76 = arith.constant 0.000000e+00 : f32
    %428 = vector.shape_cast %427 : vector<1x7xi1> to vector<1x7xi1>
    %429 = vector.broadcast %428 : vector<1x7xi1> to vector<8x7xi1>
    %430 = vector.broadcast %cst_76 : f32 to vector<8x7xf32>
    %431 = arith.select %429, %1, %430 : vector<8x7xi1>, vector<8x7xf32>
    %cst_77 = arith.constant dense<0.000000e+00> : vector<8xf32>
    %432 = vector.multi_reduction <add>, %431, %cst_77 [1] : vector<8x7xf32> to vector<8xf32>
    %433 = vector.shape_cast %432 : vector<8xf32> to vector<8x1xf32>
    %434 = vector.broadcast %8 : vector<1x32xf32> to vector<8x32xf32>
    %435 = arith.mulf %425, %434 : vector<8x32xf32>
    %cst_78 = arith.constant dense<0.000000e+00> : vector<8xf32>
    %436 = vector.multi_reduction <add>, %435, %cst_78 [1] : vector<8x32xf32> to vector<8xf32>
    %437 = vector.shape_cast %436 : vector<8xf32> to vector<8x1xf32>
    %438 = vector.broadcast %14 : f32 to vector<8x1xf32>
    %439 = arith.mulf %433, %438 : vector<8x1xf32>
    %440 = arith.addf %437, %439 : vector<8x1xf32>
    %441 = vector.broadcast %15 : f32 to vector<8x1xf32>
    %442 = arith.addf %440, %441 : vector<8x1xf32>
    %443 = vector.broadcast %442 : vector<8x1xf32> to vector<8x128xf32>
    %444 = vector.broadcast %11 : vector<1x128xf32> to vector<8x128xf32>
    %445 = arith.mulf %443, %444 : vector<8x128xf32>
    %446 = arith.addf %445, %400 : vector<8x128xf32>
    %447 = vector.broadcast %12 : vector<1x128xf32> to vector<8x128xf32>
    %448 = arith.addf %446, %447 : vector<8x128xf32>
    %449 = vector.extract_strided_slice %448 {offsets = [0, 0], sizes = [8, 32], strides = [1, 1]} : vector<8x128xf32> to vector<8x32xf32>
    %450 = arith.negf %449 : vector<8x32xf32>
    %451 = math.exp %450 : vector<8x32xf32>
    %cst_79 = arith.constant 1.000000e+00 : f32
    %452 = vector.broadcast %cst_79 : f32 to vector<8x32xf32>
    %453 = arith.addf %452, %451 : vector<8x32xf32>
    %454 = arith.divf %452, %453 : vector<8x32xf32>
    %455 = vector.extract_strided_slice %448 {offsets = [0, 32], sizes = [8, 32], strides = [1, 1]} : vector<8x128xf32> to vector<8x32xf32>
    %456 = arith.negf %455 : vector<8x32xf32>
    %457 = math.exp %456 : vector<8x32xf32>
    %cst_80 = arith.constant 1.000000e+00 : f32
    %458 = vector.broadcast %cst_80 : f32 to vector<8x32xf32>
    %459 = arith.addf %458, %457 : vector<8x32xf32>
    %460 = arith.divf %458, %459 : vector<8x32xf32>
    %461 = vector.extract_strided_slice %448 {offsets = [0, 64], sizes = [8, 32], strides = [1, 1]} : vector<8x128xf32> to vector<8x32xf32>
    %462 = math.tanh %461 : vector<8x32xf32>
    %463 = vector.extract_strided_slice %448 {offsets = [0, 96], sizes = [8, 32], strides = [1, 1]} : vector<8x128xf32> to vector<8x32xf32>
    %464 = arith.negf %463 : vector<8x32xf32>
    %465 = math.exp %464 : vector<8x32xf32>
    %cst_81 = arith.constant 1.000000e+00 : f32
    %466 = vector.broadcast %cst_81 : f32 to vector<8x32xf32>
    %467 = arith.addf %466, %465 : vector<8x32xf32>
    %468 = arith.divf %466, %467 : vector<8x32xf32>
    %469 = arith.mulf %460, %396 : vector<8x32xf32>
    %470 = arith.mulf %454, %462 : vector<8x32xf32>
    %471 = arith.addf %469, %470 : vector<8x32xf32>
    %472 = math.tanh %471 : vector<8x32xf32>
    %473 = arith.mulf %468, %472 : vector<8x32xf32>
    %c6_i32 = arith.constant 6 : i32
    %cst_82 = arith.constant dense<0.000000e+00> : vector<8x160xf32>
    %474 = tpu.matmul %473, %2, %cst_82 {dimension_numbers = #tpu.dot_dimension_numbers<[1], [0], [0], [1], [0, 0, 1, 1], [], []>} : vector<8x32xf32>, vector<32x160xf32>, vector<8x160xf32> -> vector<8x160xf32>
    %475 = vector.extract_strided_slice %474 {offsets = [0, 0], sizes = [8, 128], strides = [1, 1]} : vector<8x160xf32> to vector<8x128xf32>
    %476 = vector.extract_strided_slice %474 {offsets = [0, 128], sizes = [8, 32], strides = [1, 1]} : vector<8x160xf32> to vector<8x32xf32>
    %cst_83 = arith.constant dense<0.000000e+00> : vector<8x32xf32>
    %477 = tpu.matmul %471, %3, %cst_83 {dimension_numbers = #tpu.dot_dimension_numbers<[1], [0], [0], [1], [0, 0, 1, 1], [], []>} : vector<8x32xf32>, vector<32x32xf32>, vector<8x32xf32> -> vector<8x32xf32>
    %478 = arith.addf %476, %477 : vector<8x32xf32>
    %479 = vector.broadcast %7 : vector<1x32xf32> to vector<8x32xf32>
    %480 = arith.addf %478, %479 : vector<8x32xf32>
    %481 = vector.shape_cast %480 : vector<8x32xf32> to vector<1x8x32xf32>
    %482 = vector.broadcast %481 : vector<1x8x32xf32> to vector<7x8x32xf32>
    %483 = arith.addf %482, %19 : vector<7x8x32xf32>
    %484 = math.tanh %483 : vector<7x8x32xf32>
    %485 = vector.shape_cast %6 : vector<1x32xf32> to vector<1x1x32xf32>
    %486 = vector.broadcast %485 : vector<1x1x32xf32> to vector<7x8x32xf32>
    %487 = arith.mulf %484, %486 : vector<7x8x32xf32>
    %cst_84 = arith.constant dense<0.000000e+00> : vector<7x8xf32>
    %488 = vector.multi_reduction <add>, %487, %cst_84 [2] : vector<7x8x32xf32> to vector<7x8xf32>
    %489 = vector.shape_cast %488 : vector<7x8xf32> to vector<7x8x1xf32>
    %490 = vector.broadcast %13 : f32 to vector<7x8x1xf32>
    %491 = arith.addf %489, %490 : vector<7x8x1xf32>
    %492 = math.exp %491 : vector<7x8x1xf32>
    %cst_85 = arith.constant dense<0.000000e+00> : vector<8x1xf32>
    %493 = vector.multi_reduction <add>, %492, %cst_85 [0] : vector<7x8x1xf32> to vector<8x1xf32>
    %494 = vector.shape_cast %493 : vector<8x1xf32> to vector<1x8x1xf32>
    %495 = tpu.reciprocal %494 {approx = true} : vector<1x8x1xf32> -> vector<1x8x1xf32>
    %496 = vector.broadcast %495 : vector<1x8x1xf32> to vector<7x8x1xf32>
    %497 = arith.mulf %492, %496 : vector<7x8x1xf32>
    %498 = vector.broadcast %497 : vector<7x8x1xf32> to vector<7x8x32xf32>
    %499 = arith.mulf %498, %0 : vector<7x8x32xf32>
    %cst_86 = arith.constant dense<0.000000e+00> : vector<8x32xf32>
    %500 = vector.multi_reduction <add>, %499, %cst_86 [0] : vector<7x8x32xf32> to vector<8x32xf32>
    %501 = vector.broadcast %c6_i32 : i32 to vector<1x7xi32>
    %502 = arith.cmpi eq, %20, %501 : vector<1x7xi32>
    %cst_87 = arith.constant 0.000000e+00 : f32
    %503 = vector.shape_cast %502 : vector<1x7xi1> to vector<1x7xi1>
    %504 = vector.broadcast %503 : vector<1x7xi1> to vector<8x7xi1>
    %505 = vector.broadcast %cst_87 : f32 to vector<8x7xf32>
    %506 = arith.select %504, %1, %505 : vector<8x7xi1>, vector<8x7xf32>
    %cst_88 = arith.constant dense<0.000000e+00> : vector<8xf32>
    %507 = vector.multi_reduction <add>, %506, %cst_88 [1] : vector<8x7xf32> to vector<8xf32>
    %508 = vector.shape_cast %507 : vector<8xf32> to vector<8x1xf32>
    %509 = vector.broadcast %8 : vector<1x32xf32> to vector<8x32xf32>
    %510 = arith.mulf %500, %509 : vector<8x32xf32>
    %cst_89 = arith.constant dense<0.000000e+00> : vector<8xf32>
    %511 = vector.multi_reduction <add>, %510, %cst_89 [1] : vector<8x32xf32> to vector<8xf32>
    %512 = vector.shape_cast %511 : vector<8xf32> to vector<8x1xf32>
    %513 = vector.broadcast %14 : f32 to vector<8x1xf32>
    %514 = arith.mulf %508, %513 : vector<8x1xf32>
    %515 = arith.addf %512, %514 : vector<8x1xf32>
    %516 = vector.broadcast %15 : f32 to vector<8x1xf32>
    %517 = arith.addf %515, %516 : vector<8x1xf32>
    %518 = vector.broadcast %517 : vector<8x1xf32> to vector<8x128xf32>
    %519 = vector.broadcast %11 : vector<1x128xf32> to vector<8x128xf32>
    %520 = arith.mulf %518, %519 : vector<8x128xf32>
    %521 = arith.addf %520, %475 : vector<8x128xf32>
    %522 = vector.broadcast %12 : vector<1x128xf32> to vector<8x128xf32>
    %523 = arith.addf %521, %522 : vector<8x128xf32>
    %524 = vector.extract_strided_slice %523 {offsets = [0, 0], sizes = [8, 32], strides = [1, 1]} : vector<8x128xf32> to vector<8x32xf32>
    %525 = arith.negf %524 : vector<8x32xf32>
    %526 = math.exp %525 : vector<8x32xf32>
    %cst_90 = arith.constant 1.000000e+00 : f32
    %527 = vector.broadcast %cst_90 : f32 to vector<8x32xf32>
    %528 = arith.addf %527, %526 : vector<8x32xf32>
    %529 = arith.divf %527, %528 : vector<8x32xf32>
    %530 = vector.extract_strided_slice %523 {offsets = [0, 32], sizes = [8, 32], strides = [1, 1]} : vector<8x128xf32> to vector<8x32xf32>
    %531 = arith.negf %530 : vector<8x32xf32>
    %532 = math.exp %531 : vector<8x32xf32>
    %cst_91 = arith.constant 1.000000e+00 : f32
    %533 = vector.broadcast %cst_91 : f32 to vector<8x32xf32>
    %534 = arith.addf %533, %532 : vector<8x32xf32>
    %535 = arith.divf %533, %534 : vector<8x32xf32>
    %536 = vector.extract_strided_slice %523 {offsets = [0, 64], sizes = [8, 32], strides = [1, 1]} : vector<8x128xf32> to vector<8x32xf32>
    %537 = math.tanh %536 : vector<8x32xf32>
    %538 = vector.extract_strided_slice %523 {offsets = [0, 96], sizes = [8, 32], strides = [1, 1]} : vector<8x128xf32> to vector<8x32xf32>
    %539 = arith.negf %538 : vector<8x32xf32>
    %540 = math.exp %539 : vector<8x32xf32>
    %cst_92 = arith.constant 1.000000e+00 : f32
    %541 = vector.broadcast %cst_92 : f32 to vector<8x32xf32>
    %542 = arith.addf %541, %540 : vector<8x32xf32>
    %543 = arith.divf %541, %542 : vector<8x32xf32>
    %544 = arith.mulf %535, %471 : vector<8x32xf32>
    %545 = arith.mulf %529, %537 : vector<8x32xf32>
    %546 = arith.addf %544, %545 : vector<8x32xf32>
    %547 = math.tanh %546 : vector<8x32xf32>
    %548 = arith.mulf %543, %547 : vector<8x32xf32>
    %c7_i32 = arith.constant 7 : i32
    %549 = vector.broadcast %10 : vector<1x32xf32> to vector<8x32xf32>
    %550 = arith.mulf %548, %549 : vector<8x32xf32>
    %cst_93 = arith.constant dense<0.000000e+00> : vector<8xf32>
    %551 = vector.multi_reduction <add>, %550, %cst_93 [1] : vector<8x32xf32> to vector<8xf32>
    %552 = vector.shape_cast %551 : vector<8xf32> to vector<8x1xf32>
    %553 = vector.broadcast %9 : vector<1x32xf32> to vector<8x32xf32>
    %554 = arith.mulf %500, %553 : vector<8x32xf32>
    %cst_94 = arith.constant dense<0.000000e+00> : vector<8xf32>
    %555 = vector.multi_reduction <add>, %554, %cst_94 [1] : vector<8x32xf32> to vector<8xf32>
    %556 = vector.shape_cast %555 : vector<8xf32> to vector<8x1xf32>
    %557 = arith.addf %552, %556 : vector<8x1xf32>
    %558 = vector.broadcast %16 : f32 to vector<8x1xf32>
    %559 = arith.addf %557, %558 : vector<8x1xf32>
    %560 = tpu.transpose %559, [1, 0] : vector<8x1xf32> -> vector<1x8xf32>
    %c0_95 = arith.constant 0 : index
    %c0_96 = arith.constant 0 : index
    %561 = vector.load %arg8[%c0_95, %c0_96] : memref<1x8xf32, #tpu.memory_space<vmem>>, vector<1x8xf32>
    tpu.vector_store %arg8[%c0_95, %c0_96], %560 {strides = array<i32>} : memref<1x8xf32, #tpu.memory_space<vmem>>, vector<1x8xf32>,
    return
  }
  func.func @transform_0(%arg0: i32) -> (i32, i32, i32) {
    %c0_i32 = arith.constant 0 : i32
    %c0_i32_0 = arith.constant 0 : i32
    %c0_i32_1 = arith.constant 0 : i32
    return %c0_i32, %arg0, %c0_i32_0 : i32, i32, i32
  }
  func.func @transform_1(%arg0: i32) -> (i32, i32) {
    %c0_i32 = arith.constant 0 : i32
    %c0_i32_0 = arith.constant 0 : i32
    return %arg0, %c0_i32 : i32, i32
  }
  func.func @transform_2(%arg0: i32) -> (i32, i32) {
    %c0_i32 = arith.constant 0 : i32
    %c0_i32_0 = arith.constant 0 : i32
    %c0_i32_1 = arith.constant 0 : i32
    return %c0_i32, %c0_i32_0 : i32, i32
  }
  func.func @transform_3(%arg0: i32) -> (i32, i32) {
    %c0_i32 = arith.constant 0 : i32
    %c0_i32_0 = arith.constant 0 : i32
    %c0_i32_1 = arith.constant 0 : i32
    return %c0_i32, %c0_i32_0 : i32, i32
  }
  func.func @transform_4(%arg0: i32) -> (i32, i32) {
    %c0_i32 = arith.constant 0 : i32
    %c0_i32_0 = arith.constant 0 : i32
    %c0_i32_1 = arith.constant 0 : i32
    return %c0_i32, %c0_i32_0 : i32, i32
  }
  func.func @transform_5(%arg0: i32) -> (i32, i32) {
    %c0_i32 = arith.constant 0 : i32
    %c0_i32_0 = arith.constant 0 : i32
    %c0_i32_1 = arith.constant 0 : i32
    return %c0_i32, %c0_i32_0 : i32, i32
  }
  func.func @transform_6(%arg0: i32) -> i32 {
    %c0_i32 = arith.constant 0 : i32
    %c0_i32_0 = arith.constant 0 : i32
    return %c0_i32 : i32
  }
  func.func @transform_7(%arg0: i32) -> (i32, i32) {
    %c0_i32 = arith.constant 0 : i32
    %c0_i32_0 = arith.constant 0 : i32
    return %arg0, %c0_i32 : i32, i32
  }
}

</mosaic_0001>

<llo_original>
// kernel: tpu_custom_call.1
$region0: #{tpu_custom_call.1}
  #allocation0 [shape = 'u32[]', space=smem, size = 0x4, offset = 0x4, fixed_abs, tag = 'smem constant byte address 0x4 - core index']
  #allocation1 [shape = 'u32[144,128]{1,0:T(1,128)}', space=vmem, size = 0x12000, scoped, tag = 'internal scratch']
  %s0 = inlined_call_operand.hbm [shape: f32[7,8,32], index: 0, kind: input, shape index: {}]
  %s1 = inlined_call_operand.hbm [shape: f32[8,7], index: 1, kind: input, shape index: {}]
  %s2 = inlined_call_operand.hbm [shape: f32[32,160], index: 2, kind: input, shape index: {}]
  %s3 = inlined_call_operand.hbm [shape: f32[32,32], index: 3, kind: input, shape index: {}]
  %s4 = inlined_call_operand.hbm [shape: f32[32,32], index: 4, kind: input, shape index: {}]
  %s5 = inlined_call_operand.vmem [shape: f32[8,128], index: 5, kind: input, shape index: {}]
  %s6 = inlined_call_operand.vmem [shape: f32[4], index: 6, kind: input, shape index: {}]
  %s7 = inlined_call_operand.hbm [shape: f32[1,8], index: 7, kind: output, shape index: {}]
  %s8 = sld [smem:[#allocation0]]
  $region62: #{tpu_custom_call.1} parent=0
    _
  %s10 = ssub.s32 1, %s8
  %s11 = scalar_select 0, %s10, %s8
  $region1: #{tpu_custom_call.1} parent=0
    #allocation2 [shape = 'u8[28672]{0}', space=vmem, size = 0x7000, scoped, tag = 'input window, operand 0, single buffered']
    #allocation3 [shape = 's32[1]{0}', space=sflag, size = 0x4, scoped, tag = 'scoped memory for tpu_custom_call.1']
    #allocation4 [shape = 's32[1]{0}', space=sflag, size = 0x4, scoped, tag = 'scoped memory for tpu_custom_call.1']
    #allocation5 [shape = 's32[1]{0}', space=sflag, size = 0x4, scoped, tag = 'scoped memory for tpu_custom_call.1']
    #allocation6 [shape = 'u8[4096]{0}', space=vmem, size = 0x1000, scoped, tag = 'input window, operand 1, single buffered']
    #allocation7 [shape = 's32[1]{0}', space=sflag, size = 0x4, scoped, tag = 'scoped memory for tpu_custom_call.1']
    #allocation8 [shape = 'u8[32768]{0}', space=vmem, size = 0x8000, scoped, tag = 'input window, operand 2, single buffered']
    #allocation9 [shape = 'u8[16384]{0}', space=vmem, size = 0x4000, scoped, tag = 'input window, operand 3, single buffered']
    #allocation10 [shape = 's32[1]{0}', space=sflag, size = 0x4, scoped, tag = 'scoped memory for tpu_custom_call.1']
    #allocation11 [shape = 'u8[16384]{0}', space=vmem, size = 0x4000, scoped, tag = 'input window, operand 4, single buffered']
    #allocation12 [shape = 'u8[512]{0}', space=smem, size = 0x200, scoped, tag = 'input window, operand 6, single buffered']
    #allocation13 [shape = 'u8[512]{0}', space=vmem, size = 0x400, scoped, tag = 'output window, operand 0, single buffered']
    %12 = vsyncpa [#allocation3], 0
    %13 = vsyncpa [#allocation7], 0
    %14 = vsyncpa [#allocation10], 0
    %15 = vsyncpa [#allocation5], 0
    %16 = vsyncpa [#allocation4], 0
    // Predicated region
    $region2: #{tpu_custom_call.1} parent=1 // pred_check
      _
    $region3: #{tpu_custom_call.1} parent=1 // pred_check_branch
      %18 = sbr.rel (0) target = $region5
    $region4: #{tpu_custom_call.1} parent=1 // pred_region
      %s20 = ssub.s32 896, 896
      %21 = vsyncadd [#allocation3], %s20
      %s22 = sshll.u32 [#allocation2], 4
      %s23 = int_to_ptr.vmem [resolvable:$true] %s22
      %28 = dma.hbm_to_vmem [thread:$0]  %s0, 896, %s23, [#allocation3], 128, 128, 8
    $region5: #{tpu_custom_call.1} parent=1 // pred_fallthru
      _
    // Predicated region
    $region6: #{tpu_custom_call.1} parent=1 // pred_check
      _
    $region7: #{tpu_custom_call.1} parent=1 // pred_check_branch
      %30 = sbr.rel (0) target = $region9
    $region8: #{tpu_custom_call.1} parent=1 // pred_region
      %s32 = ssub.s32 128, 128
      %33 = vsyncadd [#allocation7], %s32
      %s35 = sshll.u32 [#allocation6], 4
      %s36 = int_to_ptr.vmem [resolvable:$true] %s35
      %38 = dma.hbm_to_vmem [thread:$0]  %s1, 128, %s36, [#allocation7]
    $region9: #{tpu_custom_call.1} parent=1 // pred_fallthru
      _
    // Predicated region
    $region10: #{tpu_custom_call.1} parent=1 // pred_check
      _
    $region11: #{tpu_custom_call.1} parent=1 // pred_check_branch
      %40 = sbr.rel (0) target = $region13
    $region12: #{tpu_custom_call.1} parent=1 // pred_region
      %s42 = ssub.s32 1024, 1024
      %43 = vsyncadd [#allocation7], %s42
      %s44 = sshll.u32 [#allocation8], 4
      %s45 = int_to_ptr.vmem [resolvable:$true] %s44
      %50 = dma.hbm_to_vmem [thread:$0]  %s2, 1024, %s45, [#allocation7], 256, 256, 16
    $region13: #{tpu_custom_call.1} parent=1 // pred_fallthru
      _
    // Predicated region
    $region14: #{tpu_custom_call.1} parent=1 // pred_check
      _
    $region15: #{tpu_custom_call.1} parent=1 // pred_check_branch
      %52 = sbr.rel (0) target = $region17
    $region16: #{tpu_custom_call.1} parent=1 // pred_region
      %s54 = ssub.s32 512, 512
      %55 = vsyncadd [#allocation10], %s54
      %s56 = sshll.u32 [#allocation9], 4
      %s57 = int_to_ptr.vmem [resolvable:$true] %s56
      %62 = dma.hbm_to_vmem [thread:$0]  %s3, 512, %s57, [#allocation10], 128, 128, 8
    $region17: #{tpu_custom_call.1} parent=1 // pred_fallthru
      _
    // Predicated region
    $region18: #{tpu_custom_call.1} parent=1 // pred_check
      _
    $region19: #{tpu_custom_call.1} parent=1 // pred_check_branch
      %64 = sbr.rel (0) target = $region21
    $region20: #{tpu_custom_call.1} parent=1 // pred_region
      %s66 = ssub.s32 512, 512
      %67 = vsyncadd [#allocation10], %s66
      %s68 = sshll.u32 [#allocation11], 4
      %s69 = int_to_ptr.vmem [resolvable:$true] %s68
      %74 = dma.hbm_to_vmem [thread:$0]  %s4, 512, %s69, [#allocation10], 128, 128, 8
    $region21: #{tpu_custom_call.1} parent=1 // pred_fallthru
      _
    // Predicated region
    $region22: #{tpu_custom_call.1} parent=1 // pred_check
      _
    $region23: #{tpu_custom_call.1} parent=1 // pred_check_branch
      %76 = sbr.rel (0) target = $region25
    $region24: #{tpu_custom_call.1} parent=1 // pred_region
      _
    $region25: #{tpu_custom_call.1} parent=1 // pred_fallthru
      _
    // Predicated region
    $region26: #{tpu_custom_call.1} parent=1 // pred_check
      _
    $region27: #{tpu_custom_call.1} parent=1 // pred_check_branch
      %78 = sbr.rel (0) target = $region29
    $region28: #{tpu_custom_call.1} parent=1 // pred_region
      %s80 = ssub.s32 16, 16
      %81 = vsyncadd [#allocation5], %s80
      %s83 = sshll.u32 %s6, 4
      %s84 = int_to_ptr.vmem [resolvable:$true] %s83
      %86 = dma.vmem_to_smem %s84, 16, [#allocation12], [#allocation5]
    $region29: #{tpu_custom_call.1} parent=1 // pred_fallthru
      _
    // Predicated region
    $region30: #{tpu_custom_call.1} parent=1 // pred_check
      _
    $region31: #{tpu_custom_call.1} parent=1 // pred_check_branch
      %88 = sbr.rel (0) target = $region33
    $region32: #{tpu_custom_call.1} parent=1 // pred_region
      %89 = dma.done [#allocation3], 896
    $region33: #{tpu_custom_call.1} parent=1 // pred_fallthru
      _
    // Predicated region
    $region34: #{tpu_custom_call.1} parent=1 // pred_check
      _
    $region35: #{tpu_custom_call.1} parent=1 // pred_check_branch
      %91 = sbr.rel (0) target = $region37
    $region36: #{tpu_custom_call.1} parent=1 // pred_region
      %92 = dma.done [#allocation7], 128
    $region37: #{tpu_custom_call.1} parent=1 // pred_fallthru
      _
    // Predicated region
    $region38: #{tpu_custom_call.1} parent=1 // pred_check
      _
    $region39: #{tpu_custom_call.1} parent=1 // pred_check_branch
      %94 = sbr.rel (0) target = $region41
    $region40: #{tpu_custom_call.1} parent=1 // pred_region
      %95 = dma.done [#allocation7], 1024
    $region41: #{tpu_custom_call.1} parent=1 // pred_fallthru
      _
    // Predicated region
    $region42: #{tpu_custom_call.1} parent=1 // pred_check
      _
    $region43: #{tpu_custom_call.1} parent=1 // pred_check_branch
      %97 = sbr.rel (0) target = $region45
    $region44: #{tpu_custom_call.1} parent=1 // pred_region
      %98 = dma.done [#allocation10], 512
    $region45: #{tpu_custom_call.1} parent=1 // pred_fallthru
      _
    // Predicated region
    $region46: #{tpu_custom_call.1} parent=1 // pred_check
      _
    $region47: #{tpu_custom_call.1} parent=1 // pred_check_branch
      %100 = sbr.rel (0) target = $region49
    $region48: #{tpu_custom_call.1} parent=1 // pred_region
      %101 = dma.done [#allocation10], 512
    $region49: #{tpu_custom_call.1} parent=1 // pred_fallthru
      _
    // Predicated region
    $region50: #{tpu_custom_call.1} parent=1 // pred_check
      _
    $region51: #{tpu_custom_call.1} parent=1 // pred_check_branch
      %103 = sbr.rel (0) target = $region53
    $region52: #{tpu_custom_call.1} parent=1 // pred_region
      %104 = dma.done [#allocation5], 16
    $region53: #{tpu_custom_call.1} parent=1 // pred_fallthru
      _
    %105 = sfence
    %v106 = vld [vmem:[#allocation2] sm:$0xff]
    %v107 = vld [vmem:[#allocation2 + $0x8] sm:$0xff]
    %v108 = vld [vmem:[#allocation2 + $0x10] sm:$0xff]
    %v109 = vld [vmem:[#allocation2 + $0x18] sm:$0xff]
    %v110 = vld [vmem:[#allocation2 + $0x20] sm:$0xff]
    %v111 = vld [vmem:[#allocation2 + $0x28] sm:$0xff]
    %v112 = vld [vmem:[#allocation2 + $0x30] sm:$0xff]
    %v113 = vld [vmem:[#allocation6] sm:$0xff]
    %v114 = vld [vmem:[#allocation8] sm:$0xff]
    %v115 = vld [vmem:[#allocation8 + $0x8] sm:$0xff]
    %v116 = vld [vmem:[#allocation8 + $0x10] sm:$0xff]
    %v117 = vld [vmem:[#allocation8 + $0x18] sm:$0xff]
    %v118 = vld [vmem:[#allocation8 + $0x20] sm:$0xff]
    %v119 = vld [vmem:[#allocation8 + $0x28] sm:$0xff]
    %v120 = vld [vmem:[#allocation8 + $0x30] sm:$0xff]
    %v121 = vld [vmem:[#allocation8 + $0x38] sm:$0xff]
    %v122 = vld [vmem:[#allocation9] sm:$0xff]
    %v123 = vld [vmem:[#allocation9 + $0x8] sm:$0xff]
    %v124 = vld [vmem:[#allocation9 + $0x10] sm:$0xff]
    %v125 = vld [vmem:[#allocation9 + $0x18] sm:$0xff]
    %v126 = vld [vmem:[#allocation11] sm:$0xff]
    %v127 = vld [vmem:[#allocation11 + $0x8] sm:$0xff]
    %v128 = vld [vmem:[#allocation11 + $0x10] sm:$0xff]
    %v129 = vld [vmem:[#allocation11 + $0x18] sm:$0xff]
    %v130 = vld [vmem:[%s5] sm:$0xff]
    %s131 = sld [smem:[#allocation12]]
    %s132 = sld [smem:[#allocation12 + $0x1]]
    %s133 = sld [smem:[#allocation12 + $0x2]]
    %s134 = sld [smem:[#allocation12 + $0x3]]
    %vm135 = vcmask 261120
    %v137 = vsel %vm135, %v106, 0
    %v140 = vsel %vm135, %v107, 0
    %v143 = vsel %vm135, %v108, 0
    %v146 = vsel %vm135, %v109, 0
    %v149 = vsel %vm135, %v110, 0
    %v152 = vsel %vm135, %v111, 0
    %v155 = vsel %vm135, %v112, 0
    %157 = vmatprep.subr.mxu0 0.0
    %158 = vmatpush1.msra.mxu0 %v126
    %159 = vmatprep.subr.mxu0 0.0
    %160 = vmatpush1.msra.mxu0 %v127
    %161 = vmatprep.subr.mxu0 0.0
    %162 = vmatpush1.msra.mxu0 %v128
    %163 = vmatprep.subr.mxu0 0.0
    %164 = vmatpush1.msra.mxu0 %v129
    %165 = vmatprep.subr.mxu0 0.0
    %166 = vmatpush1.msra.mxu0 0.0
    %167 = vmatprep.subr.mxu0 0.0
    %168 = vmatpush1.msra.mxu0 0.0
    %169 = vmatprep.subr.mxu0 0.0
    %170 = vmatpush1.msra.mxu0 0.0
    %171 = vmatprep.subr.mxu0 0.0
    %172 = vmatpush1.msra.mxu0 0.0
    %173 = vmatprep.subr.mxu0 0.0
    %174 = vmatpush1.msra.mxu0 0.0
    %175 = vmatprep.subr.mxu0 0.0
    %176 = vmatpush1.msra.mxu0 0.0
    %177 = vmatprep.subr.mxu0 0.0
    %178 = vmatpush1.msra.mxu0 0.0
    %179 = vmatprep.subr.mxu0 0.0
    %180 = vmatpush1.msra.mxu0 0.0
    %181 = vmatprep.subr.mxu0 0.0
    %182 = vmatpush1.msra.mxu0 0.0
    %183 = vmatprep.subr.mxu0 0.0
    %184 = vmatpush1.msra.mxu0 0.0
    %185 = vmatprep.subr.mxu0 0.0
    %186 = vmatpush1.msra.mxu0 0.0
    %187 = vmatprep.subr.mxu0 0.0
    %188 = vmatpush1.msra.mxu0 0.0
    %189 = vmatprep.subr.mxu0 0.0
    %190 = vmatpush1.msra.mxu0 0.0
    %191 = vmatprep.subr.mxu0 0.0
    %192 = vmatpush1.msra.mxu0 0.0
    %193 = vmatprep.subr.mxu0 0.0
    %194 = vmatpush1.msra.mxu0 0.0
    %195 = vmatprep.subr.mxu0 0.0
    %196 = vmatpush1.msra.mxu0 0.0
    %197 = vmatprep.subr.mxu0 0.0
    %198 = vmatpush1.msra.mxu0 0.0
    %199 = vmatprep.subr.mxu0 0.0
    %200 = vmatpush1.msra.mxu0 0.0
    %201 = vmatprep.subr.mxu0 0.0
    %202 = vmatpush1.msra.mxu0 0.0
    %203 = vmatprep.subr.mxu0 0.0
    %204 = vmatpush1.msra.mxu0 0.0
    %205 = vmatprep.subr.mxu0 0.0
    %206 = vmatpush1.msra.mxu0 0.0
    %207 = vmatprep.subr.mxu0 0.0
    %208 = vmatpush1.msra.mxu0 0.0
    %209 = vmatprep.subr.mxu0 0.0
    %210 = vmatpush1.msra.mxu0 0.0
    %211 = vmatprep.subr.mxu0 0.0
    %212 = vmatpush1.msra.mxu0 0.0
    %213 = vmatprep.subr.mxu0 0.0
    %214 = vmatpush1.msra.mxu0 0.0
    %215 = vmatprep.subr.mxu0 0.0
    %216 = vmatpush1.msra.mxu0 0.0
    %217 = vmatprep.subr.mxu0 0.0
    %218 = vmatpush1.msra.mxu0 0.0
    %219 = vmatprep.subr.mxu0 0.0
    %220 = vmatpush1.msra.mxu0 0.0
    %221 = vmatprep.mubr.f32.mxu0 0.0
    %222 = vmatmul.mubr.f32.gmra.mrb[0].mxu0 %v137
    %v223 = vpop.f32.mrb[0].mxu0
    %v224 = vadd.f32 0.0, %v223
    %v225 = vpop.f32.mrb[0].mxu0
    %226 = vmatprep.mubr.f32.mxu0 0.0
    %227 = vmatmul.mubr.f32.gmra.mrb[0].mxu0 %v140
    %v228 = vpop.f32.mrb[0].mxu0
    %v229 = vadd.f32 0.0, %v228
    %v230 = vpop.f32.mrb[0].mxu0
    %231 = vmatprep.mubr.f32.mxu0 0.0
    %232 = vmatmul.mubr.f32.gmra.mrb[0].mxu0 %v143
    %v233 = vpop.f32.mrb[0].mxu0
    %v234 = vadd.f32 0.0, %v233
    %v235 = vpop.f32.mrb[0].mxu0
    %236 = vmatprep.mubr.f32.mxu0 0.0
    %237 = vmatmul.mubr.f32.gmra.mrb[0].mxu0 %v146
    %v238 = vpop.f32.mrb[0].mxu0
    %v239 = vadd.f32 0.0, %v238
    %v240 = vpop.f32.mrb[0].mxu0
    %241 = vmatprep.mubr.f32.mxu0 0.0
    %242 = vmatmul.mubr.f32.gmra.mrb[0].mxu0 %v149
    %v243 = vpop.f32.mrb[0].mxu0
    %v244 = vadd.f32 0.0, %v243
    %v245 = vpop.f32.mrb[0].mxu0
    %246 = vmatprep.mubr.f32.mxu0 0.0
    %247 = vmatmul.mubr.f32.gmra.mrb[0].mxu0 %v152
    %v248 = vpop.f32.mrb[0].mxu0
    %v249 = vadd.f32 0.0, %v248
    %v250 = vpop.f32.mrb[0].mxu0
    %251 = vmatprep.mubr.f32.mxu0 0.0
    %252 = vmatmul.mubr.f32.gmra.mrb[0].mxu0 %v155
    %v253 = vpop.f32.mrb[0].mxu0
    %v254 = vadd.f32 0.0, %v253
    %v255 = vpop.f32.mrb[0].mxu0
    %256 = vdwg.mxu0
    %v257 = vlaneseq
    %v258 = vand.u32 %v257, 127
    %v260 = vsel %vm135, 0.0, 0
    %262 = vmatprep.subr.mxu0 %v115
    %263 = vmatpush1.msra.mxu0 %v114
    %264 = vmatprep.subr.mxu0 %v117
    %265 = vmatpush1.msra.mxu0 %v116
    %266 = vmatprep.subr.mxu0 %v119
    %267 = vmatpush1.msra.mxu0 %v118
    %268 = vmatprep.subr.mxu0 %v121
    %269 = vmatpush1.msra.mxu0 %v120
    %270 = vmatprep.subr.mxu0 0.0
    %271 = vmatpush1.msra.mxu0 0.0
    %272 = vmatprep.subr.mxu0 0.0
    %273 = vmatpush1.msra.mxu0 0.0
    %274 = vmatprep.subr.mxu0 0.0
    %275 = vmatpush1.msra.mxu0 0.0
    %276 = vmatprep.subr.mxu0 0.0
    %277 = vmatpush1.msra.mxu0 0.0
    %278 = vmatprep.subr.mxu0 0.0
    %279 = vmatpush1.msra.mxu0 0.0
    %280 = vmatprep.subr.mxu0 0.0
    %281 = vmatpush1.msra.mxu0 0.0
    %282 = vmatprep.subr.mxu0 0.0
    %283 = vmatpush1.msra.mxu0 0.0
    %284 = vmatprep.subr.mxu0 0.0
    %285 = vmatpush1.msra.mxu0 0.0
    %286 = vmatprep.subr.mxu0 0.0
    %287 = vmatpush1.msra.mxu0 0.0
    %288 = vmatprep.subr.mxu0 0.0
    %289 = vmatpush1.msra.mxu0 0.0
    %290 = vmatprep.subr.mxu0 0.0
    %291 = vmatpush1.msra.mxu0 0.0
    %292 = vmatprep.subr.mxu0 0.0
    %293 = vmatpush1.msra.mxu0 0.0
    %294 = vmatprep.subr.mxu0 0.0
    %295 = vmatpush1.msra.mxu0 0.0
    %296 = vmatprep.subr.mxu0 0.0
    %297 = vmatpush1.msra.mxu0 0.0
    %298 = vmatprep.subr.mxu0 0.0
    %299 = vmatpush1.msra.mxu0 0.0
    %300 = vmatprep.subr.mxu0 0.0
    %301 = vmatpush1.msra.mxu0 0.0
    %302 = vmatprep.subr.mxu0 0.0
    %303 = vmatpush1.msra.mxu0 0.0
    %304 = vmatprep.subr.mxu0 0.0
    %305 = vmatpush1.msra.mxu0 0.0
    %306 = vmatprep.subr.mxu0 0.0
    %307 = vmatpush1.msra.mxu0 0.0
    %308 = vmatprep.subr.mxu0 0.0
    %309 = vmatpush1.msra.mxu0 0.0
    %310 = vmatprep.subr.mxu0 0.0
    %311 = vmatpush1.msra.mxu0 0.0
    %312 = vmatprep.subr.mxu0 0.0
    %313 = vmatpush1.msra.mxu0 0.0
    %314 = vmatprep.subr.mxu0 0.0
    %315 = vmatpush1.msra.mxu0 0.0
    %316 = vmatprep.subr.mxu0 0.0
    %317 = vmatpush1.msra.mxu0 0.0
    %318 = vmatprep.subr.mxu0 0.0
    %319 = vmatpush1.msra.mxu0 0.0
    %320 = vmatprep.subr.mxu0 0.0
    %321 = vmatpush1.msra.mxu0 0.0
    %322 = vmatprep.subr.mxu0 0.0
    %323 = vmatpush1.msra.mxu0 0.0
    %324 = vmatprep.subr.mxu0 0.0
    %325 = vmatpush1.msra.mxu0 0.0
    %326 = vmatprep.mubr.f32.mxu0 0.0
    %327 = vmatmul.mubr.f32.gmra.mrb[0].mxu0 %v260
    %v328 = vpop.f32.mrb[0].mxu0
    %v329 = vadd.f32 0.0, %v328
    %v330 = vpop.f32.mrb[0].mxu0
    %v331 = vadd.f32 0.0, %v330
    %332 = vdwg.mxu0
    %333 = vmatprep.subr.mxu0 0.0
    %334 = vmatpush1.msra.mxu0 %v122
    %335 = vmatprep.subr.mxu0 0.0
    %336 = vmatpush1.msra.mxu0 %v123
    %337 = vmatprep.subr.mxu0 0.0
    %338 = vmatpush1.msra.mxu0 %v124
    %339 = vmatprep.subr.mxu0 0.0
    %340 = vmatpush1.msra.mxu0 %v125
    %341 = vmatprep.subr.mxu0 0.0
    %342 = vmatpush1.msra.mxu0 0.0
    %343 = vmatprep.subr.mxu0 0.0
    %344 = vmatpush1.msra.mxu0 0.0
    %345 = vmatprep.subr.mxu0 0.0
    %346 = vmatpush1.msra.mxu0 0.0
    %347 = vmatprep.subr.mxu0 0.0
    %348 = vmatpush1.msra.mxu0 0.0
    %349 = vmatprep.subr.mxu0 0.0
    %350 = vmatpush1.msra.mxu0 0.0
    %351 = vmatprep.subr.mxu0 0.0
    %352 = vmatpush1.msra.mxu0 0.0
    %353 = vmatprep.subr.mxu0 0.0
    %354 = vmatpush1.msra.mxu0 0.0
    %355 = vmatprep.subr.mxu0 0.0
    %356 = vmatpush1.msra.mxu0 0.0
    %357 = vmatprep.subr.mxu0 0.0
    %358 = vmatpush1.msra.mxu0 0.0
    %359 = vmatprep.subr.mxu0 0.0
    %360 = vmatpush1.msra.mxu0 0.0
    %361 = vmatprep.subr.mxu0 0.0
    %362 = vmatpush1.msra.mxu0 0.0
    %363 = vmatprep.subr.mxu0 0.0
    %364 = vmatpush1.msra.mxu0 0.0
    %365 = vmatprep.subr.mxu0 0.0
    %366 = vmatpush1.msra.mxu0 0.0
    %367 = vmatprep.subr.mxu0 0.0
    %368 = vmatpush1.msra.mxu0 0.0
    %369 = vmatprep.subr.mxu0 0.0
    %370 = vmatpush1.msra.mxu0 0.0
    %371 = vmatprep.subr.mxu0 0.0
    %372 = vmatpush1.msra.mxu0 0.0
    %373 = vmatprep.subr.mxu0 0.0
    %374 = vmatpush1.msra.mxu0 0.0
    %375 = vmatprep.subr.mxu0 0.0
    %376 = vmatpush1.msra.mxu0 0.0
    %377 = vmatprep.subr.mxu0 0.0
    %378 = vmatpush1.msra.mxu0 0.0
    %379 = vmatprep.subr.mxu0 0.0
    %380 = vmatpush1.msra.mxu0 0.0
    %381 = vmatprep.subr.mxu0 0.0
    %382 = vmatpush1.msra.mxu0 0.0
    %383 = vmatprep.subr.mxu0 0.0
    %384 = vmatpush1.msra.mxu0 0.0
    %385 = vmatprep.subr.mxu0 0.0
    %386 = vmatpush1.msra.mxu0 0.0
    %387 = vmatprep.subr.mxu0 0.0
    %388 = vmatpush1.msra.mxu0 0.0
    %389 = vmatprep.subr.mxu0 0.0
    %390 = vmatpush1.msra.mxu0 0.0
    %391 = vmatprep.subr.mxu0 0.0
    %392 = vmatpush1.msra.mxu0 0.0
    %393 = vmatprep.subr.mxu0 0.0
    %394 = vmatpush1.msra.mxu0 0.0
    %395 = vmatprep.subr.mxu0 0.0
    %396 = vmatpush1.msra.mxu0 0.0
    %397 = vmatprep.mubr.f32.mxu0 0.0
    %398 = vmatmul.mubr.f32.gmra.mrb[0].mxu0 %v260
    %v399 = vpop.f32.mrb[0].mxu0
    %v400 = vadd.f32 0.0, %v399
    %v401 = vpop.f32.mrb[0].mxu0
    %402 = vdwg.mxu0
    %v403 = vadd.f32 %v331, %v400
    %v404 = vlaneseq
    %v405 = vshrl.u32 %v404, 7
    %v406 = vsub.s32 1, %v405
    %v407 = vrot.slane %v130, %v406
    %v408 = vadd.f32 %v403, %v407
    %v409 = vadd.f32 %v408, %v224
    %v410 = vadd.f32 %v408, %v229
    %v411 = vadd.f32 %v408, %v234
    %v412 = vadd.f32 %v408, %v239
    %v413 = vadd.f32 %v408, %v244
    %v414 = vadd.f32 %v408, %v249
    %v415 = vadd.f32 %v408, %v254
    %v416 = vtanh.pop %v409
    %v417 = vtanh.pop %v410
    %v418 = vtanh.pop %v411
    %v419 = vtanh.pop %v412
    %v420 = vtanh.pop %v413
    %v421 = vtanh.pop %v414
    %v422 = vtanh.pop %v415
    %v423 = vlaneseq
    %v424 = vshrl.u32 %v423, 7
    %v425 = vsub.s32 0, %v424
    %v426 = vrot.slane %v130, %v425
    %v427 = vmul.f32 %v416, %v426
    %v428 = vmul.f32 %v417, %v426
    %v429 = vmul.f32 %v418, %v426
    %v430 = vmul.f32 %v419, %v426
    %v431 = vmul.f32 %v420, %v426
    %v432 = vmul.f32 %v421, %v426
    %v433 = vmul.f32 %v422, %v426
    %v434 = vsel %vm135, %v427, 0.0
    %435 = vadd.xlane.f32.xlu0 %v434
    %v436 = vpop.xlane.xlu0 %435
    %v437 = vsel %vm135, %v428, 0.0
    %438 = vadd.xlane.f32.xlu0 %v437
    %v439 = vpop.xlane.xlu0 %438
    %v440 = vsel %vm135, %v429, 0.0
    %441 = vadd.xlane.f32.xlu0 %v440
    %v442 = vpop.xlane.xlu0 %441
    %v443 = vsel %vm135, %v430, 0.0
    %444 = vadd.xlane.f32.xlu0 %v443
    %v445 = vpop.xlane.xlu0 %444
    %v446 = vsel %vm135, %v431, 0.0
    %447 = vadd.xlane.f32.xlu0 %v446
    %v448 = vpop.xlane.xlu0 %447
    %v449 = vsel %vm135, %v432, 0.0
    %450 = vadd.xlane.f32.xlu0 %v449
    %v451 = vpop.xlane.xlu0 %450
    %v452 = vsel %vm135, %v433, 0.0
    %453 = vadd.xlane.f32.xlu0 %v452
    %v454 = vpop.xlane.xlu0 %453
    %v455 = vstv %s131
    %v456 = vadd.f32 %v436, %v455
    %v457 = vadd.f32 %v439, %v455
    %v458 = vadd.f32 %v442, %v455
    %v459 = vadd.f32 %v445, %v455
    %v460 = vadd.f32 %v448, %v455
    %v461 = vadd.f32 %v451, %v455
    %v462 = vadd.f32 %v454, %v455
    %v463 = vmul.f32 %v456, 1.442695
    %v464 = vpow.pop %v463
    %v465 = vmul.f32 %v457, 1.442695
    %v466 = vpow.pop %v465
    %v467 = vmul.f32 %v458, 1.442695
    %v468 = vpow.pop %v467
    %v469 = vmul.f32 %v459, 1.442695
    %v470 = vpow.pop %v469
    %v471 = vmul.f32 %v460, 1.442695
    %v472 = vpow.pop %v471
    %v473 = vmul.f32 %v461, 1.442695
    %v474 = vpow.pop %v473
    %v475 = vmul.f32 %v462, 1.442695
    %v476 = vpow.pop %v475
    %v477 = vadd.f32 %v464, %v466
    %v478 = vadd.f32 %v477, %v468
    %v479 = vadd.f32 %v478, %v470
    %v480 = vadd.f32 %v479, %v472
    %v481 = vadd.f32 %v480, %v474
    %v482 = vadd.f32 %v481, %v476
    %v483 = vrcp.pop %v482
    %v484 = vmul.f32 %v464, %v483
    %v485 = vmul.f32 %v466, %v483
    %v486 = vmul.f32 %v468, %v483
    %v487 = vmul.f32 %v470, %v483
    %v488 = vmul.f32 %v472, %v483
    %v489 = vmul.f32 %v474, %v483
    %v490 = vmul.f32 %v476, %v483
    %v491 = vmul.f32 %v484, %v106
    %v492 = vmul.f32 %v485, %v107
    %v493 = vmul.f32 %v486, %v108
    %v494 = vmul.f32 %v487, %v109
    %v495 = vmul.f32 %v488, %v110
    %v496 = vmul.f32 %v489, %v111
    %v497 = vmul.f32 %v490, %v112
    %v498 = vsel %vm135, %v491, 0.0
    %v499 = vsel %vm135, %v492, 0.0
    %v500 = vadd.f32 %v498, %v499
    %v501 = vsel %vm135, %v493, 0.0
    %v502 = vadd.f32 %v500, %v501
    %v503 = vsel %vm135, %v494, 0.0
    %v504 = vadd.f32 %v502, %v503
    %v505 = vsel %vm135, %v495, 0.0
    %v506 = vadd.f32 %v504, %v505
    %v507 = vsel %vm135, %v496, 0.0
    %v508 = vadd.f32 %v506, %v507
    %v509 = vsel %vm135, %v497, 0.0
    %v510 = vadd.f32 %v508, %v509
    %vm511 = vcmp.eq.s32.totalorder %v258, 0
    %v512 = vsel %vm511, 1, 0
    %vm513 = vcmp.eq.s32.totalorder %v512, 1
    %v514 = vsel %vm513, %v113, 0.0
    %vm515 = vcmask 56320
    %v516 = vsel %vm515, %v514, 0.0
    %517 = vadd.xlane.f32.xlu0 %v516
    %v518 = vpop.xlane.xlu0 %517
    %v519 = vlaneseq
    %v520 = vshrl.u32 %v519, 7
    %v521 = vsub.s32 2, %v520
    %v522 = vrot.slane %v130, %v521
    %v523 = vmul.f32 %v510, %v522
    %v524 = vsel %vm135, %v523, 0.0
    %525 = vadd.xlane.f32.xlu0 %v524
    %v526 = vpop.xlane.xlu0 %525
    %v527 = vstv %s132
    %v528 = vmul.f32 %v518, %v527
    %v529 = vadd.f32 %v526, %v528
    %v530 = vstv %s133
    %v531 = vadd.f32 %v529, %v530
    %v532 = vlaneseq
    %v533 = vshrl.u32 %v532, 7
    %v534 = vsub.s32 5, %v533
    %v535 = vrot.slane %v130, %v534
    %v536 = vmul.f32 %v531, %v535
    %v537 = vadd.f32 %v536, %v329
    %v538 = vlaneseq
    %v539 = vshrl.u32 %v538, 7
    %v540 = vsub.s32 6, %v539
    %v541 = vrot.slane %v130, %v540
    %v542 = vadd.f32 %v537, %v541
    %v543 = vxor.u32 %v542, 2147483648
    %v544 = vmul.f32 %v543, 1.442695
    %v545 = vpow.pop %v544
    %v546 = vadd.f32 %v545, 1.0
    %v547 = vrcp.pop %v546
    %v548 = vmul.f32 1.0, %v547
    %v549 = vtanh.pop %v542
    %v550 = vmul.f32 %v548, 0.0
    %552 = vrot.lane.b32.xlu0 %v549, 64
    %v553 = vpop.permute.xlu0 %552
    %v555 = vmul.f32 %v548, %v553
    %557 = vrot.lane.b32.xlu0 %v555, 32
    %v558 = vpop.permute.xlu0 %557
    %v560 = vadd.f32 %v550, %v558
    %v561 = vtanh.pop %v560
    %563 = vrot.lane.b32.xlu0 %v561, 64
    %v564 = vpop.permute.xlu0 %563
    %v566 = vmul.f32 %v548, %v564
    %568 = vrot.lane.b32.xlu0 %v566, 32
    %v569 = vpop.permute.xlu0 %568
    %v570 = vsel %vm135, %v569, 0
    %572 = vmatprep.subr.mxu0 %v115
    %573 = vmatpush1.msra.mxu0 %v114
    %574 = vmatprep.subr.mxu0 %v117
    %575 = vmatpush1.msra.mxu0 %v116
    %576 = vmatprep.subr.mxu0 %v119
    %577 = vmatpush1.msra.mxu0 %v118
    %578 = vmatprep.subr.mxu0 %v121
    %579 = vmatpush1.msra.mxu0 %v120
    %580 = vmatprep.subr.mxu0 0.0
    %581 = vmatpush1.msra.mxu0 0.0
    %582 = vmatprep.subr.mxu0 0.0
    %583 = vmatpush1.msra.mxu0 0.0
    %584 = vmatprep.subr.mxu0 0.0
    %585 = vmatpush1.msra.mxu0 0.0
    %586 = vmatprep.subr.mxu0 0.0
    %587 = vmatpush1.msra.mxu0 0.0
    %588 = vmatprep.subr.mxu0 0.0
    %589 = vmatpush1.msra.mxu0 0.0
    %590 = vmatprep.subr.mxu0 0.0
    %591 = vmatpush1.msra.mxu0 0.0
    %592 = vmatprep.subr.mxu0 0.0
    %593 = vmatpush1.msra.mxu0 0.0
    %594 = vmatprep.subr.mxu0 0.0
    %595 = vmatpush1.msra.mxu0 0.0
    %596 = vmatprep.subr.mxu0 0.0
    %597 = vmatpush1.msra.mxu0 0.0
    %598 = vmatprep.subr.mxu0 0.0
    %599 = vmatpush1.msra.mxu0 0.0
    %600 = vmatprep.subr.mxu0 0.0
    %601 = vmatpush1.msra.mxu0 0.0
    %602 = vmatprep.subr.mxu0 0.0
    %603 = vmatpush1.msra.mxu0 0.0
    %604 = vmatprep.subr.mxu0 0.0
    %605 = vmatpush1.msra.mxu0 0.0
    %606 = vmatprep.subr.mxu0 0.0
    %607 = vmatpush1.msra.mxu0 0.0
    %608 = vmatprep.subr.mxu0 0.0
    %609 = vmatpush1.msra.mxu0 0.0
    %610 = vmatprep.subr.mxu0 0.0
    %611 = vmatpush1.msra.mxu0 0.0
    %612 = vmatprep.subr.mxu0 0.0
    %613 = vmatpush1.msra.mxu0 0.0
    %614 = vmatprep.subr.mxu0 0.0
    %615 = vmatpush1.msra.mxu0 0.0
    %616 = vmatprep.subr.mxu0 0.0
    %617 = vmatpush1.msra.mxu0 0.0
    %618 = vmatprep.subr.mxu0 0.0
    %619 = vmatpush1.msra.mxu0 0.0
    %620 = vmatprep.subr.mxu0 0.0
    %621 = vmatpush1.msra.mxu0 0.0
    %622 = vmatprep.subr.mxu0 0.0
    %623 = vmatpush1.msra.mxu0 0.0
    %624 = vmatprep.subr.mxu0 0.0
    %625 = vmatpush1.msra.mxu0 0.0
    %626 = vmatprep.subr.mxu0 0.0
    %627 = vmatpush1.msra.mxu0 0.0
    %628 = vmatprep.subr.mxu0 0.0
    %629 = vmatpush1.msra.mxu0 0.0
    %630 = vmatprep.subr.mxu0 0.0
    %631 = vmatpush1.msra.mxu0 0.0
    %632 = vmatprep.subr.mxu0 0.0
    %633 = vmatpush1.msra.mxu0 0.0
    %634 = vmatprep.subr.mxu0 0.0
    %635 = vmatpush1.msra.mxu0 0.0
    %636 = vmatprep.mubr.f32.mxu0 0.0
    %637 = vmatmul.mubr.f32.gmra.mrb[0].mxu0 %v570
    %v638 = vpop.f32.mrb[0].mxu0
    %v639 = vadd.f32 0.0, %v638
    %v640 = vpop.f32.mrb[0].mxu0
    %v641 = vadd.f32 0.0, %v640
    %642 = vdwg.mxu0
    %644 = vrot.lane.b32.xlu0 %v560, 96
    %v645 = vpop.permute.xlu0 %644
    %v646 = vsel %vm135, %v645, 0
    %648 = vmatprep.subr.mxu0 0.0
    %649 = vmatpush1.msra.mxu0 %v122
    %650 = vmatprep.subr.mxu0 0.0
    %651 = vmatpush1.msra.mxu0 %v123
    %652 = vmatprep.subr.mxu0 0.0
    %653 = vmatpush1.msra.mxu0 %v124
    %654 = vmatprep.subr.mxu0 0.0
    %655 = vmatpush1.msra.mxu0 %v125
    %656 = vmatprep.subr.mxu0 0.0
    %657 = vmatpush1.msra.mxu0 0.0
    %658 = vmatprep.subr.mxu0 0.0
    %659 = vmatpush1.msra.mxu0 0.0
    %660 = vmatprep.subr.mxu0 0.0
    %661 = vmatpush1.msra.mxu0 0.0
    %662 = vmatprep.subr.mxu0 0.0
    %663 = vmatpush1.msra.mxu0 0.0
    %664 = vmatprep.subr.mxu0 0.0
    %665 = vmatpush1.msra.mxu0 0.0
    %666 = vmatprep.subr.mxu0 0.0
    %667 = vmatpush1.msra.mxu0 0.0
    %668 = vmatprep.subr.mxu0 0.0
    %669 = vmatpush1.msra.mxu0 0.0
    %670 = vmatprep.subr.mxu0 0.0
    %671 = vmatpush1.msra.mxu0 0.0
    %672 = vmatprep.subr.mxu0 0.0
    %673 = vmatpush1.msra.mxu0 0.0
    %674 = vmatprep.subr.mxu0 0.0
    %675 = vmatpush1.msra.mxu0 0.0
    %676 = vmatprep.subr.mxu0 0.0
    %677 = vmatpush1.msra.mxu0 0.0
    %678 = vmatprep.subr.mxu0 0.0
    %679 = vmatpush1.msra.mxu0 0.0
    %680 = vmatprep.subr.mxu0 0.0
    %681 = vmatpush1.msra.mxu0 0.0
    %682 = vmatprep.subr.mxu0 0.0
    %683 = vmatpush1.msra.mxu0 0.0
    %684 = vmatprep.subr.mxu0 0.0
    %685 = vmatpush1.msra.mxu0 0.0
    %686 = vmatprep.subr.mxu0 0.0
    %687 = vmatpush1.msra.mxu0 0.0
    %688 = vmatprep.subr.mxu0 0.0
    %689 = vmatpush1.msra.mxu0 0.0
    %690 = vmatprep.subr.mxu0 0.0
    %691 = vmatpush1.msra.mxu0 0.0
    %692 = vmatprep.subr.mxu0 0.0
    %693 = vmatpush1.msra.mxu0 0.0
    %694 = vmatprep.subr.mxu0 0.0
    %695 = vmatpush1.msra.mxu0 0.0
    %696 = vmatprep.subr.mxu0 0.0
    %697 = vmatpush1.msra.mxu0 0.0
    %698 = vmatprep.subr.mxu0 0.0
    %699 = vmatpush1.msra.mxu0 0.0
    %700 = vmatprep.subr.mxu0 0.0
    %701 = vmatpush1.msra.mxu0 0.0
    %702 = vmatprep.subr.mxu0 0.0
    %703 = vmatpush1.msra.mxu0 0.0
    %704 = vmatprep.subr.mxu0 0.0
    %705 = vmatpush1.msra.mxu0 0.0
    %706 = vmatprep.subr.mxu0 0.0
    %707 = vmatpush1.msra.mxu0 0.0
    %708 = vmatprep.subr.mxu0 0.0
    %709 = vmatpush1.msra.mxu0 0.0
    %710 = vmatprep.subr.mxu0 0.0
    %711 = vmatpush1.msra.mxu0 0.0
    %712 = vmatprep.mubr.f32.mxu0 0.0
    %713 = vmatmul.mubr.f32.gmra.mrb[0].mxu0 %v646
    %v714 = vpop.f32.mrb[0].mxu0
    %v715 = vadd.f32 0.0, %v714
    %v716 = vpop.f32.mrb[0].mxu0
    %717 = vdwg.mxu0
    %v718 = vadd.f32 %v641, %v715
    %v719 = vadd.f32 %v718, %v407
    %v720 = vadd.f32 %v719, %v224
    %v721 = vadd.f32 %v719, %v229
    %v722 = vadd.f32 %v719, %v234
    %v723 = vadd.f32 %v719, %v239
    %v724 = vadd.f32 %v719, %v244
    %v725 = vadd.f32 %v719, %v249
    %v726 = vadd.f32 %v719, %v254
    %v727 = vtanh.pop %v720
    %v728 = vtanh.pop %v721
    %v729 = vtanh.pop %v722
    %v730 = vtanh.pop %v723
    %v731 = vtanh.pop %v724
    %v732 = vtanh.pop %v725
    %v733 = vtanh.pop %v726
    %v734 = vmul.f32 %v727, %v426
    %v735 = vmul.f32 %v728, %v426
    %v736 = vmul.f32 %v729, %v426
    %v737 = vmul.f32 %v730, %v426
    %v738 = vmul.f32 %v731, %v426
    %v739 = vmul.f32 %v732, %v426
    %v740 = vmul.f32 %v733, %v426
    %v741 = vsel %vm135, %v734, 0.0
    %742 = vadd.xlane.f32.xlu0 %v741
    %v743 = vpop.xlane.xlu0 %742
    %v744 = vsel %vm135, %v735, 0.0
    %745 = vadd.xlane.f32.xlu0 %v744
    %v746 = vpop.xlane.xlu0 %745
    %v747 = vsel %vm135, %v736, 0.0
    %748 = vadd.xlane.f32.xlu0 %v747
    %v749 = vpop.xlane.xlu0 %748
    %v750 = vsel %vm135, %v737, 0.0
    %751 = vadd.xlane.f32.xlu0 %v750
    %v752 = vpop.xlane.xlu0 %751
    %v753 = vsel %vm135, %v738, 0.0
    %754 = vadd.xlane.f32.xlu0 %v753
    %v755 = vpop.xlane.xlu0 %754
    %v756 = vsel %vm135, %v739, 0.0
    %757 = vadd.xlane.f32.xlu0 %v756
    %v758 = vpop.xlane.xlu0 %757
    %v759 = vsel %vm135, %v740, 0.0
    %760 = vadd.xlane.f32.xlu0 %v759
    %v761 = vpop.xlane.xlu0 %760
    %v762 = vadd.f32 %v743, %v455
    %v763 = vadd.f32 %v746, %v455
    %v764 = vadd.f32 %v749, %v455
    %v765 = vadd.f32 %v752, %v455
    %v766 = vadd.f32 %v755, %v455
    %v767 = vadd.f32 %v758, %v455
    %v768 = vadd.f32 %v761, %v455
    %v769 = vmul.f32 %v762, 1.442695
    %v770 = vpow.pop %v769
    %v771 = vmul.f32 %v763, 1.442695
    %v772 = vpow.pop %v771
    %v773 = vmul.f32 %v764, 1.442695
    %v774 = vpow.pop %v773
    %v775 = vmul.f32 %v765, 1.442695
    %v776 = vpow.pop %v775
    %v777 = vmul.f32 %v766, 1.442695
    %v778 = vpow.pop %v777
    %v779 = vmul.f32 %v767, 1.442695
    %v780 = vpow.pop %v779
    %v781 = vmul.f32 %v768, 1.442695
    %v782 = vpow.pop %v781
    %v783 = vadd.f32 %v770, %v772
    %v784 = vadd.f32 %v783, %v774
    %v785 = vadd.f32 %v784, %v776
    %v786 = vadd.f32 %v785, %v778
    %v787 = vadd.f32 %v786, %v780
    %v788 = vadd.f32 %v787, %v782
    %v789 = vrcp.pop %v788
    %v790 = vmul.f32 %v770, %v789
    %v791 = vmul.f32 %v772, %v789
    %v792 = vmul.f32 %v774, %v789
    %v793 = vmul.f32 %v776, %v789
    %v794 = vmul.f32 %v778, %v789
    %v795 = vmul.f32 %v780, %v789
    %v796 = vmul.f32 %v782, %v789
    %v797 = vmul.f32 %v790, %v106
    %v798 = vmul.f32 %v791, %v107
    %v799 = vmul.f32 %v792, %v108
    %v800 = vmul.f32 %v793, %v109
    %v801 = vmul.f32 %v794, %v110
    %v802 = vmul.f32 %v795, %v111
    %v803 = vmul.f32 %v796, %v112
    %v804 = vsel %vm135, %v797, 0.0
    %v805 = vsel %vm135, %v798, 0.0
    %v806 = vadd.f32 %v804, %v805
    %v807 = vsel %vm135, %v799, 0.0
    %v808 = vadd.f32 %v806, %v807
    %v809 = vsel %vm135, %v800, 0.0
    %v810 = vadd.f32 %v808, %v809
    %v811 = vsel %vm135, %v801, 0.0
    %v812 = vadd.f32 %v810, %v811
    %v813 = vsel %vm135, %v802, 0.0
    %v814 = vadd.f32 %v812, %v813
    %v815 = vsel %vm135, %v803, 0.0
    %v816 = vadd.f32 %v814, %v815
    %vm817 = vcmp.eq.s32.totalorder %v258, 1
    %v818 = vsel %vm817, 1, 0
    %vm819 = vcmp.eq.s32.totalorder %v818, 1
    %v820 = vsel %vm819, %v113, 0.0
    %v821 = vsel %vm515, %v820, 0.0
    %822 = vadd.xlane.f32.xlu0 %v821
    %v823 = vpop.xlane.xlu0 %822
    %v824 = vmul.f32 %v816, %v522
    %v825 = vsel %vm135, %v824, 0.0
    %826 = vadd.xlane.f32.xlu0 %v825
    %v827 = vpop.xlane.xlu0 %826
    %v828 = vmul.f32 %v823, %v527
    %v829 = vadd.f32 %v827, %v828
    %v830 = vadd.f32 %v829, %v530
    %v831 = vmul.f32 %v830, %v535
    %v832 = vadd.f32 %v831, %v639
    %v833 = vadd.f32 %v832, %v541
    %v834 = vxor.u32 %v833, 2147483648
    %v835 = vmul.f32 %v834, 1.442695
    %v836 = vpow.pop %v835
    %v837 = vadd.f32 %v836, 1.0
    %v838 = vrcp.pop %v837
    %v839 = vmul.f32 1.0, %v838
    %v840 = vtanh.pop %v833
    %v841 = vmul.f32 %v839, %v560
    %843 = vrot.lane.b32.xlu0 %v840, 64
    %v844 = vpop.permute.xlu0 %843
    %v846 = vmul.f32 %v839, %v844
    %848 = vrot.lane.b32.xlu0 %v846, 32
    %v849 = vpop.permute.xlu0 %848
    %v851 = vadd.f32 %v841, %v849
    %v852 = vtanh.pop %v851
    %854 = vrot.lane.b32.xlu0 %v852, 64
    %v855 = vpop.permute.xlu0 %854
    %v857 = vmul.f32 %v839, %v855
    %859 = vrot.lane.b32.xlu0 %v857, 32
    %v860 = vpop.permute.xlu0 %859
    %v861 = vsel %vm135, %v860, 0
    %863 = vmatprep.subr.mxu0 %v115
    %864 = vmatpush1.msra.mxu0 %v114
    %865 = vmatprep.subr.mxu0 %v117
    %866 = vmatpush1.msra.mxu0 %v116
    %867 = vmatprep.subr.mxu0 %v119
    %868 = vmatpush1.msra.mxu0 %v118
    %869 = vmatprep.subr.mxu0 %v121
    %870 = vmatpush1.msra.mxu0 %v120
    %871 = vmatprep.subr.mxu0 0.0
    %872 = vmatpush1.msra.mxu0 0.0
    %873 = vmatprep.subr.mxu0 0.0
    %874 = vmatpush1.msra.mxu0 0.0
    %875 = vmatprep.subr.mxu0 0.0
    %876 = vmatpush1.msra.mxu0 0.0
    %877 = vmatprep.subr.mxu0 0.0
    %878 = vmatpush1.msra.mxu0 0.0
    %879 = vmatprep.subr.mxu0 0.0
    %880 = vmatpush1.msra.mxu0 0.0
    %881 = vmatprep.subr.mxu0 0.0
    %882 = vmatpush1.msra.mxu0 0.0
    %883 = vmatprep.subr.mxu0 0.0
    %884 = vmatpush1.msra.mxu0 0.0
    %885 = vmatprep.subr.mxu0 0.0
    %886 = vmatpush1.msra.mxu0 0.0
    %887 = vmatprep.subr.mxu0 0.0
    %888 = vmatpush1.msra.mxu0 0.0
    %889 = vmatprep.subr.mxu0 0.0
    %890 = vmatpush1.msra.mxu0 0.0
    %891 = vmatprep.subr.mxu0 0.0
    %892 = vmatpush1.msra.mxu0 0.0
    %893 = vmatprep.subr.mxu0 0.0
    %894 = vmatpush1.msra.mxu0 0.0
    %895 = vmatprep.subr.mxu0 0.0
    %896 = vmatpush1.msra.mxu0 0.0
    %897 = vmatprep.subr.mxu0 0.0
    %898 = vmatpush1.msra.mxu0 0.0
    %899 = vmatprep.subr.mxu0 0.0
    %900 = vmatpush1.msra.mxu0 0.0
    %901 = vmatprep.subr.mxu0 0.0
    %902 = vmatpush1.msra.mxu0 0.0
    %903 = vmatprep.subr.mxu0 0.0
    %904 = vmatpush1.msra.mxu0 0.0
    %905 = vmatprep.subr.mxu0 0.0
    %906 = vmatpush1.msra.mxu0 0.0
    %907 = vmatprep.subr.mxu0 0.0
    %908 = vmatpush1.msra.mxu0 0.0
    %909 = vmatprep.subr.mxu0 0.0
    %910 = vmatpush1.msra.mxu0 0.0
    %911 = vmatprep.subr.mxu0 0.0
    %912 = vmatpush1.msra.mxu0 0.0
    %913 = vmatprep.subr.mxu0 0.0
    %914 = vmatpush1.msra.mxu0 0.0
    %915 = vmatprep.subr.mxu0 0.0
    %916 = vmatpush1.msra.mxu0 0.0
    %917 = vmatprep.subr.mxu0 0.0
    %918 = vmatpush1.msra.mxu0 0.0
    %919 = vmatprep.subr.mxu0 0.0
    %920 = vmatpush1.msra.mxu0 0.0
    %921 = vmatprep.subr.mxu0 0.0
    %922 = vmatpush1.msra.mxu0 0.0
    %923 = vmatprep.subr.mxu0 0.0
    %924 = vmatpush1.msra.mxu0 0.0
    %925 = vmatprep.subr.mxu0 0.0
    %926 = vmatpush1.msra.mxu0 0.0
    %927 = vmatprep.mubr.f32.mxu0 0.0
    %928 = vmatmul.mubr.f32.gmra.mrb[0].mxu0 %v861
    %v929 = vpop.f32.mrb[0].mxu0
    %v930 = vadd.f32 0.0, %v929
    %v931 = vpop.f32.mrb[0].mxu0
    %v932 = vadd.f32 0.0, %v931
    %933 = vdwg.mxu0
    %935 = vrot.lane.b32.xlu0 %v851, 96
    %v936 = vpop.permute.xlu0 %935
    %v937 = vsel %vm135, %v936, 0
    %939 = vmatprep.subr.mxu0 0.0
    %940 = vmatpush1.msra.mxu0 %v122
    %941 = vmatprep.subr.mxu0 0.0
    %942 = vmatpush1.msra.mxu0 %v123
    %943 = vmatprep.subr.mxu0 0.0
    %944 = vmatpush1.msra.mxu0 %v124
    %945 = vmatprep.subr.mxu0 0.0
    %946 = vmatpush1.msra.mxu0 %v125
    %947 = vmatprep.subr.mxu0 0.0
    %948 = vmatpush1.msra.mxu0 0.0
    %949 = vmatprep.subr.mxu0 0.0
    %950 = vmatpush1.msra.mxu0 0.0
    %951 = vmatprep.subr.mxu0 0.0
    %952 = vmatpush1.msra.mxu0 0.0
    %953 = vmatprep.subr.mxu0 0.0
    %954 = vmatpush1.msra.mxu0 0.0
    %955 = vmatprep.subr.mxu0 0.0
    %956 = vmatpush1.msra.mxu0 0.0
    %957 = vmatprep.subr.mxu0 0.0
    %958 = vmatpush1.msra.mxu0 0.0
    %959 = vmatprep.subr.mxu0 0.0
    %960 = vmatpush1.msra.mxu0 0.0
    %961 = vmatprep.subr.mxu0 0.0
    %962 = vmatpush1.msra.mxu0 0.0
    %963 = vmatprep.subr.mxu0 0.0
    %964 = vmatpush1.msra.mxu0 0.0
    %965 = vmatprep.subr.mxu0 0.0
    %966 = vmatpush1.msra.mxu0 0.0
    %967 = vmatprep.subr.mxu0 0.0
    %968 = vmatpush1.msra.mxu0 0.0
    %969 = vmatprep.subr.mxu0 0.0
    %970 = vmatpush1.msra.mxu0 0.0
    %971 = vmatprep.subr.mxu0 0.0
    %972 = vmatpush1.msra.mxu0 0.0
    %973 = vmatprep.subr.mxu0 0.0
    %974 = vmatpush1.msra.mxu0 0.0
    %975 = vmatprep.subr.mxu0 0.0
    %976 = vmatpush1.msra.mxu0 0.0
    %977 = vmatprep.subr.mxu0 0.0
    %978 = vmatpush1.msra.mxu0 0.0
    %979 = vmatprep.subr.mxu0 0.0
    %980 = vmatpush1.msra.mxu0 0.0
    %981 = vmatprep.subr.mxu0 0.0
    %982 = vmatpush1.msra.mxu0 0.0
    %983 = vmatprep.subr.mxu0 0.0
    %984 = vmatpush1.msra.mxu0 0.0
    %985 = vmatprep.subr.mxu0 0.0
    %986 = vmatpush1.msra.mxu0 0.0
    %987 = vmatprep.subr.mxu0 0.0
    %988 = vmatpush1.msra.mxu0 0.0
    %989 = vmatprep.subr.mxu0 0.0
    %990 = vmatpush1.msra.mxu0 0.0
    %991 = vmatprep.subr.mxu0 0.0
    %992 = vmatpush1.msra.mxu0 0.0
    %993 = vmatprep.subr.mxu0 0.0
    %994 = vmatpush1.msra.mxu0 0.0
    %995 = vmatprep.subr.mxu0 0.0
    %996 = vmatpush1.msra.mxu0 0.0
    %997 = vmatprep.subr.mxu0 0.0
    %998 = vmatpush1.msra.mxu0 0.0
    %999 = vmatprep.subr.mxu0 0.0
    %1000 = vmatpush1.msra.mxu0 0.0
    %1001 = vmatprep.subr.mxu0 0.0
    %1002 = vmatpush1.msra.mxu0 0.0
    %1003 = vmatprep.mubr.f32.mxu0 0.0
    %1004 = vmatmul.mubr.f32.gmra.mrb[0].mxu0 %v937
    %v1005 = vpop.f32.mrb[0].mxu0
    %v1006 = vadd.f32 0.0, %v1005
    %v1007 = vpop.f32.mrb[0].mxu0
    %1008 = vdwg.mxu0
    %v1009 = vadd.f32 %v932, %v1006
    %v1010 = vadd.f32 %v1009, %v407
    %v1011 = vadd.f32 %v1010, %v224
    %v1012 = vadd.f32 %v1010, %v229
    %v1013 = vadd.f32 %v1010, %v234
    %v1014 = vadd.f32 %v1010, %v239
    %v1015 = vadd.f32 %v1010, %v244
    %v1016 = vadd.f32 %v1010, %v249
    %v1017 = vadd.f32 %v1010, %v254
    %v1018 = vtanh.pop %v1011
    %v1019 = vtanh.pop %v1012
    %v1020 = vtanh.pop %v1013
    %v1021 = vtanh.pop %v1014
    %v1022 = vtanh.pop %v1015
    %v1023 = vtanh.pop %v1016
    %v1024 = vtanh.pop %v1017
    %v1025 = vmul.f32 %v1018, %v426
    %v1026 = vmul.f32 %v1019, %v426
    %v1027 = vmul.f32 %v1020, %v426
    %v1028 = vmul.f32 %v1021, %v426
    %v1029 = vmul.f32 %v1022, %v426
    %v1030 = vmul.f32 %v1023, %v426
    %v1031 = vmul.f32 %v1024, %v426
    %v1032 = vsel %vm135, %v1025, 0.0
    %1033 = vadd.xlane.f32.xlu0 %v1032
    %v1034 = vpop.xlane.xlu0 %1033
    %v1035 = vsel %vm135, %v1026, 0.0
    %1036 = vadd.xlane.f32.xlu0 %v1035
    %v1037 = vpop.xlane.xlu0 %1036
    %v1038 = vsel %vm135, %v1027, 0.0
    %1039 = vadd.xlane.f32.xlu0 %v1038
    %v1040 = vpop.xlane.xlu0 %1039
    %v1041 = vsel %vm135, %v1028, 0.0
    %1042 = vadd.xlane.f32.xlu0 %v1041
    %v1043 = vpop.xlane.xlu0 %1042
    %v1044 = vsel %vm135, %v1029, 0.0
    %1045 = vadd.xlane.f32.xlu0 %v1044
    %v1046 = vpop.xlane.xlu0 %1045
    %v1047 = vsel %vm135, %v1030, 0.0
    %1048 = vadd.xlane.f32.xlu0 %v1047
    %v1049 = vpop.xlane.xlu0 %1048
    %v1050 = vsel %vm135, %v1031, 0.0
    %1051 = vadd.xlane.f32.xlu0 %v1050
    %v1052 = vpop.xlane.xlu0 %1051
    %v1053 = vadd.f32 %v1034, %v455
    %v1054 = vadd.f32 %v1037, %v455
    %v1055 = vadd.f32 %v1040, %v455
    %v1056 = vadd.f32 %v1043, %v455
    %v1057 = vadd.f32 %v1046, %v455
    %v1058 = vadd.f32 %v1049, %v455
    %v1059 = vadd.f32 %v1052, %v455
    %v1060 = vmul.f32 %v1053, 1.442695
    %v1061 = vpow.pop %v1060
    %v1062 = vmul.f32 %v1054, 1.442695
    %v1063 = vpow.pop %v1062
    %v1064 = vmul.f32 %v1055, 1.442695
    %v1065 = vpow.pop %v1064
    %v1066 = vmul.f32 %v1056, 1.442695
    %v1067 = vpow.pop %v1066
    %v1068 = vmul.f32 %v1057, 1.442695
    %v1069 = vpow.pop %v1068
    %v1070 = vmul.f32 %v1058, 1.442695
    %v1071 = vpow.pop %v1070
    %v1072 = vmul.f32 %v1059, 1.442695
    %v1073 = vpow.pop %v1072
    %v1074 = vadd.f32 %v1061, %v1063
    %v1075 = vadd.f32 %v1074, %v1065
    %v1076 = vadd.f32 %v1075, %v1067
    %v1077 = vadd.f32 %v1076, %v1069
    %v1078 = vadd.f32 %v1077, %v1071
    %v1079 = vadd.f32 %v1078, %v1073
    %v1080 = vrcp.pop %v1079
    %v1081 = vmul.f32 %v1061, %v1080
    %v1082 = vmul.f32 %v1063, %v1080
    %v1083 = vmul.f32 %v1065, %v1080
    %v1084 = vmul.f32 %v1067, %v1080
    %v1085 = vmul.f32 %v1069, %v1080
    %v1086 = vmul.f32 %v1071, %v1080
    %v1087 = vmul.f32 %v1073, %v1080
    %v1088 = vmul.f32 %v1081, %v106
    %v1089 = vmul.f32 %v1082, %v107
    %v1090 = vmul.f32 %v1083, %v108
    %v1091 = vmul.f32 %v1084, %v109
    %v1092 = vmul.f32 %v1085, %v110
    %v1093 = vmul.f32 %v1086, %v111
    %v1094 = vmul.f32 %v1087, %v112
    %v1095 = vsel %vm135, %v1088, 0.0
    %v1096 = vsel %vm135, %v1089, 0.0
    %v1097 = vadd.f32 %v1095, %v1096
    %v1098 = vsel %vm135, %v1090, 0.0
    %v1099 = vadd.f32 %v1097, %v1098
    %v1100 = vsel %vm135, %v1091, 0.0
    %v1101 = vadd.f32 %v1099, %v1100
    %v1102 = vsel %vm135, %v1092, 0.0
    %v1103 = vadd.f32 %v1101, %v1102
    %v1104 = vsel %vm135, %v1093, 0.0
    %v1105 = vadd.f32 %v1103, %v1104
    %v1106 = vsel %vm135, %v1094, 0.0
    %v1107 = vadd.f32 %v1105, %v1106
    %vm1108 = vcmp.eq.s32.totalorder %v258, 2
    %v1109 = vsel %vm1108, 1, 0
    %vm1110 = vcmp.eq.s32.totalorder %v1109, 1
    %v1111 = vsel %vm1110, %v113, 0.0
    %v1112 = vsel %vm515, %v1111, 0.0
    %1113 = vadd.xlane.f32.xlu0 %v1112
    %v1114 = vpop.xlane.xlu0 %1113
    %v1115 = vmul.f32 %v1107, %v522
    %v1116 = vsel %vm135, %v1115, 0.0
    %1117 = vadd.xlane.f32.xlu0 %v1116
    %v1118 = vpop.xlane.xlu0 %1117
    %v1119 = vmul.f32 %v1114, %v527
    %v1120 = vadd.f32 %v1118, %v1119
    %v1121 = vadd.f32 %v1120, %v530
    %v1122 = vmul.f32 %v1121, %v535
    %v1123 = vadd.f32 %v1122, %v930
    %v1124 = vadd.f32 %v1123, %v541
    %v1125 = vxor.u32 %v1124, 2147483648
    %v1126 = vmul.f32 %v1125, 1.442695
    %v1127 = vpow.pop %v1126
    %v1128 = vadd.f32 %v1127, 1.0
    %v1129 = vrcp.pop %v1128
    %v1130 = vmul.f32 1.0, %v1129
    %v1131 = vtanh.pop %v1124
    %v1132 = vmul.f32 %v1130, %v851
    %1134 = vrot.lane.b32.xlu0 %v1131, 64
    %v1135 = vpop.permute.xlu0 %1134
    %v1137 = vmul.f32 %v1130, %v1135
    %1139 = vrot.lane.b32.xlu0 %v1137, 32
    %v1140 = vpop.permute.xlu0 %1139
    %v1142 = vadd.f32 %v1132, %v1140
    %v1143 = vtanh.pop %v1142
    %1145 = vrot.lane.b32.xlu0 %v1143, 64
    %v1146 = vpop.permute.xlu0 %1145
    %v1148 = vmul.f32 %v1130, %v1146
    %1150 = vrot.lane.b32.xlu0 %v1148, 32
    %v1151 = vpop.permute.xlu0 %1150
    %v1152 = vsel %vm135, %v1151, 0
    %1154 = vmatprep.subr.mxu0 %v115
    %1155 = vmatpush1.msra.mxu0 %v114
    %1156 = vmatprep.subr.mxu0 %v117
    %1157 = vmatpush1.msra.mxu0 %v116
    %1158 = vmatprep.subr.mxu0 %v119
    %1159 = vmatpush1.msra.mxu0 %v118
    %1160 = vmatprep.subr.mxu0 %v121
    %1161 = vmatpush1.msra.mxu0 %v120
    %1162 = vmatprep.subr.mxu0 0.0
    %1163 = vmatpush1.msra.mxu0 0.0
    %1164 = vmatprep.subr.mxu0 0.0
    %1165 = vmatpush1.msra.mxu0 0.0
    %1166 = vmatprep.subr.mxu0 0.0
    %1167 = vmatpush1.msra.mxu0 0.0
    %1168 = vmatprep.subr.mxu0 0.0
    %1169 = vmatpush1.msra.mxu0 0.0
    %1170 = vmatprep.subr.mxu0 0.0
    %1171 = vmatpush1.msra.mxu0 0.0
    %1172 = vmatprep.subr.mxu0 0.0
    %1173 = vmatpush1.msra.mxu0 0.0
    %1174 = vmatprep.subr.mxu0 0.0
    %1175 = vmatpush1.msra.mxu0 0.0
    %1176 = vmatprep.subr.mxu0 0.0
    %1177 = vmatpush1.msra.mxu0 0.0
    %1178 = vmatprep.subr.mxu0 0.0
    %1179 = vmatpush1.msra.mxu0 0.0
    %1180 = vmatprep.subr.mxu0 0.0
    %1181 = vmatpush1.msra.mxu0 0.0
    %1182 = vmatprep.subr.mxu0 0.0
    %1183 = vmatpush1.msra.mxu0 0.0
    %1184 = vmatprep.subr.mxu0 0.0
    %1185 = vmatpush1.msra.mxu0 0.0
    %1186 = vmatprep.subr.mxu0 0.0
    %1187 = vmatpush1.msra.mxu0 0.0
    %1188 = vmatprep.subr.mxu0 0.0
    %1189 = vmatpush1.msra.mxu0 0.0
    %1190 = vmatprep.subr.mxu0 0.0
    %1191 = vmatpush1.msra.mxu0 0.0
    %1192 = vmatprep.subr.mxu0 0.0
    %1193 = vmatpush1.msra.mxu0 0.0
    %1194 = vmatprep.subr.mxu0 0.0
    %1195 = vmatpush1.msra.mxu0 0.0
    %1196 = vmatprep.subr.mxu0 0.0
    %1197 = vmatpush1.msra.mxu0 0.0
    %1198 = vmatprep.subr.mxu0 0.0
    %1199 = vmatpush1.msra.mxu0 0.0
    %1200 = vmatprep.subr.mxu0 0.0
    %1201 = vmatpush1.msra.mxu0 0.0
    %1202 = vmatprep.subr.mxu0 0.0
    %1203 = vmatpush1.msra.mxu0 0.0
    %1204 = vmatprep.subr.mxu0 0.0
    %1205 = vmatpush1.msra.mxu0 0.0
    %1206 = vmatprep.subr.mxu0 0.0
    %1207 = vmatpush1.msra.mxu0 0.0
    %1208 = vmatprep.subr.mxu0 0.0
    %1209 = vmatpush1.msra.mxu0 0.0
    %1210 = vmatprep.subr.mxu0 0.0
    %1211 = vmatpush1.msra.mxu0 0.0
    %1212 = vmatprep.subr.mxu0 0.0
    %1213 = vmatpush1.msra.mxu0 0.0
    %1214 = vmatprep.subr.mxu0 0.0
    %1215 = vmatpush1.msra.mxu0 0.0
    %1216 = vmatprep.subr.mxu0 0.0
    %1217 = vmatpush1.msra.mxu0 0.0
    %1218 = vmatprep.mubr.f32.mxu0 0.0
    %1219 = vmatmul.mubr.f32.gmra.mrb[0].mxu0 %v1152
    %v1220 = vpop.f32.mrb[0].mxu0
    %v1221 = vadd.f32 0.0, %v1220
    %v1222 = vpop.f32.mrb[0].mxu0
    %v1223 = vadd.f32 0.0, %v1222
    %1224 = vdwg.mxu0
    %1226 = vrot.lane.b32.xlu0 %v1142, 96
    %v1227 = vpop.permute.xlu0 %1226
    %v1228 = vsel %vm135, %v1227, 0
    %1230 = vmatprep.subr.mxu0 0.0
    %1231 = vmatpush1.msra.mxu0 %v122
    %1232 = vmatprep.subr.mxu0 0.0
    %1233 = vmatpush1.msra.mxu0 %v123
    %1234 = vmatprep.subr.mxu0 0.0
    %1235 = vmatpush1.msra.mxu0 %v124
    %1236 = vmatprep.subr.mxu0 0.0
    %1237 = vmatpush1.msra.mxu0 %v125
    %1238 = vmatprep.subr.mxu0 0.0
    %1239 = vmatpush1.msra.mxu0 0.0
    %1240 = vmatprep.subr.mxu0 0.0
    %1241 = vmatpush1.msra.mxu0 0.0
    %1242 = vmatprep.subr.mxu0 0.0
    %1243 = vmatpush1.msra.mxu0 0.0
    %1244 = vmatprep.subr.mxu0 0.0
    %1245 = vmatpush1.msra.mxu0 0.0
    %1246 = vmatprep.subr.mxu0 0.0
    %1247 = vmatpush1.msra.mxu0 0.0
    %1248 = vmatprep.subr.mxu0 0.0
    %1249 = vmatpush1.msra.mxu0 0.0
    %1250 = vmatprep.subr.mxu0 0.0
    %1251 = vmatpush1.msra.mxu0 0.0
    %1252 = vmatprep.subr.mxu0 0.0
    %1253 = vmatpush1.msra.mxu0 0.0
    %1254 = vmatprep.subr.mxu0 0.0
    %1255 = vmatpush1.msra.mxu0 0.0
    %1256 = vmatprep.subr.mxu0 0.0
    %1257 = vmatpush1.msra.mxu0 0.0
    %1258 = vmatprep.subr.mxu0 0.0
    %1259 = vmatpush1.msra.mxu0 0.0
    %1260 = vmatprep.subr.mxu0 0.0
    %1261 = vmatpush1.msra.mxu0 0.0
    %1262 = vmatprep.subr.mxu0 0.0
    %1263 = vmatpush1.msra.mxu0 0.0
    %1264 = vmatprep.subr.mxu0 0.0
    %1265 = vmatpush1.msra.mxu0 0.0
    %1266 = vmatprep.subr.mxu0 0.0
    %1267 = vmatpush1.msra.mxu0 0.0
    %1268 = vmatprep.subr.mxu0 0.0
    %1269 = vmatpush1.msra.mxu0 0.0
    %1270 = vmatprep.subr.mxu0 0.0
    %1271 = vmatpush1.msra.mxu0 0.0
    %1272 = vmatprep.subr.mxu0 0.0
    %1273 = vmatpush1.msra.mxu0 0.0
    %1274 = vmatprep.subr.mxu0 0.0
    %1275 = vmatpush1.msra.mxu0 0.0
    %1276 = vmatprep.subr.mxu0 0.0
    %1277 = vmatpush1.msra.mxu0 0.0
    %1278 = vmatprep.subr.mxu0 0.0
    %1279 = vmatpush1.msra.mxu0 0.0
    %1280 = vmatprep.subr.mxu0 0.0
    %1281 = vmatpush1.msra.mxu0 0.0
    %1282 = vmatprep.subr.mxu0 0.0
    %1283 = vmatpush1.msra.mxu0 0.0
    %1284 = vmatprep.subr.mxu0 0.0
    %1285 = vmatpush1.msra.mxu0 0.0
    %1286 = vmatprep.subr.mxu0 0.0
    %1287 = vmatpush1.msra.mxu0 0.0
    %1288 = vmatprep.subr.mxu0 0.0
    %1289 = vmatpush1.msra.mxu0 0.0
    %1290 = vmatprep.subr.mxu0 0.0
    %1291 = vmatpush1.msra.mxu0 0.0
    %1292 = vmatprep.subr.mxu0 0.0
    %1293 = vmatpush1.msra.mxu0 0.0
    %1294 = vmatprep.mubr.f32.mxu0 0.0
    %1295 = vmatmul.mubr.f32.gmra.mrb[0].mxu0 %v1228
    %v1296 = vpop.f32.mrb[0].mxu0
    %v1297 = vadd.f32 0.0, %v1296
    %v1298 = vpop.f32.mrb[0].mxu0
    %1299 = vdwg.mxu0
    %v1300 = vadd.f32 %v1223, %v1297
    %v1301 = vadd.f32 %v1300, %v407
    %v1302 = vadd.f32 %v1301, %v224
    %v1303 = vadd.f32 %v1301, %v229
    %v1304 = vadd.f32 %v1301, %v234
    %v1305 = vadd.f32 %v1301, %v239
    %v1306 = vadd.f32 %v1301, %v244
    %v1307 = vadd.f32 %v1301, %v249
    %v1308 = vadd.f32 %v1301, %v254
    %v1309 = vtanh.pop %v1302
    %v1310 = vtanh.pop %v1303
    %v1311 = vtanh.pop %v1304
    %v1312 = vtanh.pop %v1305
    %v1313 = vtanh.pop %v1306
    %v1314 = vtanh.pop %v1307
    %v1315 = vtanh.pop %v1308
    %v1316 = vmul.f32 %v1309, %v426
    %v1317 = vmul.f32 %v1310, %v426
    %v1318 = vmul.f32 %v1311, %v426
    %v1319 = vmul.f32 %v1312, %v426
    %v1320 = vmul.f32 %v1313, %v426
    %v1321 = vmul.f32 %v1314, %v426
    %v1322 = vmul.f32 %v1315, %v426
    %v1323 = vsel %vm135, %v1316, 0.0
    %1324 = vadd.xlane.f32.xlu0 %v1323
    %v1325 = vpop.xlane.xlu0 %1324
    %v1326 = vsel %vm135, %v1317, 0.0
    %1327 = vadd.xlane.f32.xlu0 %v1326
    %v1328 = vpop.xlane.xlu0 %1327
    %v1329 = vsel %vm135, %v1318, 0.0
    %1330 = vadd.xlane.f32.xlu0 %v1329
    %v1331 = vpop.xlane.xlu0 %1330
    %v1332 = vsel %vm135, %v1319, 0.0
    %1333 = vadd.xlane.f32.xlu0 %v1332
    %v1334 = vpop.xlane.xlu0 %1333
    %v1335 = vsel %vm135, %v1320, 0.0
    %1336 = vadd.xlane.f32.xlu0 %v1335
    %v1337 = vpop.xlane.xlu0 %1336
    %v1338 = vsel %vm135, %v1321, 0.0
    %1339 = vadd.xlane.f32.xlu0 %v1338
    %v1340 = vpop.xlane.xlu0 %1339
    %v1341 = vsel %vm135, %v1322, 0.0
    %1342 = vadd.xlane.f32.xlu0 %v1341
    %v1343 = vpop.xlane.xlu0 %1342
    %v1344 = vadd.f32 %v1325, %v455
    %v1345 = vadd.f32 %v1328, %v455
    %v1346 = vadd.f32 %v1331, %v455
    %v1347 = vadd.f32 %v1334, %v455
    %v1348 = vadd.f32 %v1337, %v455
    %v1349 = vadd.f32 %v1340, %v455
    %v1350 = vadd.f32 %v1343, %v455
    %v1351 = vmul.f32 %v1344, 1.442695
    %v1352 = vpow.pop %v1351
    %v1353 = vmul.f32 %v1345, 1.442695
    %v1354 = vpow.pop %v1353
    %v1355 = vmul.f32 %v1346, 1.442695
    %v1356 = vpow.pop %v1355
    %v1357 = vmul.f32 %v1347, 1.442695
    %v1358 = vpow.pop %v1357
    %v1359 = vmul.f32 %v1348, 1.442695
    %v1360 = vpow.pop %v1359
    %v1361 = vmul.f32 %v1349, 1.442695
    %v1362 = vpow.pop %v1361
    %v1363 = vmul.f32 %v1350, 1.442695
    %v1364 = vpow.pop %v1363
    %v1365 = vadd.f32 %v1352, %v1354
    %v1366 = vadd.f32 %v1365, %v1356
    %v1367 = vadd.f32 %v1366, %v1358
    %v1368 = vadd.f32 %v1367, %v1360
    %v1369 = vadd.f32 %v1368, %v1362
    %v1370 = vadd.f32 %v1369, %v1364
    %v1371 = vrcp.pop %v1370
    %v1372 = vmul.f32 %v1352, %v1371
    %v1373 = vmul.f32 %v1354, %v1371
    %v1374 = vmul.f32 %v1356, %v1371
    %v1375 = vmul.f32 %v1358, %v1371
    %v1376 = vmul.f32 %v1360, %v1371
    %v1377 = vmul.f32 %v1362, %v1371
    %v1378 = vmul.f32 %v1364, %v1371
    %v1379 = vmul.f32 %v1372, %v106
    %v1380 = vmul.f32 %v1373, %v107
    %v1381 = vmul.f32 %v1374, %v108
    %v1382 = vmul.f32 %v1375, %v109
    %v1383 = vmul.f32 %v1376, %v110
    %v1384 = vmul.f32 %v1377, %v111
    %v1385 = vmul.f32 %v1378, %v112
    %v1386 = vsel %vm135, %v1379, 0.0
    %v1387 = vsel %vm135, %v1380, 0.0
    %v1388 = vadd.f32 %v1386, %v1387
    %v1389 = vsel %vm135, %v1381, 0.0
    %v1390 = vadd.f32 %v1388, %v1389
    %v1391 = vsel %vm135, %v1382, 0.0
    %v1392 = vadd.f32 %v1390, %v1391
    %v1393 = vsel %vm135, %v1383, 0.0
    %v1394 = vadd.f32 %v1392, %v1393
    %v1395 = vsel %vm135, %v1384, 0.0
    %v1396 = vadd.f32 %v1394, %v1395
    %v1397 = vsel %vm135, %v1385, 0.0
    %v1398 = vadd.f32 %v1396, %v1397
    %vm1399 = vcmp.eq.s32.totalorder %v258, 3
    %v1400 = vsel %vm1399, 1, 0
    %vm1401 = vcmp.eq.s32.totalorder %v1400, 1
    %v1402 = vsel %vm1401, %v113, 0.0
    %v1403 = vsel %vm515, %v1402, 0.0
    %1404 = vadd.xlane.f32.xlu0 %v1403
    %v1405 = vpop.xlane.xlu0 %1404
    %v1406 = vmul.f32 %v1398, %v522
    %v1407 = vsel %vm135, %v1406, 0.0
    %1408 = vadd.xlane.f32.xlu0 %v1407
    %v1409 = vpop.xlane.xlu0 %1408
    %v1410 = vmul.f32 %v1405, %v527
    %v1411 = vadd.f32 %v1409, %v1410
    %v1412 = vadd.f32 %v1411, %v530
    %v1413 = vmul.f32 %v1412, %v535
    %v1414 = vadd.f32 %v1413, %v1221
    %v1415 = vadd.f32 %v1414, %v541
    %v1416 = vxor.u32 %v1415, 2147483648
    %v1417 = vmul.f32 %v1416, 1.442695
    %v1418 = vpow.pop %v1417
    %v1419 = vadd.f32 %v1418, 1.0
    %v1420 = vrcp.pop %v1419
    %v1421 = vmul.f32 1.0, %v1420
    %v1422 = vtanh.pop %v1415
    %v1423 = vmul.f32 %v1421, %v1142
    %1425 = vrot.lane.b32.xlu0 %v1422, 64
    %v1426 = vpop.permute.xlu0 %1425
    %v1428 = vmul.f32 %v1421, %v1426
    %1430 = vrot.lane.b32.xlu0 %v1428, 32
    %v1431 = vpop.permute.xlu0 %1430
    %v1433 = vadd.f32 %v1423, %v1431
    %v1434 = vtanh.pop %v1433
    %1436 = vrot.lane.b32.xlu0 %v1434, 64
    %v1437 = vpop.permute.xlu0 %1436
    %v1439 = vmul.f32 %v1421, %v1437
    %1441 = vrot.lane.b32.xlu0 %v1439, 32
    %v1442 = vpop.permute.xlu0 %1441
    %v1443 = vsel %vm135, %v1442, 0
    %1445 = vmatprep.subr.mxu0 %v115
    %1446 = vmatpush1.msra.mxu0 %v114
    %1447 = vmatprep.subr.mxu0 %v117
    %1448 = vmatpush1.msra.mxu0 %v116
    %1449 = vmatprep.subr.mxu0 %v119
    %1450 = vmatpush1.msra.mxu0 %v118
    %1451 = vmatprep.subr.mxu0 %v121
    %1452 = vmatpush1.msra.mxu0 %v120
    %1453 = vmatprep.subr.mxu0 0.0
    %1454 = vmatpush1.msra.mxu0 0.0
    %1455 = vmatprep.subr.mxu0 0.0
    %1456 = vmatpush1.msra.mxu0 0.0
    %1457 = vmatprep.subr.mxu0 0.0
    %1458 = vmatpush1.msra.mxu0 0.0
    %1459 = vmatprep.subr.mxu0 0.0
    %1460 = vmatpush1.msra.mxu0 0.0
    %1461 = vmatprep.subr.mxu0 0.0
    %1462 = vmatpush1.msra.mxu0 0.0
    %1463 = vmatprep.subr.mxu0 0.0
    %1464 = vmatpush1.msra.mxu0 0.0
    %1465 = vmatprep.subr.mxu0 0.0
    %1466 = vmatpush1.msra.mxu0 0.0
    %1467 = vmatprep.subr.mxu0 0.0
    %1468 = vmatpush1.msra.mxu0 0.0
    %1469 = vmatprep.subr.mxu0 0.0
    %1470 = vmatpush1.msra.mxu0 0.0
    %1471 = vmatprep.subr.mxu0 0.0
    %1472 = vmatpush1.msra.mxu0 0.0
    %1473 = vmatprep.subr.mxu0 0.0
    %1474 = vmatpush1.msra.mxu0 0.0
    %1475 = vmatprep.subr.mxu0 0.0
    %1476 = vmatpush1.msra.mxu0 0.0
    %1477 = vmatprep.subr.mxu0 0.0
    %1478 = vmatpush1.msra.mxu0 0.0
    %1479 = vmatprep.subr.mxu0 0.0
    %1480 = vmatpush1.msra.mxu0 0.0
    %1481 = vmatprep.subr.mxu0 0.0
    %1482 = vmatpush1.msra.mxu0 0.0
    %1483 = vmatprep.subr.mxu0 0.0
    %1484 = vmatpush1.msra.mxu0 0.0
    %1485 = vmatprep.subr.mxu0 0.0
    %1486 = vmatpush1.msra.mxu0 0.0
    %1487 = vmatprep.subr.mxu0 0.0
    %1488 = vmatpush1.msra.mxu0 0.0
    %1489 = vmatprep.subr.mxu0 0.0
    %1490 = vmatpush1.msra.mxu0 0.0
    %1491 = vmatprep.subr.mxu0 0.0
    %1492 = vmatpush1.msra.mxu0 0.0
    %1493 = vmatprep.subr.mxu0 0.0
    %1494 = vmatpush1.msra.mxu0 0.0
    %1495 = vmatprep.subr.mxu0 0.0
    %1496 = vmatpush1.msra.mxu0 0.0
    %1497 = vmatprep.subr.mxu0 0.0
    %1498 = vmatpush1.msra.mxu0 0.0
    %1499 = vmatprep.subr.mxu0 0.0
    %1500 = vmatpush1.msra.mxu0 0.0
    %1501 = vmatprep.subr.mxu0 0.0
    %1502 = vmatpush1.msra.mxu0 0.0
    %1503 = vmatprep.subr.mxu0 0.0
    %1504 = vmatpush1.msra.mxu0 0.0
    %1505 = vmatprep.subr.mxu0 0.0
    %1506 = vmatpush1.msra.mxu0 0.0
    %1507 = vmatprep.subr.mxu0 0.0
    %1508 = vmatpush1.msra.mxu0 0.0
    %1509 = vmatprep.mubr.f32.mxu0 0.0
    %1510 = vmatmul.mubr.f32.gmra.mrb[0].mxu0 %v1443
    %v1511 = vpop.f32.mrb[0].mxu0
    %v1512 = vadd.f32 0.0, %v1511
    %v1513 = vpop.f32.mrb[0].mxu0
    %v1514 = vadd.f32 0.0, %v1513
    %1515 = vdwg.mxu0
    %1517 = vrot.lane.b32.xlu0 %v1433, 96
    %v1518 = vpop.permute.xlu0 %1517
    %v1519 = vsel %vm135, %v1518, 0
    %1521 = vmatprep.subr.mxu0 0.0
    %1522 = vmatpush1.msra.mxu0 %v122
    %1523 = vmatprep.subr.mxu0 0.0
    %1524 = vmatpush1.msra.mxu0 %v123
    %1525 = vmatprep.subr.mxu0 0.0
    %1526 = vmatpush1.msra.mxu0 %v124
    %1527 = vmatprep.subr.mxu0 0.0
    %1528 = vmatpush1.msra.mxu0 %v125
    %1529 = vmatprep.subr.mxu0 0.0
    %1530 = vmatpush1.msra.mxu0 0.0
    %1531 = vmatprep.subr.mxu0 0.0
    %1532 = vmatpush1.msra.mxu0 0.0
    %1533 = vmatprep.subr.mxu0 0.0
    %1534 = vmatpush1.msra.mxu0 0.0
    %1535 = vmatprep.subr.mxu0 0.0
    %1536 = vmatpush1.msra.mxu0 0.0
    %1537 = vmatprep.subr.mxu0 0.0
    %1538 = vmatpush1.msra.mxu0 0.0
    %1539 = vmatprep.subr.mxu0 0.0
    %1540 = vmatpush1.msra.mxu0 0.0
    %1541 = vmatprep.subr.mxu0 0.0
    %1542 = vmatpush1.msra.mxu0 0.0
    %1543 = vmatprep.subr.mxu0 0.0
    %1544 = vmatpush1.msra.mxu0 0.0
    %1545 = vmatprep.subr.mxu0 0.0
    %1546 = vmatpush1.msra.mxu0 0.0
    %1547 = vmatprep.subr.mxu0 0.0
    %1548 = vmatpush1.msra.mxu0 0.0
    %1549 = vmatprep.subr.mxu0 0.0
    %1550 = vmatpush1.msra.mxu0 0.0
    %1551 = vmatprep.subr.mxu0 0.0
    %1552 = vmatpush1.msra.mxu0 0.0
    %1553 = vmatprep.subr.mxu0 0.0
    %1554 = vmatpush1.msra.mxu0 0.0
    %1555 = vmatprep.subr.mxu0 0.0
    %1556 = vmatpush1.msra.mxu0 0.0
    %1557 = vmatprep.subr.mxu0 0.0
    %1558 = vmatpush1.msra.mxu0 0.0
    %1559 = vmatprep.subr.mxu0 0.0
    %1560 = vmatpush1.msra.mxu0 0.0
    %1561 = vmatprep.subr.mxu0 0.0
    %1562 = vmatpush1.msra.mxu0 0.0
    %1563 = vmatprep.subr.mxu0 0.0
    %1564 = vmatpush1.msra.mxu0 0.0
    %1565 = vmatprep.subr.mxu0 0.0
    %1566 = vmatpush1.msra.mxu0 0.0
    %1567 = vmatprep.subr.mxu0 0.0
    %1568 = vmatpush1.msra.mxu0 0.0
    %1569 = vmatprep.subr.mxu0 0.0
    %1570 = vmatpush1.msra.mxu0 0.0
    %1571 = vmatprep.subr.mxu0 0.0
    %1572 = vmatpush1.msra.mxu0 0.0
    %1573 = vmatprep.subr.mxu0 0.0
    %1574 = vmatpush1.msra.mxu0 0.0
    %1575 = vmatprep.subr.mxu0 0.0
    %1576 = vmatpush1.msra.mxu0 0.0
    %1577 = vmatprep.subr.mxu0 0.0
    %1578 = vmatpush1.msra.mxu0 0.0
    %1579 = vmatprep.subr.mxu0 0.0
    %1580 = vmatpush1.msra.mxu0 0.0
    %1581 = vmatprep.subr.mxu0 0.0
    %1582 = vmatpush1.msra.mxu0 0.0
    %1583 = vmatprep.subr.mxu0 0.0
    %1584 = vmatpush1.msra.mxu0 0.0
    %1585 = vmatprep.mubr.f32.mxu0 0.0
    %1586 = vmatmul.mubr.f32.gmra.mrb[0].mxu0 %v1519
    %v1587 = vpop.f32.mrb[0].mxu0
    %v1588 = vadd.f32 0.0, %v1587
    %v1589 = vpop.f32.mrb[0].mxu0
    %1590 = vdwg.mxu0
    %v1591 = vadd.f32 %v1514, %v1588
    %v1592 = vadd.f32 %v1591, %v407
    %v1593 = vadd.f32 %v1592, %v224
    %v1594 = vadd.f32 %v1592, %v229
    %v1595 = vadd.f32 %v1592, %v234
    %v1596 = vadd.f32 %v1592, %v239
    %v1597 = vadd.f32 %v1592, %v244
    %v1598 = vadd.f32 %v1592, %v249
    %v1599 = vadd.f32 %v1592, %v254
    %v1600 = vtanh.pop %v1593
    %v1601 = vtanh.pop %v1594
    %v1602 = vtanh.pop %v1595
    %v1603 = vtanh.pop %v1596
    %v1604 = vtanh.pop %v1597
    %v1605 = vtanh.pop %v1598
    %v1606 = vtanh.pop %v1599
    %v1607 = vmul.f32 %v1600, %v426
    %v1608 = vmul.f32 %v1601, %v426
    %v1609 = vmul.f32 %v1602, %v426
    %v1610 = vmul.f32 %v1603, %v426
    %v1611 = vmul.f32 %v1604, %v426
    %v1612 = vmul.f32 %v1605, %v426
    %v1613 = vmul.f32 %v1606, %v426
    %v1614 = vsel %vm135, %v1607, 0.0
    %1615 = vadd.xlane.f32.xlu0 %v1614
    %v1616 = vpop.xlane.xlu0 %1615
    %v1617 = vsel %vm135, %v1608, 0.0
    %1618 = vadd.xlane.f32.xlu0 %v1617
    %v1619 = vpop.xlane.xlu0 %1618
    %v1620 = vsel %vm135, %v1609, 0.0
    %1621 = vadd.xlane.f32.xlu0 %v1620
    %v1622 = vpop.xlane.xlu0 %1621
    %v1623 = vsel %vm135, %v1610, 0.0
    %1624 = vadd.xlane.f32.xlu0 %v1623
    %v1625 = vpop.xlane.xlu0 %1624
    %v1626 = vsel %vm135, %v1611, 0.0
    %1627 = vadd.xlane.f32.xlu0 %v1626
    %v1628 = vpop.xlane.xlu0 %1627
    %v1629 = vsel %vm135, %v1612, 0.0
    %1630 = vadd.xlane.f32.xlu0 %v1629
    %v1631 = vpop.xlane.xlu0 %1630
    %v1632 = vsel %vm135, %v1613, 0.0
    %1633 = vadd.xlane.f32.xlu0 %v1632
    %v1634 = vpop.xlane.xlu0 %1633
    %v1635 = vadd.f32 %v1616, %v455
    %v1636 = vadd.f32 %v1619, %v455
    %v1637 = vadd.f32 %v1622, %v455
    %v1638 = vadd.f32 %v1625, %v455
    %v1639 = vadd.f32 %v1628, %v455
    %v1640 = vadd.f32 %v1631, %v455
    %v1641 = vadd.f32 %v1634, %v455
    %v1642 = vmul.f32 %v1635, 1.442695
    %v1643 = vpow.pop %v1642
    %v1644 = vmul.f32 %v1636, 1.442695
    %v1645 = vpow.pop %v1644
    %v1646 = vmul.f32 %v1637, 1.442695
    %v1647 = vpow.pop %v1646
    %v1648 = vmul.f32 %v1638, 1.442695
    %v1649 = vpow.pop %v1648
    %v1650 = vmul.f32 %v1639, 1.442695
    %v1651 = vpow.pop %v1650
    %v1652 = vmul.f32 %v1640, 1.442695
    %v1653 = vpow.pop %v1652
    %v1654 = vmul.f32 %v1641, 1.442695
    %v1655 = vpow.pop %v1654
    %v1656 = vadd.f32 %v1643, %v1645
    %v1657 = vadd.f32 %v1656, %v1647
    %v1658 = vadd.f32 %v1657, %v1649
    %v1659 = vadd.f32 %v1658, %v1651
    %v1660 = vadd.f32 %v1659, %v1653
    %v1661 = vadd.f32 %v1660, %v1655
    %v1662 = vrcp.pop %v1661
    %v1663 = vmul.f32 %v1643, %v1662
    %v1664 = vmul.f32 %v1645, %v1662
    %v1665 = vmul.f32 %v1647, %v1662
    %v1666 = vmul.f32 %v1649, %v1662
    %v1667 = vmul.f32 %v1651, %v1662
    %v1668 = vmul.f32 %v1653, %v1662
    %v1669 = vmul.f32 %v1655, %v1662
    %v1670 = vmul.f32 %v1663, %v106
    %v1671 = vmul.f32 %v1664, %v107
    %v1672 = vmul.f32 %v1665, %v108
    %v1673 = vmul.f32 %v1666, %v109
    %v1674 = vmul.f32 %v1667, %v110
    %v1675 = vmul.f32 %v1668, %v111
    %v1676 = vmul.f32 %v1669, %v112
    %v1677 = vsel %vm135, %v1670, 0.0
    %v1678 = vsel %vm135, %v1671, 0.0
    %v1679 = vadd.f32 %v1677, %v1678
    %v1680 = vsel %vm135, %v1672, 0.0
    %v1681 = vadd.f32 %v1679, %v1680
    %v1682 = vsel %vm135, %v1673, 0.0
    %v1683 = vadd.f32 %v1681, %v1682
    %v1684 = vsel %vm135, %v1674, 0.0
    %v1685 = vadd.f32 %v1683, %v1684
    %v1686 = vsel %vm135, %v1675, 0.0
    %v1687 = vadd.f32 %v1685, %v1686
    %v1688 = vsel %vm135, %v1676, 0.0
    %v1689 = vadd.f32 %v1687, %v1688
    %vm1690 = vcmp.eq.s32.totalorder %v258, 4
    %v1691 = vsel %vm1690, 1, 0
    %vm1692 = vcmp.eq.s32.totalorder %v1691, 1
    %v1693 = vsel %vm1692, %v113, 0.0
    %v1694 = vsel %vm515, %v1693, 0.0
    %1695 = vadd.xlane.f32.xlu0 %v1694
    %v1696 = vpop.xlane.xlu0 %1695
    %v1697 = vmul.f32 %v1689, %v522
    %v1698 = vsel %vm135, %v1697, 0.0
    %1699 = vadd.xlane.f32.xlu0 %v1698
    %v1700 = vpop.xlane.xlu0 %1699
    %v1701 = vmul.f32 %v1696, %v527
    %v1702 = vadd.f32 %v1700, %v1701
    %v1703 = vadd.f32 %v1702, %v530
    %v1704 = vmul.f32 %v1703, %v535
    %v1705 = vadd.f32 %v1704, %v1512
    %v1706 = vadd.f32 %v1705, %v541
    %v1707 = vxor.u32 %v1706, 2147483648
    %v1708 = vmul.f32 %v1707, 1.442695
    %v1709 = vpow.pop %v1708
    %v1710 = vadd.f32 %v1709, 1.0
    %v1711 = vrcp.pop %v1710
    %v1712 = vmul.f32 1.0, %v1711
    %v1713 = vtanh.pop %v1706
    %v1714 = vmul.f32 %v1712, %v1433
    %1716 = vrot.lane.b32.xlu0 %v1713, 64
    %v1717 = vpop.permute.xlu0 %1716
    %v1719 = vmul.f32 %v1712, %v1717
    %1721 = vrot.lane.b32.xlu0 %v1719, 32
    %v1722 = vpop.permute.xlu0 %1721
    %v1724 = vadd.f32 %v1714, %v1722
    %v1725 = vtanh.pop %v1724
    %1727 = vrot.lane.b32.xlu0 %v1725, 64
    %v1728 = vpop.permute.xlu0 %1727
    %v1730 = vmul.f32 %v1712, %v1728
    %1732 = vrot.lane.b32.xlu0 %v1730, 32
    %v1733 = vpop.permute.xlu0 %1732
    %v1734 = vsel %vm135, %v1733, 0
    %1736 = vmatprep.subr.mxu0 %v115
    %1737 = vmatpush1.msra.mxu0 %v114
    %1738 = vmatprep.subr.mxu0 %v117
    %1739 = vmatpush1.msra.mxu0 %v116
    %1740 = vmatprep.subr.mxu0 %v119
    %1741 = vmatpush1.msra.mxu0 %v118
    %1742 = vmatprep.subr.mxu0 %v121
    %1743 = vmatpush1.msra.mxu0 %v120
    %1744 = vmatprep.subr.mxu0 0.0
    %1745 = vmatpush1.msra.mxu0 0.0
    %1746 = vmatprep.subr.mxu0 0.0
    %1747 = vmatpush1.msra.mxu0 0.0
    %1748 = vmatprep.subr.mxu0 0.0
    %1749 = vmatpush1.msra.mxu0 0.0
    %1750 = vmatprep.subr.mxu0 0.0
    %1751 = vmatpush1.msra.mxu0 0.0
    %1752 = vmatprep.subr.mxu0 0.0
    %1753 = vmatpush1.msra.mxu0 0.0
    %1754 = vmatprep.subr.mxu0 0.0
    %1755 = vmatpush1.msra.mxu0 0.0
    %1756 = vmatprep.subr.mxu0 0.0
    %1757 = vmatpush1.msra.mxu0 0.0
    %1758 = vmatprep.subr.mxu0 0.0
    %1759 = vmatpush1.msra.mxu0 0.0
    %1760 = vmatprep.subr.mxu0 0.0
    %1761 = vmatpush1.msra.mxu0 0.0
    %1762 = vmatprep.subr.mxu0 0.0
    %1763 = vmatpush1.msra.mxu0 0.0
    %1764 = vmatprep.subr.mxu0 0.0
    %1765 = vmatpush1.msra.mxu0 0.0
    %1766 = vmatprep.subr.mxu0 0.0
    %1767 = vmatpush1.msra.mxu0 0.0
    %1768 = vmatprep.subr.mxu0 0.0
    %1769 = vmatpush1.msra.mxu0 0.0
    %1770 = vmatprep.subr.mxu0 0.0
    %1771 = vmatpush1.msra.mxu0 0.0
    %1772 = vmatprep.subr.mxu0 0.0
    %1773 = vmatpush1.msra.mxu0 0.0
    %1774 = vmatprep.subr.mxu0 0.0
    %1775 = vmatpush1.msra.mxu0 0.0
    %1776 = vmatprep.subr.mxu0 0.0
    %1777 = vmatpush1.msra.mxu0 0.0
    %1778 = vmatprep.subr.mxu0 0.0
    %1779 = vmatpush1.msra.mxu0 0.0
    %1780 = vmatprep.subr.mxu0 0.0
    %1781 = vmatpush1.msra.mxu0 0.0
    %1782 = vmatprep.subr.mxu0 0.0
    %1783 = vmatpush1.msra.mxu0 0.0
    %1784 = vmatprep.subr.mxu0 0.0
    %1785 = vmatpush1.msra.mxu0 0.0
    %1786 = vmatprep.subr.mxu0 0.0
    %1787 = vmatpush1.msra.mxu0 0.0
    %1788 = vmatprep.subr.mxu0 0.0
    %1789 = vmatpush1.msra.mxu0 0.0
    %1790 = vmatprep.subr.mxu0 0.0
    %1791 = vmatpush1.msra.mxu0 0.0
    %1792 = vmatprep.subr.mxu0 0.0
    %1793 = vmatpush1.msra.mxu0 0.0
    %1794 = vmatprep.subr.mxu0 0.0
    %1795 = vmatpush1.msra.mxu0 0.0
    %1796 = vmatprep.subr.mxu0 0.0
    %1797 = vmatpush1.msra.mxu0 0.0
    %1798 = vmatprep.subr.mxu0 0.0
    %1799 = vmatpush1.msra.mxu0 0.0
    %1800 = vmatprep.mubr.f32.mxu0 0.0
    %1801 = vmatmul.mubr.f32.gmra.mrb[0].mxu0 %v1734
    %v1802 = vpop.f32.mrb[0].mxu0
    %v1803 = vadd.f32 0.0, %v1802
    %v1804 = vpop.f32.mrb[0].mxu0
    %v1805 = vadd.f32 0.0, %v1804
    %1806 = vdwg.mxu0
    %1808 = vrot.lane.b32.xlu0 %v1724, 96
    %v1809 = vpop.permute.xlu0 %1808
    %v1810 = vsel %vm135, %v1809, 0
    %1812 = vmatprep.subr.mxu0 0.0
    %1813 = vmatpush1.msra.mxu0 %v122
    %1814 = vmatprep.subr.mxu0 0.0
    %1815 = vmatpush1.msra.mxu0 %v123
    %1816 = vmatprep.subr.mxu0 0.0
    %1817 = vmatpush1.msra.mxu0 %v124
    %1818 = vmatprep.subr.mxu0 0.0
    %1819 = vmatpush1.msra.mxu0 %v125
    %1820 = vmatprep.subr.mxu0 0.0
    %1821 = vmatpush1.msra.mxu0 0.0
    %1822 = vmatprep.subr.mxu0 0.0
    %1823 = vmatpush1.msra.mxu0 0.0
    %1824 = vmatprep.subr.mxu0 0.0
    %1825 = vmatpush1.msra.mxu0 0.0
    %1826 = vmatprep.subr.mxu0 0.0
    %1827 = vmatpush1.msra.mxu0 0.0
    %1828 = vmatprep.subr.mxu0 0.0
    %1829 = vmatpush1.msra.mxu0 0.0
    %1830 = vmatprep.subr.mxu0 0.0
    %1831 = vmatpush1.msra.mxu0 0.0
    %1832 = vmatprep.subr.mxu0 0.0
    %1833 = vmatpush1.msra.mxu0 0.0
    %1834 = vmatprep.subr.mxu0 0.0
    %1835 = vmatpush1.msra.mxu0 0.0
    %1836 = vmatprep.subr.mxu0 0.0
    %1837 = vmatpush1.msra.mxu0 0.0
    %1838 = vmatprep.subr.mxu0 0.0
    %1839 = vmatpush1.msra.mxu0 0.0
    %1840 = vmatprep.subr.mxu0 0.0
    %1841 = vmatpush1.msra.mxu0 0.0
    %1842 = vmatprep.subr.mxu0 0.0
    %1843 = vmatpush1.msra.mxu0 0.0
    %1844 = vmatprep.subr.mxu0 0.0
    %1845 = vmatpush1.msra.mxu0 0.0
    %1846 = vmatprep.subr.mxu0 0.0
    %1847 = vmatpush1.msra.mxu0 0.0
    %1848 = vmatprep.subr.mxu0 0.0
    %1849 = vmatpush1.msra.mxu0 0.0
    %1850 = vmatprep.subr.mxu0 0.0
    %1851 = vmatpush1.msra.mxu0 0.0
    %1852 = vmatprep.subr.mxu0 0.0
    %1853 = vmatpush1.msra.mxu0 0.0
    %1854 = vmatprep.subr.mxu0 0.0
    %1855 = vmatpush1.msra.mxu0 0.0
    %1856 = vmatprep.subr.mxu0 0.0
    %1857 = vmatpush1.msra.mxu0 0.0
    %1858 = vmatprep.subr.mxu0 0.0
    %1859 = vmatpush1.msra.mxu0 0.0
    %1860 = vmatprep.subr.mxu0 0.0
    %1861 = vmatpush1.msra.mxu0 0.0
    %1862 = vmatprep.subr.mxu0 0.0
    %1863 = vmatpush1.msra.mxu0 0.0
    %1864 = vmatprep.subr.mxu0 0.0
    %1865 = vmatpush1.msra.mxu0 0.0
    %1866 = vmatprep.subr.mxu0 0.0
    %1867 = vmatpush1.msra.mxu0 0.0
    %1868 = vmatprep.subr.mxu0 0.0
    %1869 = vmatpush1.msra.mxu0 0.0
    %1870 = vmatprep.subr.mxu0 0.0
    %1871 = vmatpush1.msra.mxu0 0.0
    %1872 = vmatprep.subr.mxu0 0.0
    %1873 = vmatpush1.msra.mxu0 0.0
    %1874 = vmatprep.subr.mxu0 0.0
    %1875 = vmatpush1.msra.mxu0 0.0
    %1876 = vmatprep.mubr.f32.mxu0 0.0
    %1877 = vmatmul.mubr.f32.gmra.mrb[0].mxu0 %v1810
    %v1878 = vpop.f32.mrb[0].mxu0
    %v1879 = vadd.f32 0.0, %v1878
    %v1880 = vpop.f32.mrb[0].mxu0
    %1881 = vdwg.mxu0
    %v1882 = vadd.f32 %v1805, %v1879
    %v1883 = vadd.f32 %v1882, %v407
    %v1884 = vadd.f32 %v1883, %v224
    %v1885 = vadd.f32 %v1883, %v229
    %v1886 = vadd.f32 %v1883, %v234
    %v1887 = vadd.f32 %v1883, %v239
    %v1888 = vadd.f32 %v1883, %v244
    %v1889 = vadd.f32 %v1883, %v249
    %v1890 = vadd.f32 %v1883, %v254
    %v1891 = vtanh.pop %v1884
    %v1892 = vtanh.pop %v1885
    %v1893 = vtanh.pop %v1886
    %v1894 = vtanh.pop %v1887
    %v1895 = vtanh.pop %v1888
    %v1896 = vtanh.pop %v1889
    %v1897 = vtanh.pop %v1890
    %v1898 = vmul.f32 %v1891, %v426
    %v1899 = vmul.f32 %v1892, %v426
    %v1900 = vmul.f32 %v1893, %v426
    %v1901 = vmul.f32 %v1894, %v426
    %v1902 = vmul.f32 %v1895, %v426
    %v1903 = vmul.f32 %v1896, %v426
    %v1904 = vmul.f32 %v1897, %v426
    %v1905 = vsel %vm135, %v1898, 0.0
    %1906 = vadd.xlane.f32.xlu0 %v1905
    %v1907 = vpop.xlane.xlu0 %1906
    %v1908 = vsel %vm135, %v1899, 0.0
    %1909 = vadd.xlane.f32.xlu0 %v1908
    %v1910 = vpop.xlane.xlu0 %1909
    %v1911 = vsel %vm135, %v1900, 0.0
    %1912 = vadd.xlane.f32.xlu0 %v1911
    %v1913 = vpop.xlane.xlu0 %1912
    %v1914 = vsel %vm135, %v1901, 0.0
    %1915 = vadd.xlane.f32.xlu0 %v1914
    %v1916 = vpop.xlane.xlu0 %1915
    %v1917 = vsel %vm135, %v1902, 0.0
    %1918 = vadd.xlane.f32.xlu0 %v1917
    %v1919 = vpop.xlane.xlu0 %1918
    %v1920 = vsel %vm135, %v1903, 0.0
    %1921 = vadd.xlane.f32.xlu0 %v1920
    %v1922 = vpop.xlane.xlu0 %1921
    %v1923 = vsel %vm135, %v1904, 0.0
    %1924 = vadd.xlane.f32.xlu0 %v1923
    %v1925 = vpop.xlane.xlu0 %1924
    %v1926 = vadd.f32 %v1907, %v455
    %v1927 = vadd.f32 %v1910, %v455
    %v1928 = vadd.f32 %v1913, %v455
    %v1929 = vadd.f32 %v1916, %v455
    %v1930 = vadd.f32 %v1919, %v455
    %v1931 = vadd.f32 %v1922, %v455
    %v1932 = vadd.f32 %v1925, %v455
    %v1933 = vmul.f32 %v1926, 1.442695
    %v1934 = vpow.pop %v1933
    %v1935 = vmul.f32 %v1927, 1.442695
    %v1936 = vpow.pop %v1935
    %v1937 = vmul.f32 %v1928, 1.442695
    %v1938 = vpow.pop %v1937
    %v1939 = vmul.f32 %v1929, 1.442695
    %v1940 = vpow.pop %v1939
    %v1941 = vmul.f32 %v1930, 1.442695
    %v1942 = vpow.pop %v1941
    %v1943 = vmul.f32 %v1931, 1.442695
    %v1944 = vpow.pop %v1943
    %v1945 = vmul.f32 %v1932, 1.442695
    %v1946 = vpow.pop %v1945
    %v1947 = vadd.f32 %v1934, %v1936
    %v1948 = vadd.f32 %v1947, %v1938
    %v1949 = vadd.f32 %v1948, %v1940
    %v1950 = vadd.f32 %v1949, %v1942
    %v1951 = vadd.f32 %v1950, %v1944
    %v1952 = vadd.f32 %v1951, %v1946
    %v1953 = vrcp.pop %v1952
    %v1954 = vmul.f32 %v1934, %v1953
    %v1955 = vmul.f32 %v1936, %v1953
    %v1956 = vmul.f32 %v1938, %v1953
    %v1957 = vmul.f32 %v1940, %v1953
    %v1958 = vmul.f32 %v1942, %v1953
    %v1959 = vmul.f32 %v1944, %v1953
    %v1960 = vmul.f32 %v1946, %v1953
    %v1961 = vmul.f32 %v1954, %v106
    %v1962 = vmul.f32 %v1955, %v107
    %v1963 = vmul.f32 %v1956, %v108
    %v1964 = vmul.f32 %v1957, %v109
    %v1965 = vmul.f32 %v1958, %v110
    %v1966 = vmul.f32 %v1959, %v111
    %v1967 = vmul.f32 %v1960, %v112
    %v1968 = vsel %vm135, %v1961, 0.0
    %v1969 = vsel %vm135, %v1962, 0.0
    %v1970 = vadd.f32 %v1968, %v1969
    %v1971 = vsel %vm135, %v1963, 0.0
    %v1972 = vadd.f32 %v1970, %v1971
    %v1973 = vsel %vm135, %v1964, 0.0
    %v1974 = vadd.f32 %v1972, %v1973
    %v1975 = vsel %vm135, %v1965, 0.0
    %v1976 = vadd.f32 %v1974, %v1975
    %v1977 = vsel %vm135, %v1966, 0.0
    %v1978 = vadd.f32 %v1976, %v1977
    %v1979 = vsel %vm135, %v1967, 0.0
    %v1980 = vadd.f32 %v1978, %v1979
    %vm1981 = vcmp.eq.s32.totalorder %v258, 5
    %v1982 = vsel %vm1981, 1, 0
    %vm1983 = vcmp.eq.s32.totalorder %v1982, 1
    %v1984 = vsel %vm1983, %v113, 0.0
    %v1985 = vsel %vm515, %v1984, 0.0
    %1986 = vadd.xlane.f32.xlu0 %v1985
    %v1987 = vpop.xlane.xlu0 %1986
    %v1988 = vmul.f32 %v1980, %v522
    %v1989 = vsel %vm135, %v1988, 0.0
    %1990 = vadd.xlane.f32.xlu0 %v1989
    %v1991 = vpop.xlane.xlu0 %1990
    %v1992 = vmul.f32 %v1987, %v527
    %v1993 = vadd.f32 %v1991, %v1992
    %v1994 = vadd.f32 %v1993, %v530
    %v1995 = vmul.f32 %v1994, %v535
    %v1996 = vadd.f32 %v1995, %v1803
    %v1997 = vadd.f32 %v1996, %v541
    %v1998 = vxor.u32 %v1997, 2147483648
    %v1999 = vmul.f32 %v1998, 1.442695
    %v2000 = vpow.pop %v1999
    %v2001 = vadd.f32 %v2000, 1.0
    %v2002 = vrcp.pop %v2001
    %v2003 = vmul.f32 1.0, %v2002
    %v2004 = vtanh.pop %v1997
    %v2005 = vmul.f32 %v2003, %v1724
    %2007 = vrot.lane.b32.xlu0 %v2004, 64
    %v2008 = vpop.permute.xlu0 %2007
    %v2010 = vmul.f32 %v2003, %v2008
    %2012 = vrot.lane.b32.xlu0 %v2010, 32
    %v2013 = vpop.permute.xlu0 %2012
    %v2015 = vadd.f32 %v2005, %v2013
    %v2016 = vtanh.pop %v2015
    %2018 = vrot.lane.b32.xlu0 %v2016, 64
    %v2019 = vpop.permute.xlu0 %2018
    %v2021 = vmul.f32 %v2003, %v2019
    %2023 = vrot.lane.b32.xlu0 %v2021, 32
    %v2024 = vpop.permute.xlu0 %2023
    %v2025 = vsel %vm135, %v2024, 0
    %2027 = vmatprep.subr.mxu0 %v115
    %2028 = vmatpush1.msra.mxu0 %v114
    %2029 = vmatprep.subr.mxu0 %v117
    %2030 = vmatpush1.msra.mxu0 %v116
    %2031 = vmatprep.subr.mxu0 %v119
    %2032 = vmatpush1.msra.mxu0 %v118
    %2033 = vmatprep.subr.mxu0 %v121
    %2034 = vmatpush1.msra.mxu0 %v120
    %2035 = vmatprep.subr.mxu0 0.0
    %2036 = vmatpush1.msra.mxu0 0.0
    %2037 = vmatprep.subr.mxu0 0.0
    %2038 = vmatpush1.msra.mxu0 0.0
    %2039 = vmatprep.subr.mxu0 0.0
    %2040 = vmatpush1.msra.mxu0 0.0
    %2041 = vmatprep.subr.mxu0 0.0
    %2042 = vmatpush1.msra.mxu0 0.0
    %2043 = vmatprep.subr.mxu0 0.0
    %2044 = vmatpush1.msra.mxu0 0.0
    %2045 = vmatprep.subr.mxu0 0.0
    %2046 = vmatpush1.msra.mxu0 0.0
    %2047 = vmatprep.subr.mxu0 0.0
    %2048 = vmatpush1.msra.mxu0 0.0
    %2049 = vmatprep.subr.mxu0 0.0
    %2050 = vmatpush1.msra.mxu0 0.0
    %2051 = vmatprep.subr.mxu0 0.0
    %2052 = vmatpush1.msra.mxu0 0.0
    %2053 = vmatprep.subr.mxu0 0.0
    %2054 = vmatpush1.msra.mxu0 0.0
    %2055 = vmatprep.subr.mxu0 0.0
    %2056 = vmatpush1.msra.mxu0 0.0
    %2057 = vmatprep.subr.mxu0 0.0
    %2058 = vmatpush1.msra.mxu0 0.0
    %2059 = vmatprep.subr.mxu0 0.0
    %2060 = vmatpush1.msra.mxu0 0.0
    %2061 = vmatprep.subr.mxu0 0.0
    %2062 = vmatpush1.msra.mxu0 0.0
    %2063 = vmatprep.subr.mxu0 0.0
    %2064 = vmatpush1.msra.mxu0 0.0
    %2065 = vmatprep.subr.mxu0 0.0
    %2066 = vmatpush1.msra.mxu0 0.0
    %2067 = vmatprep.subr.mxu0 0.0
    %2068 = vmatpush1.msra.mxu0 0.0
    %2069 = vmatprep.subr.mxu0 0.0
    %2070 = vmatpush1.msra.mxu0 0.0
    %2071 = vmatprep.subr.mxu0 0.0
    %2072 = vmatpush1.msra.mxu0 0.0
    %2073 = vmatprep.subr.mxu0 0.0
    %2074 = vmatpush1.msra.mxu0 0.0
    %2075 = vmatprep.subr.mxu0 0.0
    %2076 = vmatpush1.msra.mxu0 0.0
    %2077 = vmatprep.subr.mxu0 0.0
    %2078 = vmatpush1.msra.mxu0 0.0
    %2079 = vmatprep.subr.mxu0 0.0
    %2080 = vmatpush1.msra.mxu0 0.0
    %2081 = vmatprep.subr.mxu0 0.0
    %2082 = vmatpush1.msra.mxu0 0.0
    %2083 = vmatprep.subr.mxu0 0.0
    %2084 = vmatpush1.msra.mxu0 0.0
    %2085 = vmatprep.subr.mxu0 0.0
    %2086 = vmatpush1.msra.mxu0 0.0
    %2087 = vmatprep.subr.mxu0 0.0
    %2088 = vmatpush1.msra.mxu0 0.0
    %2089 = vmatprep.subr.mxu0 0.0
    %2090 = vmatpush1.msra.mxu0 0.0
    %2091 = vmatprep.mubr.f32.mxu0 0.0
    %2092 = vmatmul.mubr.f32.gmra.mrb[0].mxu0 %v2025
    %v2093 = vpop.f32.mrb[0].mxu0
    %v2094 = vadd.f32 0.0, %v2093
    %v2095 = vpop.f32.mrb[0].mxu0
    %v2096 = vadd.f32 0.0, %v2095
    %2097 = vdwg.mxu0
    %2099 = vrot.lane.b32.xlu0 %v2015, 96
    %v2100 = vpop.permute.xlu0 %2099
    %v2101 = vsel %vm135, %v2100, 0
    %2103 = vmatprep.subr.mxu0 0.0
    %2104 = vmatpush1.msra.mxu0 %v122
    %2105 = vmatprep.subr.mxu0 0.0
    %2106 = vmatpush1.msra.mxu0 %v123
    %2107 = vmatprep.subr.mxu0 0.0
    %2108 = vmatpush1.msra.mxu0 %v124
    %2109 = vmatprep.subr.mxu0 0.0
    %2110 = vmatpush1.msra.mxu0 %v125
    %2111 = vmatprep.subr.mxu0 0.0
    %2112 = vmatpush1.msra.mxu0 0.0
    %2113 = vmatprep.subr.mxu0 0.0
    %2114 = vmatpush1.msra.mxu0 0.0
    %2115 = vmatprep.subr.mxu0 0.0
    %2116 = vmatpush1.msra.mxu0 0.0
    %2117 = vmatprep.subr.mxu0 0.0
    %2118 = vmatpush1.msra.mxu0 0.0
    %2119 = vmatprep.subr.mxu0 0.0
    %2120 = vmatpush1.msra.mxu0 0.0
    %2121 = vmatprep.subr.mxu0 0.0
    %2122 = vmatpush1.msra.mxu0 0.0
    %2123 = vmatprep.subr.mxu0 0.0
    %2124 = vmatpush1.msra.mxu0 0.0
    %2125 = vmatprep.subr.mxu0 0.0
    %2126 = vmatpush1.msra.mxu0 0.0
    %2127 = vmatprep.subr.mxu0 0.0
    %2128 = vmatpush1.msra.mxu0 0.0
    %2129 = vmatprep.subr.mxu0 0.0
    %2130 = vmatpush1.msra.mxu0 0.0
    %2131 = vmatprep.subr.mxu0 0.0
    %2132 = vmatpush1.msra.mxu0 0.0
    %2133 = vmatprep.subr.mxu0 0.0
    %2134 = vmatpush1.msra.mxu0 0.0
    %2135 = vmatprep.subr.mxu0 0.0
    %2136 = vmatpush1.msra.mxu0 0.0
    %2137 = vmatprep.subr.mxu0 0.0
    %2138 = vmatpush1.msra.mxu0 0.0
    %2139 = vmatprep.subr.mxu0 0.0
    %2140 = vmatpush1.msra.mxu0 0.0
    %2141 = vmatprep.subr.mxu0 0.0
    %2142 = vmatpush1.msra.mxu0 0.0
    %2143 = vmatprep.subr.mxu0 0.0
    %2144 = vmatpush1.msra.mxu0 0.0
    %2145 = vmatprep.subr.mxu0 0.0
    %2146 = vmatpush1.msra.mxu0 0.0
    %2147 = vmatprep.subr.mxu0 0.0
    %2148 = vmatpush1.msra.mxu0 0.0
    %2149 = vmatprep.subr.mxu0 0.0
    %2150 = vmatpush1.msra.mxu0 0.0
    %2151 = vmatprep.subr.mxu0 0.0
    %2152 = vmatpush1.msra.mxu0 0.0
    %2153 = vmatprep.subr.mxu0 0.0
    %2154 = vmatpush1.msra.mxu0 0.0
    %2155 = vmatprep.subr.mxu0 0.0
    %2156 = vmatpush1.msra.mxu0 0.0
    %2157 = vmatprep.subr.mxu0 0.0
    %2158 = vmatpush1.msra.mxu0 0.0
    %2159 = vmatprep.subr.mxu0 0.0
    %2160 = vmatpush1.msra.mxu0 0.0
    %2161 = vmatprep.subr.mxu0 0.0
    %2162 = vmatpush1.msra.mxu0 0.0
    %2163 = vmatprep.subr.mxu0 0.0
    %2164 = vmatpush1.msra.mxu0 0.0
    %2165 = vmatprep.subr.mxu0 0.0
    %2166 = vmatpush1.msra.mxu0 0.0
    %2167 = vmatprep.mubr.f32.mxu0 0.0
    %2168 = vmatmul.mubr.f32.gmra.mrb[0].mxu0 %v2101
    %v2169 = vpop.f32.mrb[0].mxu0
    %v2170 = vadd.f32 0.0, %v2169
    %v2171 = vpop.f32.mrb[0].mxu0
    %2172 = vdwg.mxu0
    %v2173 = vadd.f32 %v2096, %v2170
    %v2174 = vadd.f32 %v2173, %v407
    %v2175 = vadd.f32 %v2174, %v224
    %v2176 = vadd.f32 %v2174, %v229
    %v2177 = vadd.f32 %v2174, %v234
    %v2178 = vadd.f32 %v2174, %v239
    %v2179 = vadd.f32 %v2174, %v244
    %v2180 = vadd.f32 %v2174, %v249
    %v2181 = vadd.f32 %v2174, %v254
    %v2182 = vtanh.pop %v2175
    %v2183 = vtanh.pop %v2176
    %v2184 = vtanh.pop %v2177
    %v2185 = vtanh.pop %v2178
    %v2186 = vtanh.pop %v2179
    %v2187 = vtanh.pop %v2180
    %v2188 = vtanh.pop %v2181
    %v2189 = vmul.f32 %v2182, %v426
    %v2190 = vmul.f32 %v2183, %v426
    %v2191 = vmul.f32 %v2184, %v426
    %v2192 = vmul.f32 %v2185, %v426
    %v2193 = vmul.f32 %v2186, %v426
    %v2194 = vmul.f32 %v2187, %v426
    %v2195 = vmul.f32 %v2188, %v426
    %v2196 = vsel %vm135, %v2189, 0.0
    %2197 = vadd.xlane.f32.xlu0 %v2196
    %v2198 = vpop.xlane.xlu0 %2197
    %v2199 = vsel %vm135, %v2190, 0.0
    %2200 = vadd.xlane.f32.xlu0 %v2199
    %v2201 = vpop.xlane.xlu0 %2200
    %v2202 = vsel %vm135, %v2191, 0.0
    %2203 = vadd.xlane.f32.xlu0 %v2202
    %v2204 = vpop.xlane.xlu0 %2203
    %v2205 = vsel %vm135, %v2192, 0.0
    %2206 = vadd.xlane.f32.xlu0 %v2205
    %v2207 = vpop.xlane.xlu0 %2206
    %v2208 = vsel %vm135, %v2193, 0.0
    %2209 = vadd.xlane.f32.xlu0 %v2208
    %v2210 = vpop.xlane.xlu0 %2209
    %v2211 = vsel %vm135, %v2194, 0.0
    %2212 = vadd.xlane.f32.xlu0 %v2211
    %v2213 = vpop.xlane.xlu0 %2212
    %v2214 = vsel %vm135, %v2195, 0.0
    %2215 = vadd.xlane.f32.xlu0 %v2214
    %v2216 = vpop.xlane.xlu0 %2215
    %v2217 = vadd.f32 %v2198, %v455
    %v2218 = vadd.f32 %v2201, %v455
    %v2219 = vadd.f32 %v2204, %v455
    %v2220 = vadd.f32 %v2207, %v455
    %v2221 = vadd.f32 %v2210, %v455
    %v2222 = vadd.f32 %v2213, %v455
    %v2223 = vadd.f32 %v2216, %v455
    %v2224 = vmul.f32 %v2217, 1.442695
    %v2225 = vpow.pop %v2224
    %v2226 = vmul.f32 %v2218, 1.442695
    %v2227 = vpow.pop %v2226
    %v2228 = vmul.f32 %v2219, 1.442695
    %v2229 = vpow.pop %v2228
    %v2230 = vmul.f32 %v2220, 1.442695
    %v2231 = vpow.pop %v2230
    %v2232 = vmul.f32 %v2221, 1.442695
    %v2233 = vpow.pop %v2232
    %v2234 = vmul.f32 %v2222, 1.442695
    %v2235 = vpow.pop %v2234
    %v2236 = vmul.f32 %v2223, 1.442695
    %v2237 = vpow.pop %v2236
    %v2238 = vadd.f32 %v2225, %v2227
    %v2239 = vadd.f32 %v2238, %v2229
    %v2240 = vadd.f32 %v2239, %v2231
    %v2241 = vadd.f32 %v2240, %v2233
    %v2242 = vadd.f32 %v2241, %v2235
    %v2243 = vadd.f32 %v2242, %v2237
    %v2244 = vrcp.pop %v2243
    %v2245 = vmul.f32 %v2225, %v2244
    %v2246 = vmul.f32 %v2227, %v2244
    %v2247 = vmul.f32 %v2229, %v2244
    %v2248 = vmul.f32 %v2231, %v2244
    %v2249 = vmul.f32 %v2233, %v2244
    %v2250 = vmul.f32 %v2235, %v2244
    %v2251 = vmul.f32 %v2237, %v2244
    %v2252 = vmul.f32 %v2245, %v106
    %v2253 = vmul.f32 %v2246, %v107
    %v2254 = vmul.f32 %v2247, %v108
    %v2255 = vmul.f32 %v2248, %v109
    %v2256 = vmul.f32 %v2249, %v110
    %v2257 = vmul.f32 %v2250, %v111
    %v2258 = vmul.f32 %v2251, %v112
    %v2259 = vsel %vm135, %v2252, 0.0
    %v2260 = vsel %vm135, %v2253, 0.0
    %v2261 = vadd.f32 %v2259, %v2260
    %v2262 = vsel %vm135, %v2254, 0.0
    %v2263 = vadd.f32 %v2261, %v2262
    %v2264 = vsel %vm135, %v2255, 0.0
    %v2265 = vadd.f32 %v2263, %v2264
    %v2266 = vsel %vm135, %v2256, 0.0
    %v2267 = vadd.f32 %v2265, %v2266
    %v2268 = vsel %vm135, %v2257, 0.0
    %v2269 = vadd.f32 %v2267, %v2268
    %v2270 = vsel %vm135, %v2258, 0.0
    %v2271 = vadd.f32 %v2269, %v2270
    %vm2272 = vcmp.eq.s32.totalorder %v258, 6
    %v2273 = vsel %vm2272, 1, 0
    %vm2274 = vcmp.eq.s32.totalorder %v2273, 1
    %v2275 = vsel %vm2274, %v113, 0.0
    %v2276 = vsel %vm515, %v2275, 0.0
    %2277 = vadd.xlane.f32.xlu0 %v2276
    %v2278 = vpop.xlane.xlu0 %2277
    %v2279 = vmul.f32 %v2271, %v522
    %v2280 = vsel %vm135, %v2279, 0.0
    %2281 = vadd.xlane.f32.xlu0 %v2280
    %v2282 = vpop.xlane.xlu0 %2281
    %v2283 = vmul.f32 %v2278, %v527
    %v2284 = vadd.f32 %v2282, %v2283
    %v2285 = vadd.f32 %v2284, %v530
    %v2286 = vmul.f32 %v2285, %v535
    %v2287 = vadd.f32 %v2286, %v2094
    %v2288 = vadd.f32 %v2287, %v541
    %v2289 = vxor.u32 %v2288, 2147483648
    %v2290 = vmul.f32 %v2289, 1.442695
    %v2291 = vpow.pop %v2290
    %v2292 = vadd.f32 %v2291, 1.0
    %v2293 = vrcp.pop %v2292
    %v2294 = vmul.f32 1.0, %v2293
    %v2295 = vtanh.pop %v2288
    %v2296 = vmul.f32 %v2294, %v2015
    %2298 = vrot.lane.b32.xlu0 %v2295, 64
    %v2299 = vpop.permute.xlu0 %2298
    %v2301 = vmul.f32 %v2294, %v2299
    %2303 = vrot.lane.b32.xlu0 %v2301, 32
    %v2304 = vpop.permute.xlu0 %2303
    %v2306 = vadd.f32 %v2296, %v2304
    %v2307 = vtanh.pop %v2306
    %2309 = vrot.lane.b32.xlu0 %v2307, 64
    %v2310 = vpop.permute.xlu0 %2309
    %v2312 = vmul.f32 %v2294, %v2310
    %v2313 = vlaneseq
    %v2314 = vshrl.u32 %v2313, 7
    %v2315 = vsub.s32 4, %v2314
    %v2316 = vrot.slane %v130, %v2315
    %2318 = vrot.lane.b32.xlu0 %v2316, 96
    %v2319 = vpop.permute.xlu0 %2318
    %v2321 = vmul.f32 %v2312, %v2319
    %2323 = vrot.lane.b32.xlu0 %v2321, 32
    %v2324 = vpop.permute.xlu0 %2323
    %v2326 = vsel %vm135, %v2324, 0.0
    %2327 = vadd.xlane.f32.xlu0 %v2326
    %v2328 = vpop.xlane.xlu0 %2327
    %v2329 = vlaneseq
    %v2330 = vshrl.u32 %v2329, 7
    %v2331 = vsub.s32 3, %v2330
    %v2332 = vrot.slane %v130, %v2331
    %v2333 = vmul.f32 %v2271, %v2332
    %v2334 = vsel %vm135, %v2333, 0.0
    %2335 = vadd.xlane.f32.xlu0 %v2334
    %v2336 = vpop.xlane.xlu0 %2335
    %v2337 = vadd.f32 %v2328, %v2336
    %v2338 = vstv %s134
    %v2339 = vadd.f32 %v2337, %v2338
    %2340 = vxpose.xlu0.b32.start [1/16] %v2339, 128
    %2341 = vxpose.xlu0.b32.cont [2/16] 0.0, 128
    %2342 = vxpose.xlu0.b32.cont [3/16] 0.0, 128
    %2343 = vxpose.xlu0.b32.cont [4/16] 0.0, 128
    %2344 = vxpose.xlu0.b32.cont [5/16] 0.0, 128
    %2345 = vxpose.xlu0.b32.cont [6/16] 0.0, 128
    %2346 = vxpose.xlu0.b32.cont [7/16] 0.0, 128
    %2347 = vxpose.xlu0.b32.cont [8/16] 0.0, 128
    %2348 = vxpose.xlu0.b32.cont [9/16] 0.0, 128
    %2349 = vxpose.xlu0.b32.cont [10/16] 0.0, 128
    %2350 = vxpose.xlu0.b32.cont [11/16] 0.0, 128
    %2351 = vxpose.xlu0.b32.cont [12/16] 0.0, 128
    %2352 = vxpose.xlu0.b32.cont [13/16] 0.0, 128
    %2353 = vxpose.xlu0.b32.cont [14/16] 0.0, 128
    %2354 = vxpose.xlu0.b32.cont [15/16] 0.0, 128
    %2355 = vxpose.xlu0.b32.end [16/16] 0.0, 128
    %v2356 = vpop.trf.xlu0
    %v2357 = vpop.trf.xlu0
    %v2358 = vpop.trf.xlu0
    %v2359 = vpop.trf.xlu0
    %v2360 = vpop.trf.xlu0
    %v2361 = vpop.trf.xlu0
    %v2362 = vpop.trf.xlu0
    %v2363 = vpop.trf.xlu0
    %v2364 = vpop.trf.xlu0
    %v2365 = vpop.trf.xlu0
    %v2366 = vpop.trf.xlu0
    %v2367 = vpop.trf.xlu0
    %v2368 = vpop.trf.xlu0
    %v2369 = vpop.trf.xlu0
    %v2370 = vpop.trf.xlu0
    %v2371 = vpop.trf.xlu0
    %vm2372 = vcmask 57344
    %2373 = vst.msk [vmem:[#allocation13] sm:$0x1] %vm2372, %v2356
    // Predicated region
    $region54: #{tpu_custom_call.1} parent=1 // pred_check
      _
    $region55: #{tpu_custom_call.1} parent=1 // pred_check_branch
      %2375 = sbr.rel (0) target = $region57
    $region56: #{tpu_custom_call.1} parent=1 // pred_region
      %s2377 = ssub.s32 16, 16
      %2378 = vsyncadd [#allocation4], %s2377
      %s2380 = sshll.u32 [#allocation13], 4
      %s2381 = int_to_ptr.vmem [resolvable:$true] %s2380
      %2383 = dma.vmem_to_hbm [thread:$0]  %s2381, 16, %s7, [#allocation4]
    $region57: #{tpu_custom_call.1} parent=1 // pred_fallthru
      _
    // Predicated region
    $region58: #{tpu_custom_call.1} parent=1 // pred_check
      _
    $region59: #{tpu_custom_call.1} parent=1 // pred_check_branch
      %2385 = sbr.rel (0) target = $region61
    $region60: #{tpu_custom_call.1} parent=1 // pred_region
      %2386 = dma.done [#allocation4], 16
    $region61: #{tpu_custom_call.1} parent=1 // pred_fallthru
      _
    %2387 = vsyncpa [#allocation3], 1
    %2388 = vsyncpa [#allocation7], 1
    %2389 = vsyncpa [#allocation10], 1
    %2390 = vsyncpa [#allocation4], 1
    %2391 = vsyncpa [#allocation5], 1

</llo_original>
